<compile_context>
chip_gen: v5e
topology: v5e:2x2
jax: 0.10.0
libtpu: 0.0.40
codegen_flags: <defaults>
</compile_context>

<pallas_src>
import functools

import jax
import jax.numpy as jnp
import numpy as np
from jax import lax
from jax.experimental import pallas as pl
from jax.experimental.pallas import tpu as pltpu


def _round_up(v, m):
    return (v + m - 1) // m * m


# ----------------------------------------------------------------------------
# Fused Pallas kernel: conv3x3 + (folded FiLM) + SiLU + conv3x3 + skip combine
# ----------------------------------------------------------------------------
def _fused_denoiser_kernel(cs_ref, x_ref, mask_ref, w1_ref, b1_ref, w2_ref,
                           b2_ref, o_ref, xs_ref, h_ref, hs_ref, *,
                           offsets, kc, feat, cc, lw, p, x_off):
    """Everything in VMEM; flattened padded-grid spatial axis on the lanes.

    cs_ref:   (1,)        SMEM  c_skip scalar (sigma is traced, not static)
    x_ref:    (KC, LX)    f32   channel-padded input, flat, 2*HALO halo each side
    mask_ref: (1, LW)     f32   1.0 at interior padded-grid positions, else 0.0
    w1_ref:   (F, 9*KC)   bf16  conv1 weights, taps stacked on K (c_in/FiLM folded)
    b1_ref:   (F, 1)      f32   conv1 bias, FiLM folded
    w2_ref:   (C, 9*F)    bf16  conv2 weights, taps stacked on K (c_out folded)
    b2_ref:   (C, 1)      f32   conv2 bias, c_out folded
    o_ref:    (C, P)      f32   output (flat padded-grid; interior sliced outside)
    xs_ref:   (9*KC, LW)  bf16  scratch: stacked conv1 window
    h_ref:    (F, LW)     bf16  scratch: hidden activation (never touches HBM)
    hs_ref:   (9*F, P)    bf16  scratch: stacked conv2 window
    """
    # ---- build stacked conv1 window: row block k = input shifted by tap k ---
    # (static, 16-row / bf16-tile aligned slab stores; lane starts are the 9
    #  small tap offsets -> cheap lane rotates)
    for k, off in enumerate(offsets):
        xs_ref[k * kc:(k + 1) * kc, :] = (
            x_ref[:, off:off + lw].astype(jnp.bfloat16))

    # ---- conv1 as ONE MXU contraction (K = 9*KC), f32 accumulation ----------
    h = jnp.dot(w1_ref[...], xs_ref[...], preferred_element_type=jnp.float32)
    h = h + b1_ref[...]
    h = h * jax.nn.sigmoid(h)                 # SiLU in f32 (EUP)
    # Zero the padding ring so conv2 sees proper SAME zero padding.
    h_ref[...] = (h * mask_ref[...]).astype(jnp.bfloat16)

    # ---- build stacked conv2 window ------------------------------------------
    for k, off in enumerate(offsets):
        hs_ref[k * feat:(k + 1) * feat, :] = h_ref[:, off:off + p]

    # ---- conv2 as ONE MXU contraction (K = 9*F) + EDM skip combine ----------
    y = jnp.dot(w2_ref[...], hs_ref[...], preferred_element_type=jnp.float32)
    x_c = x_ref[:cc, x_off:x_off + p]          # un-scaled input for the skip term
    o_ref[...] = (cs_ref[0] * x_c + y + b2_ref[...]).astype(o_ref.dtype)


# ----------------------------------------------------------------------------
# ModelWrapper forward (wrapper: minimal layout glue + weight folding, traced)
# ----------------------------------------------------------------------------
@jax.jit
def model_wrapper_forward(x_nchw, params, sigma_value):
    b, c, h, w = x_nchw.shape
    feat = params["w1"].shape[0]

    kc = 16                                   # channel block (bf16-tile aligned)
    halo = w + 3                              # max |flat 3x3 tap offset| on padded grid
    p = b * (h + 2) * (w + 2)                 # padded-grid positions
    p_pad = _round_up(p, 128)                 # lane-dense output width
    lw = _round_up(p_pad + 2 * halo, 128)     # hidden width (incl. halo)
    lx = _round_up(lw + 2 * halo, 128)        # extended-input width

    # --- ModelWrapper.forward: sigma = full((B,), sigma_value) ---------------
    # sigma is traced (NOT a static jit arg) -> sampler loops don't recompile.
    sigma = jnp.asarray(sigma_value, jnp.float32)
    c_in = lax.rsqrt(sigma * sigma + 1.0)
    c_skip = (1.0 / (sigma * sigma + 1.0)).astype(jnp.float32).reshape(1)
    c_out = sigma * c_in

    emb = jnp.stack([jnp.log(sigma), sigma])                        # (2,)
    gamma = emb @ params["wg"] + params["bg"]                       # (F,)
    beta = emb @ params["wb"] + params["bb"]                        # (F,)

    # Fold c_in & FiLM scale into conv1, c_out into conv2 (sigma is batch-uniform).
    scale1 = c_in * (1.0 + gamma)                                   # (F,)
    w1 = params["w1"] * scale1[:, None, None, None]                 # (F, C, 3, 3)
    w1 = jnp.transpose(w1, (0, 2, 3, 1))                            # (F, 3, 3, C)
    w1 = jnp.pad(w1, ((0, 0), (0, 0), (0, 0), (0, kc - c)))         # (F, 3, 3, KC)
    w1s = w1.reshape(feat, 9 * kc).astype(jnp.bfloat16)             # col = tap*KC + ch
    b1e = (params["b1"] * (1.0 + gamma) + beta).reshape(feat, 1)    # (F, 1)

    w2 = c_out * params["w2"]                                       # (C, F, 3, 3)
    w2s = (jnp.transpose(w2, (0, 2, 3, 1))                          # (C, 3, 3, F)
           .reshape(c, 9 * feat).astype(jnp.bfloat16))              # col = tap*F + f
    b2e = (c_out * params["b2"]).reshape(c, 1)                      # (C, 1)

    # --- layout: one transpose + one pad + reshape + one lane pad -------------
    x_t = jnp.transpose(x_nchw.astype(jnp.float32), (1, 0, 2, 3))   # (C, B, H, W)
    x_p = jnp.pad(x_t, ((0, kc - c), (0, 0), (1, 1), (1, 1)))       # (KC, B, H+2, W+2)
    x_ext = jnp.pad(x_p.reshape(kc, p),
                    ((0, 0), (2 * halo, lx - p - 2 * halo)))        # (KC, LX)

    # Interior-position mask: compile-time numpy constant (no XLA ops).
    m_np = np.zeros((b, h + 2, w + 2), np.float32)
    m_np[:, 1:h + 1, 1:w + 1] = 1.0
    mask_np = np.zeros((1, lw), np.float32)
    mask_np[0, halo:halo + p] = m_np.reshape(p)
    mask = jnp.asarray(mask_np)                                     # (1, LW)

    # Flat offsets of the 9 taps (k = dh*3 + dw), shifted so all are >= 0.
    offsets = tuple((dh - 1) * (w + 2) + (dw - 1) + halo
                    for dh in range(3) for dw in range(3))

    kern = functools.partial(_fused_denoiser_kernel, offsets=offsets, kc=kc,
                             feat=feat, cc=c, lw=lw, p=p_pad, x_off=2 * halo)
    cost = pl.CostEstimate(
        flops=2 * (feat * 9 * kc * lw + c * 9 * feat * p_pad),
        transcendentals=feat * lw,
        bytes_accessed=4 * (kc * lx + lw + c * p_pad + feat + c + 1)
                       + 2 * (feat * 9 * kc + c * 9 * feat))

    y = pl.pallas_call(
        kern,
        out_shape=jax.ShapeDtypeStruct((c, p_pad), jnp.float32),
        in_specs=[pl.BlockSpec(memory_space=pltpu.MemorySpace.SMEM)]
                 + [pl.BlockSpec(memory_space=pltpu.MemorySpace.VMEM)] * 6,
        out_specs=pl.BlockSpec(memory_space=pltpu.MemorySpace.VMEM),
        scratch_shapes=[pltpu.VMEM((9 * kc, lw), jnp.bfloat16),    # stacked conv1 window
                        pltpu.VMEM((feat, lw), jnp.bfloat16),      # hidden activation
                        pltpu.VMEM((9 * feat, p_pad), jnp.bfloat16)],  # stacked conv2 window
        cost_estimate=cost,
    )(c_skip, x_ext, mask, w1s, b1e, w2s, b2e)

    # --- extract interior and go back to NCHW ---------------------------------
    y = y[:, :p].reshape(c, b, h + 2, w + 2)[:, :, 1:h + 1, 1:w + 1]
    return jnp.transpose(y, (1, 0, 2, 3))                           # (B, C, H, W)


# ----------------------------------------------------------------------------
# Pure-JAX reference (lax.conv) for a sanity check
# ----------------------------------------------------------------------------
def reference_forward(x_nchw, params, sigma_value):
    b, c, h, w = x_nchw.shape
    sigma = jnp.full((b,), sigma_value, dtype=x_nchw.dtype)
    c_in = 1.0 / jnp.sqrt(sigma ** 2 + 1.0)
    c_skip = 1.0 / (sigma ** 2 + 1.0)
    c_out = sigma / jnp.sqrt(sigma ** 2 + 1.0)
    x = jnp.transpose(x_nchw, (0, 2, 3, 1)).astype(jnp.float32)
    x_in = x * c_in[:, None, None, None]
    feat = jnp.stack([jnp.log(sigma), sigma], axis=-1)
    gamma = feat @ params["wg"] + params["bg"]
    beta = feat @ params["wb"] + params["bb"]
    dn = ("NHWC", "HWIO", "NHWC")
    hmid = lax.conv_general_dilated(
        x_in, jnp.transpose(params["w1"], (2, 3, 1, 0)), (1, 1), "SAME",
        dimension_numbers=dn) + params["b1"]
    hmid = hmid * (1.0 + gamma[:, None, None, :]) + beta[:, None, None, :]
    hmid = hmid * jax.nn.sigmoid(hmid)
    y = lax.conv_general_dilated(
        hmid, jnp.transpose(params["w2"], (2, 3, 1, 0)), (1, 1), "SAME",
        dimension_numbers=dn) + params["b2"]
    out = (c_skip[:, None, None, None] * x + c_out[:, None, None, None] * y)
    return jnp.transpose(out, (0, 3, 1, 2))


# ----------------------------------------------------------------------------
# main
# ----------------------------------------------------------------------------
if __name__ == "__main__":
    B, C, H, W = 2, 4, 16, 16
    F = 32
    SIGMA_VALUE = 0.5

    key = jax.random.PRNGKey(0)
    x = jax.random.normal(key, (B, C, H, W), dtype=jnp.float32)

    # Deterministic synthetic parameters (shapes implied by the inner model).
    pkeys = jax.random.split(jax.random.PRNGKey(1), 6)
    params = {
        "w1": 0.1 * jax.random.normal(pkeys[0], (F, C, 3, 3), jnp.float32),
        "b1": 0.05 * jax.random.normal(pkeys[1], (F,), jnp.float32),
        "w2": 0.1 * jax.random.normal(pkeys[2], (C, F, 3, 3), jnp.float32),
        "b2": 0.05 * jax.random.normal(pkeys[3], (C,), jnp.float32),
        "wg": 0.1 * jax.random.normal(pkeys[4], (2, F), jnp.float32),
        "bg": jnp.zeros((F,), jnp.float32),
        "wb": 0.1 * jax.random.normal(pkeys[5], (2, F), jnp.float32),
        "bb": jnp.zeros((F,), jnp.float32),
    }

    out = model_wrapper_forward(x, params, SIGMA_VALUE)
    out = jax.block_until_ready(out)
    assert out.shape == (B, C, H, W) and out.dtype == jnp.float32

    ref = jax.block_until_ready(reference_forward(x, params, SIGMA_VALUE))
    np.testing.assert_allclose(np.asarray(out), np.asarray(ref),
                               rtol=1e-2, atol=1e-2)

    # sigma is traced, so a new sigma value must reuse the same executable.
    out2 = jax.block_until_ready(model_wrapper_forward(x, params, 1.3))
    ref2 = jax.block_until_ready(reference_forward(x, params, 1.3))
    np.testing.assert_allclose(np.asarray(out2), np.asarray(ref2),
                               rtol=1e-2, atol=1e-2)

    print("KERNEL_OK")
</pallas_src>

<mosaic_0001>
module attributes {stable_mosaic.version = 11 : i64} {
  func.func @_fused_denoiser_kernel(%arg0: memref<1xf32, #tpu.memory_space<smem>>, %arg1: memref<16x1024xf32, #tpu.memory_space<vmem>>, %arg2: memref<1x896xf32, #tpu.memory_space<vmem>>, %arg3: memref<32x144xbf16, #tpu.memory_space<vmem>>, %arg4: memref<32x1xf32, #tpu.memory_space<vmem>>, %arg5: memref<4x288xbf16, #tpu.memory_space<vmem>>, %arg6: memref<4x1xf32, #tpu.memory_space<vmem>>, %arg7: memref<4x768xf32, #tpu.memory_space<vmem>>, %arg8: memref<144x896xbf16, #tpu.memory_space<vmem>>, %arg9: memref<32x896xbf16, #tpu.memory_space<vmem>>, %arg10: memref<288x768xbf16, #tpu.memory_space<vmem>>) attributes {dimension_semantics = [], scalar_prefetch = 0 : i64, scratch_operands = 3 : i64, tpu.core_type = #tpu.core_type<tc>} {
    %c0 = arith.constant 0 : index
    %c0_0 = arith.constant 0 : index
    %0 = vector.load %arg1[%c0, %c0_0] : memref<16x1024xf32, #tpu.memory_space<vmem>>, vector<16x896xf32>
    %1 = arith.truncf %0 : vector<16x896xf32> to vector<16x896xbf16>
    %c0_1 = arith.constant 0 : index
    %c0_2 = arith.constant 0 : index
    %2 = vector.load %arg8[%c0_1, %c0_2] : memref<144x896xbf16, #tpu.memory_space<vmem>>, vector<16x896xbf16>
    tpu.vector_store %arg8[%c0_1, %c0_2], %1 {strides = array<i32>} : memref<144x896xbf16, #tpu.memory_space<vmem>>, vector<16x896xbf16>,
    %c0_3 = arith.constant 0 : index
    %c1 = arith.constant 1 : index
    %3 = vector.load %arg1[%c0_3, %c1] : memref<16x1024xf32, #tpu.memory_space<vmem>>, vector<16x896xf32>
    %4 = arith.truncf %3 : vector<16x896xf32> to vector<16x896xbf16>
    %c16 = arith.constant 16 : index
    %c0_4 = arith.constant 0 : index
    %5 = vector.load %arg8[%c16, %c0_4] : memref<144x896xbf16, #tpu.memory_space<vmem>>, vector<16x896xbf16>
    tpu.vector_store %arg8[%c16, %c0_4], %4 {strides = array<i32>} : memref<144x896xbf16, #tpu.memory_space<vmem>>, vector<16x896xbf16>,
    %c0_5 = arith.constant 0 : index
    %c2 = arith.constant 2 : index
    %6 = vector.load %arg1[%c0_5, %c2] : memref<16x1024xf32, #tpu.memory_space<vmem>>, vector<16x896xf32>
    %7 = arith.truncf %6 : vector<16x896xf32> to vector<16x896xbf16>
    %c32 = arith.constant 32 : index
    %c0_6 = arith.constant 0 : index
    %8 = vector.load %arg8[%c32, %c0_6] : memref<144x896xbf16, #tpu.memory_space<vmem>>, vector<16x896xbf16>
    tpu.vector_store %arg8[%c32, %c0_6], %7 {strides = array<i32>} : memref<144x896xbf16, #tpu.memory_space<vmem>>, vector<16x896xbf16>,
    %c0_7 = arith.constant 0 : index
    %c18 = arith.constant 18 : index
    %9 = vector.load %arg1[%c0_7, %c18] : memref<16x1024xf32, #tpu.memory_space<vmem>>, vector<16x896xf32>
    %10 = arith.truncf %9 : vector<16x896xf32> to vector<16x896xbf16>
    %c48 = arith.constant 48 : index
    %c0_8 = arith.constant 0 : index
    %11 = vector.load %arg8[%c48, %c0_8] : memref<144x896xbf16, #tpu.memory_space<vmem>>, vector<16x896xbf16>
    tpu.vector_store %arg8[%c48, %c0_8], %10 {strides = array<i32>} : memref<144x896xbf16, #tpu.memory_space<vmem>>, vector<16x896xbf16>,
    %c0_9 = arith.constant 0 : index
    %c19 = arith.constant 19 : index
    %12 = vector.load %arg1[%c0_9, %c19] : memref<16x1024xf32, #tpu.memory_space<vmem>>, vector<16x896xf32>
    %13 = arith.truncf %12 : vector<16x896xf32> to vector<16x896xbf16>
    %c64 = arith.constant 64 : index
    %c0_10 = arith.constant 0 : index
    %14 = vector.load %arg8[%c64, %c0_10] : memref<144x896xbf16, #tpu.memory_space<vmem>>, vector<16x896xbf16>
    tpu.vector_store %arg8[%c64, %c0_10], %13 {strides = array<i32>} : memref<144x896xbf16, #tpu.memory_space<vmem>>, vector<16x896xbf16>,
    %c0_11 = arith.constant 0 : index
    %c20 = arith.constant 20 : index
    %15 = vector.load %arg1[%c0_11, %c20] : memref<16x1024xf32, #tpu.memory_space<vmem>>, vector<16x896xf32>
    %16 = arith.truncf %15 : vector<16x896xf32> to vector<16x896xbf16>
    %c80 = arith.constant 80 : index
    %c0_12 = arith.constant 0 : index
    %17 = vector.load %arg8[%c80, %c0_12] : memref<144x896xbf16, #tpu.memory_space<vmem>>, vector<16x896xbf16>
    tpu.vector_store %arg8[%c80, %c0_12], %16 {strides = array<i32>} : memref<144x896xbf16, #tpu.memory_space<vmem>>, vector<16x896xbf16>,
    %c0_13 = arith.constant 0 : index
    %c36 = arith.constant 36 : index
    %18 = vector.load %arg1[%c0_13, %c36] : memref<16x1024xf32, #tpu.memory_space<vmem>>, vector<16x896xf32>
    %19 = arith.truncf %18 : vector<16x896xf32> to vector<16x896xbf16>
    %c96 = arith.constant 96 : index
    %c0_14 = arith.constant 0 : index
    %20 = vector.load %arg8[%c96, %c0_14] : memref<144x896xbf16, #tpu.memory_space<vmem>>, vector<16x896xbf16>
    tpu.vector_store %arg8[%c96, %c0_14], %19 {strides = array<i32>} : memref<144x896xbf16, #tpu.memory_space<vmem>>, vector<16x896xbf16>,
    %c0_15 = arith.constant 0 : index
    %c37 = arith.constant 37 : index
    %21 = vector.load %arg1[%c0_15, %c37] : memref<16x1024xf32, #tpu.memory_space<vmem>>, vector<16x896xf32>
    %22 = arith.truncf %21 : vector<16x896xf32> to vector<16x896xbf16>
    %c112 = arith.constant 112 : index
    %c0_16 = arith.constant 0 : index
    %23 = vector.load %arg8[%c112, %c0_16] : memref<144x896xbf16, #tpu.memory_space<vmem>>, vector<16x896xbf16>
    tpu.vector_store %arg8[%c112, %c0_16], %22 {strides = array<i32>} : memref<144x896xbf16, #tpu.memory_space<vmem>>, vector<16x896xbf16>,
    %c0_17 = arith.constant 0 : index
    %c38 = arith.constant 38 : index
    %24 = vector.load %arg1[%c0_17, %c38] : memref<16x1024xf32, #tpu.memory_space<vmem>>, vector<16x896xf32>
    %25 = arith.truncf %24 : vector<16x896xf32> to vector<16x896xbf16>
    %c128 = arith.constant 128 : index
    %c0_18 = arith.constant 0 : index
    %26 = vector.load %arg8[%c128, %c0_18] : memref<144x896xbf16, #tpu.memory_space<vmem>>, vector<16x896xbf16>
    tpu.vector_store %arg8[%c128, %c0_18], %25 {strides = array<i32>} : memref<144x896xbf16, #tpu.memory_space<vmem>>, vector<16x896xbf16>,
    %c0_19 = arith.constant 0 : index
    %c0_20 = arith.constant 0 : index
    %27 = vector.load %arg3[%c0_19, %c0_20] : memref<32x144xbf16, #tpu.memory_space<vmem>>, vector<32x144xbf16>
    %c0_21 = arith.constant 0 : index
    %c0_22 = arith.constant 0 : index
    %28 = vector.load %arg8[%c0_21, %c0_22] : memref<144x896xbf16, #tpu.memory_space<vmem>>, vector<144x896xbf16>
    %cst = arith.constant dense<0.000000e+00> : vector<32x896xf32>
    %29 = tpu.matmul %27, %28, %cst {dimension_numbers = #tpu.dot_dimension_numbers<[1], [0], [0], [1], [0, 0, 1, 1], [], []>} : vector<32x144xbf16>, vector<144x896xbf16>, vector<32x896xf32> -> vector<32x896xf32>
    %c0_23 = arith.constant 0 : index
    %c0_24 = arith.constant 0 : index
    %30 = vector.load %arg4[%c0_23, %c0_24] : memref<32x1xf32, #tpu.memory_space<vmem>>, vector<32x1xf32>
    %31 = vector.broadcast %30 : vector<32x1xf32> to vector<32x896xf32>
    %32 = arith.addf %29, %31 : vector<32x896xf32>
    %33 = arith.negf %32 : vector<32x896xf32>
    %34 = math.exp %33 : vector<32x896xf32>
    %cst_25 = arith.constant 1.000000e+00 : f32
    %35 = vector.broadcast %cst_25 : f32 to vector<32x896xf32>
    %36 = arith.addf %35, %34 : vector<32x896xf32>
    %37 = arith.divf %35, %36 : vector<32x896xf32>
    %38 = arith.mulf %32, %37 : vector<32x896xf32>
    %c0_26 = arith.constant 0 : index
    %c0_27 = arith.constant 0 : index
    %39 = vector.load %arg2[%c0_26, %c0_27] : memref<1x896xf32, #tpu.memory_space<vmem>>, vector<1x896xf32>
    %40 = vector.broadcast %39 : vector<1x896xf32> to vector<32x896xf32>
    %41 = arith.mulf %38, %40 : vector<32x896xf32>
    %42 = arith.truncf %41 : vector<32x896xf32> to vector<32x896xbf16>
    %c0_28 = arith.constant 0 : index
    %c0_29 = arith.constant 0 : index
    %43 = vector.load %arg9[%c0_28, %c0_29] : memref<32x896xbf16, #tpu.memory_space<vmem>>, vector<32x896xbf16>
    tpu.vector_store %arg9[%c0_28, %c0_29], %42 {strides = array<i32>} : memref<32x896xbf16, #tpu.memory_space<vmem>>, vector<32x896xbf16>,
    %c0_30 = arith.constant 0 : index
    %c0_31 = arith.constant 0 : index
    %44 = vector.load %arg9[%c0_30, %c0_31] : memref<32x896xbf16, #tpu.memory_space<vmem>>, vector<32x768xbf16>
    %c0_32 = arith.constant 0 : index
    %c0_33 = arith.constant 0 : index
    %45 = vector.load %arg10[%c0_32, %c0_33] : memref<288x768xbf16, #tpu.memory_space<vmem>>, vector<32x768xbf16>
    tpu.vector_store %arg10[%c0_32, %c0_33], %44 {strides = array<i32>} : memref<288x768xbf16, #tpu.memory_space<vmem>>, vector<32x768xbf16>,
    %c0_34 = arith.constant 0 : index
    %c1_35 = arith.constant 1 : index
    %46 = vector.load %arg9[%c0_34, %c1_35] : memref<32x896xbf16, #tpu.memory_space<vmem>>, vector<32x768xbf16>
    %c32_36 = arith.constant 32 : index
    %c0_37 = arith.constant 0 : index
    %47 = vector.load %arg10[%c32_36, %c0_37] : memref<288x768xbf16, #tpu.memory_space<vmem>>, vector<32x768xbf16>
    tpu.vector_store %arg10[%c32_36, %c0_37], %46 {strides = array<i32>} : memref<288x768xbf16, #tpu.memory_space<vmem>>, vector<32x768xbf16>,
    %c0_38 = arith.constant 0 : index
    %c2_39 = arith.constant 2 : index
    %48 = vector.load %arg9[%c0_38, %c2_39] : memref<32x896xbf16, #tpu.memory_space<vmem>>, vector<32x768xbf16>
    %c64_40 = arith.constant 64 : index
    %c0_41 = arith.constant 0 : index
    %49 = vector.load %arg10[%c64_40, %c0_41] : memref<288x768xbf16, #tpu.memory_space<vmem>>, vector<32x768xbf16>
    tpu.vector_store %arg10[%c64_40, %c0_41], %48 {strides = array<i32>} : memref<288x768xbf16, #tpu.memory_space<vmem>>, vector<32x768xbf16>,
    %c0_42 = arith.constant 0 : index
    %c18_43 = arith.constant 18 : index
    %50 = vector.load %arg9[%c0_42, %c18_43] : memref<32x896xbf16, #tpu.memory_space<vmem>>, vector<32x768xbf16>
    %c96_44 = arith.constant 96 : index
    %c0_45 = arith.constant 0 : index
    %51 = vector.load %arg10[%c96_44, %c0_45] : memref<288x768xbf16, #tpu.memory_space<vmem>>, vector<32x768xbf16>
    tpu.vector_store %arg10[%c96_44, %c0_45], %50 {strides = array<i32>} : memref<288x768xbf16, #tpu.memory_space<vmem>>, vector<32x768xbf16>,
    %c0_46 = arith.constant 0 : index
    %c19_47 = arith.constant 19 : index
    %52 = vector.load %arg9[%c0_46, %c19_47] : memref<32x896xbf16, #tpu.memory_space<vmem>>, vector<32x768xbf16>
    %c128_48 = arith.constant 128 : index
    %c0_49 = arith.constant 0 : index
    %53 = vector.load %arg10[%c128_48, %c0_49] : memref<288x768xbf16, #tpu.memory_space<vmem>>, vector<32x768xbf16>
    tpu.vector_store %arg10[%c128_48, %c0_49], %52 {strides = array<i32>} : memref<288x768xbf16, #tpu.memory_space<vmem>>, vector<32x768xbf16>,
    %c0_50 = arith.constant 0 : index
    %c20_51 = arith.constant 20 : index
    %54 = vector.load %arg9[%c0_50, %c20_51] : memref<32x896xbf16, #tpu.memory_space<vmem>>, vector<32x768xbf16>
    %c160 = arith.constant 160 : index
    %c0_52 = arith.constant 0 : index
    %55 = vector.load %arg10[%c160, %c0_52] : memref<288x768xbf16, #tpu.memory_space<vmem>>, vector<32x768xbf16>
    tpu.vector_store %arg10[%c160, %c0_52], %54 {strides = array<i32>} : memref<288x768xbf16, #tpu.memory_space<vmem>>, vector<32x768xbf16>,
    %c0_53 = arith.constant 0 : index
    %c36_54 = arith.constant 36 : index
    %56 = vector.load %arg9[%c0_53, %c36_54] : memref<32x896xbf16, #tpu.memory_space<vmem>>, vector<32x768xbf16>
    %c192 = arith.constant 192 : index
    %c0_55 = arith.constant 0 : index
    %57 = vector.load %arg10[%c192, %c0_55] : memref<288x768xbf16, #tpu.memory_space<vmem>>, vector<32x768xbf16>
    tpu.vector_store %arg10[%c192, %c0_55], %56 {strides = array<i32>} : memref<288x768xbf16, #tpu.memory_space<vmem>>, vector<32x768xbf16>,
    %c0_56 = arith.constant 0 : index
    %c37_57 = arith.constant 37 : index
    %58 = vector.load %arg9[%c0_56, %c37_57] : memref<32x896xbf16, #tpu.memory_space<vmem>>, vector<32x768xbf16>
    %c224 = arith.constant 224 : index
    %c0_58 = arith.constant 0 : index
    %59 = vector.load %arg10[%c224, %c0_58] : memref<288x768xbf16, #tpu.memory_space<vmem>>, vector<32x768xbf16>
    tpu.vector_store %arg10[%c224, %c0_58], %58 {strides = array<i32>} : memref<288x768xbf16, #tpu.memory_space<vmem>>, vector<32x768xbf16>,
    %c0_59 = arith.constant 0 : index
    %c38_60 = arith.constant 38 : index
    %60 = vector.load %arg9[%c0_59, %c38_60] : memref<32x896xbf16, #tpu.memory_space<vmem>>, vector<32x768xbf16>
    %c256 = arith.constant 256 : index
    %c0_61 = arith.constant 0 : index
    %61 = vector.load %arg10[%c256, %c0_61] : memref<288x768xbf16, #tpu.memory_space<vmem>>, vector<32x768xbf16>
    tpu.vector_store %arg10[%c256, %c0_61], %60 {strides = array<i32>} : memref<288x768xbf16, #tpu.memory_space<vmem>>, vector<32x768xbf16>,
    %c0_62 = arith.constant 0 : index
    %c0_63 = arith.constant 0 : index
    %62 = vector.load %arg5[%c0_62, %c0_63] : memref<4x288xbf16, #tpu.memory_space<vmem>>, vector<4x288xbf16>
    %c0_64 = arith.constant 0 : index
    %c0_65 = arith.constant 0 : index
    %63 = vector.load %arg10[%c0_64, %c0_65] : memref<288x768xbf16, #tpu.memory_space<vmem>>, vector<288x768xbf16>
    %cst_66 = arith.constant dense<0.000000e+00> : vector<4x768xf32>
    %64 = tpu.matmul %62, %63, %cst_66 {dimension_numbers = #tpu.dot_dimension_numbers<[1], [0], [0], [1], [0, 0, 1, 1], [], []>} : vector<4x288xbf16>, vector<288x768xbf16>, vector<4x768xf32> -> vector<4x768xf32>
    %c0_67 = arith.constant 0 : index
    %c38_68 = arith.constant 38 : index
    %65 = vector.load %arg1[%c0_67, %c38_68] : memref<16x1024xf32, #tpu.memory_space<vmem>>, vector<4x768xf32>
    %c0_69 = arith.constant 0 : index
    %66 = memref.load %arg0[%c0_69] : memref<1xf32, #tpu.memory_space<smem>>
    %67 = vector.broadcast %66 : f32 to vector<4x768xf32>
    %68 = arith.mulf %67, %65 : vector<4x768xf32>
    %69 = arith.addf %68, %64 : vector<4x768xf32>
    %c0_70 = arith.constant 0 : index
    %c0_71 = arith.constant 0 : index
    %70 = vector.load %arg6[%c0_70, %c0_71] : memref<4x1xf32, #tpu.memory_space<vmem>>, vector<4x1xf32>
    %71 = vector.broadcast %70 : vector<4x1xf32> to vector<4x768xf32>
    %72 = arith.addf %69, %71 : vector<4x768xf32>
    %c0_72 = arith.constant 0 : index
    %c0_73 = arith.constant 0 : index
    %73 = vector.load %arg7[%c0_72, %c0_73] : memref<4x768xf32, #tpu.memory_space<vmem>>, vector<4x768xf32>
    tpu.vector_store %arg7[%c0_72, %c0_73], %72 {strides = array<i32>} : memref<4x768xf32, #tpu.memory_space<vmem>>, vector<4x768xf32>,
    return
  }
}

</mosaic_0001>

<llo_original>
// kernel: model_wrapper_forward.1
$region0: #{model_wrapper_forward.1}
  #allocation0 [shape = 'u32[]', space=smem, size = 0x4, offset = 0x4, fixed_abs, tag = 'smem constant byte address 0x4 - core index']
  #allocation1 [shape = 'u32[72,128]{1,0:T(1,128)}', space=vmem, size = 0x9000, scoped, tag = 'internal scratch']
  #allocation2 [shape = 'bf16[144,896]{1,0:T(8,128)(2,1)}', space=vmem, size = 0x3f000, scoped, tag = 'scratch operand']
  #allocation3 [shape = 'bf16[32,896]{1,0:T(8,128)(2,1)}', space=vmem, size = 0xe000, scoped, tag = 'scratch operand']
  #allocation4 [shape = 'bf16[288,768]{1,0:T(8,128)(2,1)}', space=vmem, size = 0x6c000, scoped, tag = 'scratch operand']
  #allocation5 [shape = 'f32[1]{0:T(128)S(6)}', space=smem, size = 0x200, scoped, tag = 'scoped memory for model_wrapper_forward.1']
  %s0 = inlined_call_operand.<no memory space> [shape: f32[1], index: 0, kind: input, shape index: {}]
  %s1 = inlined_call_operand.vmem [shape: f32[16,1024], index: 1, kind: input, shape index: {}]
  %s2 = inlined_call_operand.vmem [shape: f32[1,896], index: 2, kind: input, shape index: {}]
  %s3 = inlined_call_operand.vmem [shape: bf16[32,144], index: 3, kind: input, shape index: {}]
  %s4 = inlined_call_operand.vmem [shape: f32[32,1], index: 4, kind: input, shape index: {}]
  %s5 = inlined_call_operand.vmem [shape: bf16[4,288], index: 5, kind: input, shape index: {}]
  %s6 = inlined_call_operand.vmem [shape: f32[4,1], index: 6, kind: input, shape index: {}]
  %s7 = inlined_call_operand.vmem [shape: f32[4,768], index: 7, kind: output, shape index: {}]
  %s8 = sld [smem:[#allocation0]]
  $region38: #{model_wrapper_forward.1} parent=0
    _
  %s10 = ssub.s32 1, %s8
  %s11 = scalar_select 0, %s10, %s8
  %12 = sst [smem:[#allocation5]] %s0
  // Predicated region
  $region2: #{model_wrapper_forward.1} parent=0 // pred_check
    _
  $region3: #{model_wrapper_forward.1} parent=0 // pred_check_branch
    %14 = sbr.rel (0) target = $region5
  $region4: #{model_wrapper_forward.1} parent=0 // pred_region
    _
  $region5: #{model_wrapper_forward.1} parent=0 // pred_fallthru
    _
  // Predicated region
  $region6: #{model_wrapper_forward.1} parent=0 // pred_check
    _
  $region7: #{model_wrapper_forward.1} parent=0 // pred_check_branch
    %16 = sbr.rel (0) target = $region9
  $region8: #{model_wrapper_forward.1} parent=0 // pred_region
    _
  $region9: #{model_wrapper_forward.1} parent=0 // pred_fallthru
    _
  // Predicated region
  $region10: #{model_wrapper_forward.1} parent=0 // pred_check
    _
  $region11: #{model_wrapper_forward.1} parent=0 // pred_check_branch
    %18 = sbr.rel (0) target = $region13
  $region12: #{model_wrapper_forward.1} parent=0 // pred_region
    _
  $region13: #{model_wrapper_forward.1} parent=0 // pred_fallthru
    _
  // Predicated region
  $region14: #{model_wrapper_forward.1} parent=0 // pred_check
    _
  $region15: #{model_wrapper_forward.1} parent=0 // pred_check_branch
    %20 = sbr.rel (0) target = $region17
  $region16: #{model_wrapper_forward.1} parent=0 // pred_region
    _
  $region17: #{model_wrapper_forward.1} parent=0 // pred_fallthru
    _
  // Predicated region
  $region18: #{model_wrapper_forward.1} parent=0 // pred_check
    _
  $region19: #{model_wrapper_forward.1} parent=0 // pred_check_branch
    %22 = sbr.rel (0) target = $region21
  $region20: #{model_wrapper_forward.1} parent=0 // pred_region
    _
  $region21: #{model_wrapper_forward.1} parent=0 // pred_fallthru
    _
  // Predicated region
  $region22: #{model_wrapper_forward.1} parent=0 // pred_check
    _
  $region23: #{model_wrapper_forward.1} parent=0 // pred_check_branch
    %24 = sbr.rel (0) target = $region25
  $region24: #{model_wrapper_forward.1} parent=0 // pred_region
    _
  $region25: #{model_wrapper_forward.1} parent=0 // pred_fallthru
    _
  // Predicated region
  $region26: #{model_wrapper_forward.1} parent=0 // pred_check
    _
  $region27: #{model_wrapper_forward.1} parent=0 // pred_check_branch
    %26 = sbr.rel (0) target = $region29
  $region28: #{model_wrapper_forward.1} parent=0 // pred_region
    _
  $region29: #{model_wrapper_forward.1} parent=0 // pred_fallthru
    _
  %v28 = vld [vmem:[%s1] sm:$0xff]
  %v29 = vld [vmem:[%s1 + $0x8] sm:$0xff]
  %v30 = vld [vmem:[%s1 + $0x10] sm:$0xff]
  %v31 = vld [vmem:[%s1 + $0x18] sm:$0xff]
  %v32 = vld [vmem:[%s1 + $0x20] sm:$0xff]
  %v33 = vld [vmem:[%s1 + $0x28] sm:$0xff]
  %v34 = vld [vmem:[%s1 + $0x30] sm:$0xff]
  %v35 = vld [vmem:[%s1 + $0x40] sm:$0xff]
  %v36 = vld [vmem:[%s1 + $0x48] sm:$0xff]
  %v37 = vld [vmem:[%s1 + $0x50] sm:$0xff]
  %v38 = vld [vmem:[%s1 + $0x58] sm:$0xff]
  %v39 = vld [vmem:[%s1 + $0x60] sm:$0xff]
  %v40 = vld [vmem:[%s1 + $0x68] sm:$0xff]
  %v41 = vld [vmem:[%s1 + $0x70] sm:$0xff]
  %v42 = vpack.c.bf16 %v29, %v28
  %v43 = vpack.c.bf16 %v31, %v30
  %v44 = vpack.c.bf16 %v33, %v32
  %v45 = vpack.c.bf16 %v34, %v34
  %v46 = vpack.c.bf16 %v36, %v35
  %v47 = vpack.c.bf16 %v38, %v37
  %v48 = vpack.c.bf16 %v40, %v39
  %v49 = vpack.c.bf16 %v41, %v41
  %50 = vst [vmem:[#allocation2] sm:$0xff] %v42
  %51 = vst [vmem:[#allocation2 + $0x8] sm:$0xff] %v43
  %52 = vst [vmem:[#allocation2 + $0x10] sm:$0xff] %v44
  %53 = vst [vmem:[#allocation2 + $0x18] sm:$0xf] %v45
  %54 = vst [vmem:[#allocation2 + $0x1c] sm:$0xff] %v46
  %55 = vst [vmem:[#allocation2 + $0x24] sm:$0xff] %v47
  %56 = vst [vmem:[#allocation2 + $0x2c] sm:$0xff] %v48
  %57 = vst [vmem:[#allocation2 + $0x34] sm:$0xf] %v49
  %v58 = vld [vmem:[%s1] sm:$0xff]
  %v59 = vld [vmem:[%s1 + $0x8] sm:$0xff]
  %v60 = vld [vmem:[%s1 + $0x10] sm:$0xff]
  %v61 = vld [vmem:[%s1 + $0x18] sm:$0xff]
  %v62 = vld [vmem:[%s1 + $0x20] sm:$0xff]
  %v63 = vld [vmem:[%s1 + $0x28] sm:$0xff]
  %v64 = vld [vmem:[%s1 + $0x30] sm:$0xff]
  %v65 = vld [vmem:[%s1 + $0x38] sm:$0xff]
  %v66 = vld [vmem:[%s1 + $0x40] sm:$0xff]
  %v67 = vld [vmem:[%s1 + $0x48] sm:$0xff]
  %v68 = vld [vmem:[%s1 + $0x50] sm:$0xff]
  %v69 = vld [vmem:[%s1 + $0x58] sm:$0xff]
  %v70 = vld [vmem:[%s1 + $0x60] sm:$0xff]
  %v71 = vld [vmem:[%s1 + $0x68] sm:$0xff]
  %v72 = vld [vmem:[%s1 + $0x70] sm:$0xff]
  %v73 = vld [vmem:[%s1 + $0x78] sm:$0xff]
  %v74 = vpack.c.bf16 %v59, %v58
  %v75 = vpack.c.bf16 %v61, %v60
  %v76 = vpack.c.bf16 %v63, %v62
  %v77 = vpack.c.bf16 %v65, %v64
  %v78 = vpack.c.bf16 %v67, %v66
  %v79 = vpack.c.bf16 %v69, %v68
  %v80 = vpack.c.bf16 %v71, %v70
  %v81 = vpack.c.bf16 %v73, %v72
  %90 = vrot.lane.b32.xlu0 %v74, 127
  %v91 = vpop.permute.xlu0 %90
  %92 = vrot.lane.b32.xlu0 %v75, 127
  %v93 = vpop.permute.xlu0 %92
  %94 = vrot.lane.b32.xlu0 %v76, 127
  %v95 = vpop.permute.xlu0 %94
  %96 = vrot.lane.b32.xlu0 %v77, 127
  %v97 = vpop.permute.xlu0 %96
  %98 = vrot.lane.b32.xlu0 %v78, 127
  %v99 = vpop.permute.xlu0 %98
  %100 = vrot.lane.b32.xlu0 %v79, 127
  %v101 = vpop.permute.xlu0 %100
  %102 = vrot.lane.b32.xlu0 %v80, 127
  %v103 = vpop.permute.xlu0 %102
  %104 = vrot.lane.b32.xlu0 %v81, 127
  %v105 = vpop.permute.xlu0 %104
  %v106 = vrot.slane %v91, 4
  %v107 = vrot.slane %v93, 4
  %v108 = vrot.slane %v95, 4
  %v109 = vrot.slane %v97, 4
  %v110 = vrot.slane %v99, 4
  %v111 = vrot.slane %v101, 4
  %v112 = vrot.slane %v103, 4
  %v113 = vrot.slane %v105, 4
  %vm114 = vcmask 1043456
  %v115 = vsel %vm114, %v106, %v107
  %vm116 = vcmask 1039360
  %v117 = vsel %vm116, %v91, %v115
  %v118 = vsel %vm114, %v107, %v108
  %v119 = vsel %vm116, %v93, %v118
  %v120 = vsel %vm114, %v108, %v109
  %v121 = vsel %vm116, %v95, %v120
  %v122 = vsel %vm116, %v97, %v109
  %v123 = vsel %vm114, %v110, %v111
  %v124 = vsel %vm116, %v99, %v123
  %v125 = vsel %vm114, %v111, %v112
  %v126 = vsel %vm116, %v101, %v125
  %v127 = vsel %vm114, %v112, %v113
  %v128 = vsel %vm116, %v103, %v127
  %v129 = vsel %vm116, %v105, %v113
  %138 = vst [vmem:[#allocation2 + $0x38] sm:$0xff] %v117
  %139 = vst [vmem:[#allocation2 + $0x40] sm:$0xff] %v119
  %140 = vst [vmem:[#allocation2 + $0x48] sm:$0xff] %v121
  %141 = vst [vmem:[#allocation2 + $0x50] sm:$0xf] %v122
  %142 = vst [vmem:[#allocation2 + $0x54] sm:$0xff] %v124
  %143 = vst [vmem:[#allocation2 + $0x5c] sm:$0xff] %v126
  %144 = vst [vmem:[#allocation2 + $0x64] sm:$0xff] %v128
  %145 = vst [vmem:[#allocation2 + $0x6c] sm:$0xf] %v129
  %v146 = vld [vmem:[%s1] sm:$0xff]
  %v147 = vld [vmem:[%s1 + $0x8] sm:$0xff]
  %v148 = vld [vmem:[%s1 + $0x10] sm:$0xff]
  %v149 = vld [vmem:[%s1 + $0x18] sm:$0xff]
  %v150 = vld [vmem:[%s1 + $0x20] sm:$0xff]
  %v151 = vld [vmem:[%s1 + $0x28] sm:$0xff]
  %v152 = vld [vmem:[%s1 + $0x30] sm:$0xff]
  %v153 = vld [vmem:[%s1 + $0x38] sm:$0xff]
  %v154 = vld [vmem:[%s1 + $0x40] sm:$0xff]
  %v155 = vld [vmem:[%s1 + $0x48] sm:$0xff]
  %v156 = vld [vmem:[%s1 + $0x50] sm:$0xff]
  %v157 = vld [vmem:[%s1 + $0x58] sm:$0xff]
  %v158 = vld [vmem:[%s1 + $0x60] sm:$0xff]
  %v159 = vld [vmem:[%s1 + $0x68] sm:$0xff]
  %v160 = vld [vmem:[%s1 + $0x70] sm:$0xff]
  %v161 = vld [vmem:[%s1 + $0x78] sm:$0xff]
  %v162 = vpack.c.bf16 %v147, %v146
  %v163 = vpack.c.bf16 %v149, %v148
  %v164 = vpack.c.bf16 %v151, %v150
  %v165 = vpack.c.bf16 %v153, %v152
  %v166 = vpack.c.bf16 %v155, %v154
  %v167 = vpack.c.bf16 %v157, %v156
  %v168 = vpack.c.bf16 %v159, %v158
  %v169 = vpack.c.bf16 %v161, %v160
  %178 = vrot.lane.b32.xlu0 %v162, 126
  %v179 = vpop.permute.xlu0 %178
  %180 = vrot.lane.b32.xlu0 %v163, 126
  %v181 = vpop.permute.xlu0 %180
  %182 = vrot.lane.b32.xlu0 %v164, 126
  %v183 = vpop.permute.xlu0 %182
  %184 = vrot.lane.b32.xlu0 %v165, 126
  %v185 = vpop.permute.xlu0 %184
  %186 = vrot.lane.b32.xlu0 %v166, 126
  %v187 = vpop.permute.xlu0 %186
  %188 = vrot.lane.b32.xlu0 %v167, 126
  %v189 = vpop.permute.xlu0 %188
  %190 = vrot.lane.b32.xlu0 %v168, 126
  %v191 = vpop.permute.xlu0 %190
  %192 = vrot.lane.b32.xlu0 %v169, 126
  %v193 = vpop.permute.xlu0 %192
  %v194 = vrot.slane %v179, 4
  %v195 = vrot.slane %v181, 4
  %v196 = vrot.slane %v183, 4
  %v197 = vrot.slane %v185, 4
  %v198 = vrot.slane %v187, 4
  %v199 = vrot.slane %v189, 4
  %v200 = vrot.slane %v191, 4
  %v201 = vrot.slane %v193, 4
  %v202 = vsel %vm114, %v194, %v195
  %vm203 = vcmask 1031168
  %v204 = vsel %vm203, %v179, %v202
  %v205 = vsel %vm114, %v195, %v196
  %v206 = vsel %vm203, %v181, %v205
  %v207 = vsel %vm114, %v196, %v197
  %v208 = vsel %vm203, %v183, %v207
  %v209 = vsel %vm203, %v185, %v197
  %v210 = vsel %vm114, %v198, %v199
  %v211 = vsel %vm203, %v187, %v210
  %v212 = vsel %vm114, %v199, %v200
  %v213 = vsel %vm203, %v189, %v212
  %v214 = vsel %vm114, %v200, %v201
  %v215 = vsel %vm203, %v191, %v214
  %v216 = vsel %vm203, %v193, %v201
  %225 = vst [vmem:[#allocation2 + $0x70] sm:$0xff] %v204
  %226 = vst [vmem:[#allocation2 + $0x78] sm:$0xff] %v206
  %227 = vst [vmem:[#allocation2 + $0x80] sm:$0xff] %v208
  %228 = vst [vmem:[#allocation2 + $0x88] sm:$0xf] %v209
  %229 = vst [vmem:[#allocation2 + $0x8c] sm:$0xff] %v211
  %230 = vst [vmem:[#allocation2 + $0x94] sm:$0xff] %v213
  %231 = vst [vmem:[#allocation2 + $0x9c] sm:$0xff] %v215
  %232 = vst [vmem:[#allocation2 + $0xa4] sm:$0xf] %v216
  %v233 = vld [vmem:[%s1] sm:$0xff]
  %v234 = vld [vmem:[%s1 + $0x8] sm:$0xff]
  %v235 = vld [vmem:[%s1 + $0x10] sm:$0xff]
  %v236 = vld [vmem:[%s1 + $0x18] sm:$0xff]
  %v237 = vld [vmem:[%s1 + $0x20] sm:$0xff]
  %v238 = vld [vmem:[%s1 + $0x28] sm:$0xff]
  %v239 = vld [vmem:[%s1 + $0x30] sm:$0xff]
  %v240 = vld [vmem:[%s1 + $0x38] sm:$0xff]
  %v241 = vld [vmem:[%s1 + $0x40] sm:$0xff]
  %v242 = vld [vmem:[%s1 + $0x48] sm:$0xff]
  %v243 = vld [vmem:[%s1 + $0x50] sm:$0xff]
  %v244 = vld [vmem:[%s1 + $0x58] sm:$0xff]
  %v245 = vld [vmem:[%s1 + $0x60] sm:$0xff]
  %v246 = vld [vmem:[%s1 + $0x68] sm:$0xff]
  %v247 = vld [vmem:[%s1 + $0x70] sm:$0xff]
  %v248 = vld [vmem:[%s1 + $0x78] sm:$0xff]
  %v249 = vpack.c.bf16 %v234, %v233
  %v250 = vpack.c.bf16 %v236, %v235
  %v251 = vpack.c.bf16 %v238, %v237
  %v252 = vpack.c.bf16 %v240, %v239
  %v253 = vpack.c.bf16 %v242, %v241
  %v254 = vpack.c.bf16 %v244, %v243
  %v255 = vpack.c.bf16 %v246, %v245
  %v256 = vpack.c.bf16 %v248, %v247
  %265 = vrot.lane.b32.xlu0 %v249, 110
  %v266 = vpop.permute.xlu0 %265
  %267 = vrot.lane.b32.xlu0 %v250, 110
  %v268 = vpop.permute.xlu0 %267
  %269 = vrot.lane.b32.xlu0 %v251, 110
  %v270 = vpop.permute.xlu0 %269
  %271 = vrot.lane.b32.xlu0 %v252, 110
  %v272 = vpop.permute.xlu0 %271
  %273 = vrot.lane.b32.xlu0 %v253, 110
  %v274 = vpop.permute.xlu0 %273
  %275 = vrot.lane.b32.xlu0 %v254, 110
  %v276 = vpop.permute.xlu0 %275
  %277 = vrot.lane.b32.xlu0 %v255, 110
  %v278 = vpop.permute.xlu0 %277
  %279 = vrot.lane.b32.xlu0 %v256, 110
  %v280 = vpop.permute.xlu0 %279
  %v281 = vrot.slane %v266, 4
  %v282 = vrot.slane %v268, 4
  %v283 = vrot.slane %v270, 4
  %v284 = vrot.slane %v272, 4
  %v285 = vrot.slane %v274, 4
  %v286 = vrot.slane %v276, 4
  %v287 = vrot.slane %v278, 4
  %v288 = vrot.slane %v280, 4
  %v289 = vsel %vm114, %v281, %v282
  %vm290 = vcmask 900096
  %v291 = vsel %vm290, %v266, %v289
  %v292 = vsel %vm114, %v282, %v283
  %v293 = vsel %vm290, %v268, %v292
  %v294 = vsel %vm114, %v283, %v284
  %v295 = vsel %vm290, %v270, %v294
  %v296 = vsel %vm290, %v272, %v284
  %v297 = vsel %vm114, %v285, %v286
  %v298 = vsel %vm290, %v274, %v297
  %v299 = vsel %vm114, %v286, %v287
  %v300 = vsel %vm290, %v276, %v299
  %v301 = vsel %vm114, %v287, %v288
  %v302 = vsel %vm290, %v278, %v301
  %v303 = vsel %vm290, %v280, %v288
  %312 = vst [vmem:[#allocation2 + $0xa8] sm:$0xff] %v291
  %313 = vst [vmem:[#allocation2 + $0xb0] sm:$0xff] %v293
  %314 = vst [vmem:[#allocation2 + $0xb8] sm:$0xff] %v295
  %315 = vst [vmem:[#allocation2 + $0xc0] sm:$0xf] %v296
  %316 = vst [vmem:[#allocation2 + $0xc4] sm:$0xff] %v298
  %317 = vst [vmem:[#allocation2 + $0xcc] sm:$0xff] %v300
  %318 = vst [vmem:[#allocation2 + $0xd4] sm:$0xff] %v302
  %319 = vst [vmem:[#allocation2 + $0xdc] sm:$0xf] %v303
  %v320 = vld [vmem:[%s1] sm:$0xff]
  %v321 = vld [vmem:[%s1 + $0x8] sm:$0xff]
  %v322 = vld [vmem:[%s1 + $0x10] sm:$0xff]
  %v323 = vld [vmem:[%s1 + $0x18] sm:$0xff]
  %v324 = vld [vmem:[%s1 + $0x20] sm:$0xff]
  %v325 = vld [vmem:[%s1 + $0x28] sm:$0xff]
  %v326 = vld [vmem:[%s1 + $0x30] sm:$0xff]
  %v327 = vld [vmem:[%s1 + $0x38] sm:$0xff]
  %v328 = vld [vmem:[%s1 + $0x40] sm:$0xff]
  %v329 = vld [vmem:[%s1 + $0x48] sm:$0xff]
  %v330 = vld [vmem:[%s1 + $0x50] sm:$0xff]
  %v331 = vld [vmem:[%s1 + $0x58] sm:$0xff]
  %v332 = vld [vmem:[%s1 + $0x60] sm:$0xff]
  %v333 = vld [vmem:[%s1 + $0x68] sm:$0xff]
  %v334 = vld [vmem:[%s1 + $0x70] sm:$0xff]
  %v335 = vld [vmem:[%s1 + $0x78] sm:$0xff]
  %v336 = vpack.c.bf16 %v321, %v320
  %v337 = vpack.c.bf16 %v323, %v322
  %v338 = vpack.c.bf16 %v325, %v324
  %v339 = vpack.c.bf16 %v327, %v326
  %v340 = vpack.c.bf16 %v329, %v328
  %v341 = vpack.c.bf16 %v331, %v330
  %v342 = vpack.c.bf16 %v333, %v332
  %v343 = vpack.c.bf16 %v335, %v334
  %352 = vrot.lane.b32.xlu0 %v336, 109
  %v353 = vpop.permute.xlu0 %352
  %354 = vrot.lane.b32.xlu0 %v337, 109
  %v355 = vpop.permute.xlu0 %354
  %356 = vrot.lane.b32.xlu0 %v338, 109
  %v357 = vpop.permute.xlu0 %356
  %358 = vrot.lane.b32.xlu0 %v339, 109
  %v359 = vpop.permute.xlu0 %358
  %360 = vrot.lane.b32.xlu0 %v340, 109
  %v361 = vpop.permute.xlu0 %360
  %362 = vrot.lane.b32.xlu0 %v341, 109
  %v363 = vpop.permute.xlu0 %362
  %364 = vrot.lane.b32.xlu0 %v342, 109
  %v365 = vpop.permute.xlu0 %364
  %366 = vrot.lane.b32.xlu0 %v343, 109
  %v367 = vpop.permute.xlu0 %366
  %v368 = vrot.slane %v353, 4
  %v369 = vrot.slane %v355, 4
  %v370 = vrot.slane %v357, 4
  %v371 = vrot.slane %v359, 4
  %v372 = vrot.slane %v361, 4
  %v373 = vrot.slane %v363, 4
  %v374 = vrot.slane %v365, 4
  %v375 = vrot.slane %v367, 4
  %v376 = vsel %vm114, %v368, %v369
  %vm377 = vcmask 891904
  %v378 = vsel %vm377, %v353, %v376
  %v379 = vsel %vm114, %v369, %v370
  %v380 = vsel %vm377, %v355, %v379
  %v381 = vsel %vm114, %v370, %v371
  %v382 = vsel %vm377, %v357, %v381
  %v383 = vsel %vm377, %v359, %v371
  %v384 = vsel %vm114, %v372, %v373
  %v385 = vsel %vm377, %v361, %v384
  %v386 = vsel %vm114, %v373, %v374
  %v387 = vsel %vm377, %v363, %v386
  %v388 = vsel %vm114, %v374, %v375
  %v389 = vsel %vm377, %v365, %v388
  %v390 = vsel %vm377, %v367, %v375
  %399 = vst [vmem:[#allocation2 + $0xe0] sm:$0xff] %v378
  %400 = vst [vmem:[#allocation2 + $0xe8] sm:$0xff] %v380
  %401 = vst [vmem:[#allocation2 + $0xf0] sm:$0xff] %v382
  %402 = vst [vmem:[#allocation2 + $0xf8] sm:$0xf] %v383
  %403 = vst [vmem:[#allocation2 + $0xfc] sm:$0xff] %v385
  %404 = vst [vmem:[#allocation2 + $0x104] sm:$0xff] %v387
  %405 = vst [vmem:[#allocation2 + $0x10c] sm:$0xff] %v389
  %406 = vst [vmem:[#allocation2 + $0x114] sm:$0xf] %v390
  %v407 = vld [vmem:[%s1] sm:$0xff]
  %v408 = vld [vmem:[%s1 + $0x8] sm:$0xff]
  %v409 = vld [vmem:[%s1 + $0x10] sm:$0xff]
  %v410 = vld [vmem:[%s1 + $0x18] sm:$0xff]
  %v411 = vld [vmem:[%s1 + $0x20] sm:$0xff]
  %v412 = vld [vmem:[%s1 + $0x28] sm:$0xff]
  %v413 = vld [vmem:[%s1 + $0x30] sm:$0xff]
  %v414 = vld [vmem:[%s1 + $0x38] sm:$0xff]
  %v415 = vld [vmem:[%s1 + $0x40] sm:$0xff]
  %v416 = vld [vmem:[%s1 + $0x48] sm:$0xff]
  %v417 = vld [vmem:[%s1 + $0x50] sm:$0xff]
  %v418 = vld [vmem:[%s1 + $0x58] sm:$0xff]
  %v419 = vld [vmem:[%s1 + $0x60] sm:$0xff]
  %v420 = vld [vmem:[%s1 + $0x68] sm:$0xff]
  %v421 = vld [vmem:[%s1 + $0x70] sm:$0xff]
  %v422 = vld [vmem:[%s1 + $0x78] sm:$0xff]
  %v423 = vpack.c.bf16 %v408, %v407
  %v424 = vpack.c.bf16 %v410, %v409
  %v425 = vpack.c.bf16 %v412, %v411
  %v426 = vpack.c.bf16 %v414, %v413
  %v427 = vpack.c.bf16 %v416, %v415
  %v428 = vpack.c.bf16 %v418, %v417
  %v429 = vpack.c.bf16 %v420, %v419
  %v430 = vpack.c.bf16 %v422, %v421
  %439 = vrot.lane.b32.xlu0 %v423, 108
  %v440 = vpop.permute.xlu0 %439
  %441 = vrot.lane.b32.xlu0 %v424, 108
  %v442 = vpop.permute.xlu0 %441
  %443 = vrot.lane.b32.xlu0 %v425, 108
  %v444 = vpop.permute.xlu0 %443
  %445 = vrot.lane.b32.xlu0 %v426, 108
  %v446 = vpop.permute.xlu0 %445
  %447 = vrot.lane.b32.xlu0 %v427, 108
  %v448 = vpop.permute.xlu0 %447
  %449 = vrot.lane.b32.xlu0 %v428, 108
  %v450 = vpop.permute.xlu0 %449
  %451 = vrot.lane.b32.xlu0 %v429, 108
  %v452 = vpop.permute.xlu0 %451
  %453 = vrot.lane.b32.xlu0 %v430, 108
  %v454 = vpop.permute.xlu0 %453
  %v455 = vrot.slane %v440, 4
  %v456 = vrot.slane %v442, 4
  %v457 = vrot.slane %v444, 4
  %v458 = vrot.slane %v446, 4
  %v459 = vrot.slane %v448, 4
  %v460 = vrot.slane %v450, 4
  %v461 = vrot.slane %v452, 4
  %v462 = vrot.slane %v454, 4
  %v463 = vsel %vm114, %v455, %v456
  %vm464 = vcmask 883712
  %v465 = vsel %vm464, %v440, %v463
  %v466 = vsel %vm114, %v456, %v457
  %v467 = vsel %vm464, %v442, %v466
  %v468 = vsel %vm114, %v457, %v458
  %v469 = vsel %vm464, %v444, %v468
  %v470 = vsel %vm464, %v446, %v458
  %v471 = vsel %vm114, %v459, %v460
  %v472 = vsel %vm464, %v448, %v471
  %v473 = vsel %vm114, %v460, %v461
  %v474 = vsel %vm464, %v450, %v473
  %v475 = vsel %vm114, %v461, %v462
  %v476 = vsel %vm464, %v452, %v475
  %v477 = vsel %vm464, %v454, %v462
  %486 = vst [vmem:[#allocation2 + $0x118] sm:$0xff] %v465
  %487 = vst [vmem:[#allocation2 + $0x120] sm:$0xff] %v467
  %488 = vst [vmem:[#allocation2 + $0x128] sm:$0xff] %v469
  %489 = vst [vmem:[#allocation2 + $0x130] sm:$0xf] %v470
  %490 = vst [vmem:[#allocation2 + $0x134] sm:$0xff] %v472
  %491 = vst [vmem:[#allocation2 + $0x13c] sm:$0xff] %v474
  %492 = vst [vmem:[#allocation2 + $0x144] sm:$0xff] %v476
  %493 = vst [vmem:[#allocation2 + $0x14c] sm:$0xf] %v477
  %v494 = vld [vmem:[%s1] sm:$0xff]
  %v495 = vld [vmem:[%s1 + $0x8] sm:$0xff]
  %v496 = vld [vmem:[%s1 + $0x10] sm:$0xff]
  %v497 = vld [vmem:[%s1 + $0x18] sm:$0xff]
  %v498 = vld [vmem:[%s1 + $0x20] sm:$0xff]
  %v499 = vld [vmem:[%s1 + $0x28] sm:$0xff]
  %v500 = vld [vmem:[%s1 + $0x30] sm:$0xff]
  %v501 = vld [vmem:[%s1 + $0x38] sm:$0xff]
  %v502 = vld [vmem:[%s1 + $0x40] sm:$0xff]
  %v503 = vld [vmem:[%s1 + $0x48] sm:$0xff]
  %v504 = vld [vmem:[%s1 + $0x50] sm:$0xff]
  %v505 = vld [vmem:[%s1 + $0x58] sm:$0xff]
  %v506 = vld [vmem:[%s1 + $0x60] sm:$0xff]
  %v507 = vld [vmem:[%s1 + $0x68] sm:$0xff]
  %v508 = vld [vmem:[%s1 + $0x70] sm:$0xff]
  %v509 = vld [vmem:[%s1 + $0x78] sm:$0xff]
  %v510 = vpack.c.bf16 %v495, %v494
  %v511 = vpack.c.bf16 %v497, %v496
  %v512 = vpack.c.bf16 %v499, %v498
  %v513 = vpack.c.bf16 %v501, %v500
  %v514 = vpack.c.bf16 %v503, %v502
  %v515 = vpack.c.bf16 %v505, %v504
  %v516 = vpack.c.bf16 %v507, %v506
  %v517 = vpack.c.bf16 %v509, %v508
  %526 = vrot.lane.b32.xlu0 %v510, 92
  %v527 = vpop.permute.xlu0 %526
  %528 = vrot.lane.b32.xlu0 %v511, 92
  %v529 = vpop.permute.xlu0 %528
  %530 = vrot.lane.b32.xlu0 %v512, 92
  %v531 = vpop.permute.xlu0 %530
  %532 = vrot.lane.b32.xlu0 %v513, 92
  %v533 = vpop.permute.xlu0 %532
  %534 = vrot.lane.b32.xlu0 %v514, 92
  %v535 = vpop.permute.xlu0 %534
  %536 = vrot.lane.b32.xlu0 %v515, 92
  %v537 = vpop.permute.xlu0 %536
  %538 = vrot.lane.b32.xlu0 %v516, 92
  %v539 = vpop.permute.xlu0 %538
  %540 = vrot.lane.b32.xlu0 %v517, 92
  %v541 = vpop.permute.xlu0 %540
  %v542 = vrot.slane %v527, 4
  %v543 = vrot.slane %v529, 4
  %v544 = vrot.slane %v531, 4
  %v545 = vrot.slane %v533, 4
  %v546 = vrot.slane %v535, 4
  %v547 = vrot.slane %v537, 4
  %v548 = vrot.slane %v539, 4
  %v549 = vrot.slane %v541, 4
  %v550 = vsel %vm114, %v542, %v543
  %vm551 = vcmask 752640
  %v552 = vsel %vm551, %v527, %v550
  %v553 = vsel %vm114, %v543, %v544
  %v554 = vsel %vm551, %v529, %v553
  %v555 = vsel %vm114, %v544, %v545
  %v556 = vsel %vm551, %v531, %v555
  %v557 = vsel %vm551, %v533, %v545
  %v558 = vsel %vm114, %v546, %v547
  %v559 = vsel %vm551, %v535, %v558
  %v560 = vsel %vm114, %v547, %v548
  %v561 = vsel %vm551, %v537, %v560
  %v562 = vsel %vm114, %v548, %v549
  %v563 = vsel %vm551, %v539, %v562
  %v564 = vsel %vm551, %v541, %v549
  %573 = vst [vmem:[#allocation2 + $0x150] sm:$0xff] %v552
  %574 = vst [vmem:[#allocation2 + $0x158] sm:$0xff] %v554
  %575 = vst [vmem:[#allocation2 + $0x160] sm:$0xff] %v556
  %576 = vst [vmem:[#allocation2 + $0x168] sm:$0xf] %v557
  %577 = vst [vmem:[#allocation2 + $0x16c] sm:$0xff] %v559
  %578 = vst [vmem:[#allocation2 + $0x174] sm:$0xff] %v561
  %579 = vst [vmem:[#allocation2 + $0x17c] sm:$0xff] %v563
  %580 = vst [vmem:[#allocation2 + $0x184] sm:$0xf] %v564
  %v581 = vld [vmem:[%s1] sm:$0xff]
  %v582 = vld [vmem:[%s1 + $0x8] sm:$0xff]
  %v583 = vld [vmem:[%s1 + $0x10] sm:$0xff]
  %v584 = vld [vmem:[%s1 + $0x18] sm:$0xff]
  %v585 = vld [vmem:[%s1 + $0x20] sm:$0xff]
  %v586 = vld [vmem:[%s1 + $0x28] sm:$0xff]
  %v587 = vld [vmem:[%s1 + $0x30] sm:$0xff]
  %v588 = vld [vmem:[%s1 + $0x38] sm:$0xff]
  %v589 = vld [vmem:[%s1 + $0x40] sm:$0xff]
  %v590 = vld [vmem:[%s1 + $0x48] sm:$0xff]
  %v591 = vld [vmem:[%s1 + $0x50] sm:$0xff]
  %v592 = vld [vmem:[%s1 + $0x58] sm:$0xff]
  %v593 = vld [vmem:[%s1 + $0x60] sm:$0xff]
  %v594 = vld [vmem:[%s1 + $0x68] sm:$0xff]
  %v595 = vld [vmem:[%s1 + $0x70] sm:$0xff]
  %v596 = vld [vmem:[%s1 + $0x78] sm:$0xff]
  %v597 = vpack.c.bf16 %v582, %v581
  %v598 = vpack.c.bf16 %v584, %v583
  %v599 = vpack.c.bf16 %v586, %v585
  %v600 = vpack.c.bf16 %v588, %v587
  %v601 = vpack.c.bf16 %v590, %v589
  %v602 = vpack.c.bf16 %v592, %v591
  %v603 = vpack.c.bf16 %v594, %v593
  %v604 = vpack.c.bf16 %v596, %v595
  %613 = vrot.lane.b32.xlu0 %v597, 91
  %v614 = vpop.permute.xlu0 %613
  %615 = vrot.lane.b32.xlu0 %v598, 91
  %v616 = vpop.permute.xlu0 %615
  %617 = vrot.lane.b32.xlu0 %v599, 91
  %v618 = vpop.permute.xlu0 %617
  %619 = vrot.lane.b32.xlu0 %v600, 91
  %v620 = vpop.permute.xlu0 %619
  %621 = vrot.lane.b32.xlu0 %v601, 91
  %v622 = vpop.permute.xlu0 %621
  %623 = vrot.lane.b32.xlu0 %v602, 91
  %v624 = vpop.permute.xlu0 %623
  %625 = vrot.lane.b32.xlu0 %v603, 91
  %v626 = vpop.permute.xlu0 %625
  %627 = vrot.lane.b32.xlu0 %v604, 91
  %v628 = vpop.permute.xlu0 %627
  %v629 = vrot.slane %v614, 4
  %v630 = vrot.slane %v616, 4
  %v631 = vrot.slane %v618, 4
  %v632 = vrot.slane %v620, 4
  %v633 = vrot.slane %v622, 4
  %v634 = vrot.slane %v624, 4
  %v635 = vrot.slane %v626, 4
  %v636 = vrot.slane %v628, 4
  %v637 = vsel %vm114, %v629, %v630
  %vm638 = vcmask 744448
  %v639 = vsel %vm638, %v614, %v637
  %v640 = vsel %vm114, %v630, %v631
  %v641 = vsel %vm638, %v616, %v640
  %v642 = vsel %vm114, %v631, %v632
  %v643 = vsel %vm638, %v618, %v642
  %v644 = vsel %vm638, %v620, %v632
  %v645 = vsel %vm114, %v633, %v634
  %v646 = vsel %vm638, %v622, %v645
  %v647 = vsel %vm114, %v634, %v635
  %v648 = vsel %vm638, %v624, %v647
  %v649 = vsel %vm114, %v635, %v636
  %v650 = vsel %vm638, %v626, %v649
  %v651 = vsel %vm638, %v628, %v636
  %660 = vst [vmem:[#allocation2 + $0x188] sm:$0xff] %v639
  %661 = vst [vmem:[#allocation2 + $0x190] sm:$0xff] %v641
  %662 = vst [vmem:[#allocation2 + $0x198] sm:$0xff] %v643
  %663 = vst [vmem:[#allocation2 + $0x1a0] sm:$0xf] %v644
  %664 = vst [vmem:[#allocation2 + $0x1a4] sm:$0xff] %v646
  %665 = vst [vmem:[#allocation2 + $0x1ac] sm:$0xff] %v648
  %666 = vst [vmem:[#allocation2 + $0x1b4] sm:$0xff] %v650
  %667 = vst [vmem:[#allocation2 + $0x1bc] sm:$0xf] %v651
  %v668 = vld [vmem:[%s1] sm:$0xff]
  %v669 = vld [vmem:[%s1 + $0x8] sm:$0xff]
  %v670 = vld [vmem:[%s1 + $0x10] sm:$0xff]
  %v671 = vld [vmem:[%s1 + $0x18] sm:$0xff]
  %v672 = vld [vmem:[%s1 + $0x20] sm:$0xff]
  %v673 = vld [vmem:[%s1 + $0x28] sm:$0xff]
  %v674 = vld [vmem:[%s1 + $0x30] sm:$0xff]
  %v675 = vld [vmem:[%s1 + $0x38] sm:$0xff]
  %v676 = vld [vmem:[%s1 + $0x40] sm:$0xff]
  %v677 = vld [vmem:[%s1 + $0x48] sm:$0xff]
  %v678 = vld [vmem:[%s1 + $0x50] sm:$0xff]
  %v679 = vld [vmem:[%s1 + $0x58] sm:$0xff]
  %v680 = vld [vmem:[%s1 + $0x60] sm:$0xff]
  %v681 = vld [vmem:[%s1 + $0x68] sm:$0xff]
  %v682 = vld [vmem:[%s1 + $0x70] sm:$0xff]
  %v683 = vld [vmem:[%s1 + $0x78] sm:$0xff]
  %v684 = vpack.c.bf16 %v669, %v668
  %v685 = vpack.c.bf16 %v671, %v670
  %v686 = vpack.c.bf16 %v673, %v672
  %v687 = vpack.c.bf16 %v675, %v674
  %v688 = vpack.c.bf16 %v677, %v676
  %v689 = vpack.c.bf16 %v679, %v678
  %v690 = vpack.c.bf16 %v681, %v680
  %v691 = vpack.c.bf16 %v683, %v682
  %700 = vrot.lane.b32.xlu0 %v684, 90
  %v701 = vpop.permute.xlu0 %700
  %702 = vrot.lane.b32.xlu0 %v685, 90
  %v703 = vpop.permute.xlu0 %702
  %704 = vrot.lane.b32.xlu0 %v686, 90
  %v705 = vpop.permute.xlu0 %704
  %706 = vrot.lane.b32.xlu0 %v687, 90
  %v707 = vpop.permute.xlu0 %706
  %708 = vrot.lane.b32.xlu0 %v688, 90
  %v709 = vpop.permute.xlu0 %708
  %710 = vrot.lane.b32.xlu0 %v689, 90
  %v711 = vpop.permute.xlu0 %710
  %712 = vrot.lane.b32.xlu0 %v690, 90
  %v713 = vpop.permute.xlu0 %712
  %714 = vrot.lane.b32.xlu0 %v691, 90
  %v715 = vpop.permute.xlu0 %714
  %v716 = vrot.slane %v701, 4
  %v717 = vrot.slane %v703, 4
  %v718 = vrot.slane %v705, 4
  %v719 = vrot.slane %v707, 4
  %v720 = vrot.slane %v709, 4
  %v721 = vrot.slane %v711, 4
  %v722 = vrot.slane %v713, 4
  %v723 = vrot.slane %v715, 4
  %v724 = vsel %vm114, %v716, %v717
  %vm725 = vcmask 736256
  %v726 = vsel %vm725, %v701, %v724
  %v727 = vsel %vm114, %v717, %v718
  %v728 = vsel %vm725, %v703, %v727
  %v729 = vsel %vm114, %v718, %v719
  %v730 = vsel %vm725, %v705, %v729
  %v731 = vsel %vm725, %v707, %v719
  %v732 = vsel %vm114, %v720, %v721
  %v733 = vsel %vm725, %v709, %v732
  %v734 = vsel %vm114, %v721, %v722
  %v735 = vsel %vm725, %v711, %v734
  %v736 = vsel %vm114, %v722, %v723
  %v737 = vsel %vm725, %v713, %v736
  %v738 = vsel %vm725, %v715, %v723
  %747 = vst [vmem:[#allocation2 + $0x1c0] sm:$0xff] %v726
  %748 = vst [vmem:[#allocation2 + $0x1c8] sm:$0xff] %v728
  %749 = vst [vmem:[#allocation2 + $0x1d0] sm:$0xff] %v730
  %750 = vst [vmem:[#allocation2 + $0x1d8] sm:$0xf] %v731
  %751 = vst [vmem:[#allocation2 + $0x1dc] sm:$0xff] %v733
  %752 = vst [vmem:[#allocation2 + $0x1e4] sm:$0xff] %v735
  %753 = vst [vmem:[#allocation2 + $0x1ec] sm:$0xff] %v737
  %754 = vst [vmem:[#allocation2 + $0x1f4] sm:$0xf] %v738
  %v755 = vld [vmem:[%s3] sm:$0xff]
  %v756 = vld [vmem:[%s3 + $0x8] sm:$0xff]
  %v757 = vld [vmem:[%s3 + $0x10] sm:$0xff]
  %v758 = vld [vmem:[%s3 + $0x18] sm:$0xff]
  %v759 = vld [vmem:[#allocation2] sm:$0xff]
  %v760 = vld [vmem:[#allocation2 + $0x8] sm:$0xff]
  %v761 = vld [vmem:[#allocation2 + $0x10] sm:$0xff]
  %v762 = vld [vmem:[#allocation2 + $0x18] sm:$0xf]
  %v763 = vld [vmem:[#allocation2 + $0x1c] sm:$0xff]
  %v764 = vld [vmem:[#allocation2 + $0x24] sm:$0xff]
  %v765 = vld [vmem:[#allocation2 + $0x2c] sm:$0xff]
  %v766 = vld [vmem:[#allocation2 + $0x34] sm:$0xf]
  %v767 = vld [vmem:[#allocation2 + $0x38] sm:$0xff]
  %v768 = vld [vmem:[#allocation2 + $0x40] sm:$0xff]
  %v769 = vld [vmem:[#allocation2 + $0x48] sm:$0xff]
  %v770 = vld [vmem:[#allocation2 + $0x50] sm:$0xf]
  %v771 = vld [vmem:[#allocation2 + $0x54] sm:$0xff]
  %v772 = vld [vmem:[#allocation2 + $0x5c] sm:$0xff]
  %v773 = vld [vmem:[#allocation2 + $0x64] sm:$0xff]
  %v774 = vld [vmem:[#allocation2 + $0x6c] sm:$0xf]
  %v775 = vld [vmem:[#allocation2 + $0x70] sm:$0xff]
  %v776 = vld [vmem:[#allocation2 + $0x78] sm:$0xff]
  %v777 = vld [vmem:[#allocation2 + $0x80] sm:$0xff]
  %v778 = vld [vmem:[#allocation2 + $0x88] sm:$0xf]
  %v779 = vld [vmem:[#allocation2 + $0x8c] sm:$0xff]
  %v780 = vld [vmem:[#allocation2 + $0x94] sm:$0xff]
  %v781 = vld [vmem:[#allocation2 + $0x9c] sm:$0xff]
  %v782 = vld [vmem:[#allocation2 + $0xa4] sm:$0xf]
  %v783 = vld [vmem:[#allocation2 + $0xa8] sm:$0xff]
  %v784 = vld [vmem:[#allocation2 + $0xb0] sm:$0xff]
  %v785 = vld [vmem:[#allocation2 + $0xb8] sm:$0xff]
  %v786 = vld [vmem:[#allocation2 + $0xc0] sm:$0xf]
  %v787 = vld [vmem:[#allocation2 + $0xc4] sm:$0xff]
  %v788 = vld [vmem:[#allocation2 + $0xcc] sm:$0xff]
  %v789 = vld [vmem:[#allocation2 + $0xd4] sm:$0xff]
  %v790 = vld [vmem:[#allocation2 + $0xdc] sm:$0xf]
  %v791 = vld [vmem:[#allocation2 + $0xe0] sm:$0xff]
  %v792 = vld [vmem:[#allocation2 + $0xe8] sm:$0xff]
  %v793 = vld [vmem:[#allocation2 + $0xf0] sm:$0xff]
  %v794 = vld [vmem:[#allocation2 + $0xf8] sm:$0xf]
  %v795 = vld [vmem:[#allocation2 + $0xfc] sm:$0xff]
  %v796 = vld [vmem:[#allocation2 + $0x104] sm:$0xff]
  %v797 = vld [vmem:[#allocation2 + $0x10c] sm:$0xff]
  %v798 = vld [vmem:[#allocation2 + $0x114] sm:$0xf]
  %v799 = vld [vmem:[#allocation2 + $0x118] sm:$0xff]
  %v800 = vld [vmem:[#allocation2 + $0x120] sm:$0xff]
  %v801 = vld [vmem:[#allocation2 + $0x128] sm:$0xff]
  %v802 = vld [vmem:[#allocation2 + $0x130] sm:$0xf]
  %v803 = vld [vmem:[#allocation2 + $0x134] sm:$0xff]
  %v804 = vld [vmem:[#allocation2 + $0x13c] sm:$0xff]
  %v805 = vld [vmem:[#allocation2 + $0x144] sm:$0xff]
  %v806 = vld [vmem:[#allocation2 + $0x14c] sm:$0xf]
  %v807 = vld [vmem:[#allocation2 + $0x150] sm:$0xff]
  %v808 = vld [vmem:[#allocation2 + $0x158] sm:$0xff]
  %v809 = vld [vmem:[#allocation2 + $0x160] sm:$0xff]
  %v810 = vld [vmem:[#allocation2 + $0x168] sm:$0xf]
  %v811 = vld [vmem:[#allocation2 + $0x16c] sm:$0xff]
  %v812 = vld [vmem:[#allocation2 + $0x174] sm:$0xff]
  %v813 = vld [vmem:[#allocation2 + $0x17c] sm:$0xff]
  %v814 = vld [vmem:[#allocation2 + $0x184] sm:$0xf]
  %v815 = vld [vmem:[#allocation2 + $0x188] sm:$0xff]
  %v816 = vld [vmem:[#allocation2 + $0x190] sm:$0xff]
  %v817 = vld [vmem:[#allocation2 + $0x198] sm:$0xff]
  %v818 = vld [vmem:[#allocation2 + $0x1a0] sm:$0xf]
  %v819 = vld [vmem:[#allocation2 + $0x1a4] sm:$0xff]
  %v820 = vld [vmem:[#allocation2 + $0x1ac] sm:$0xff]
  %v821 = vld [vmem:[#allocation2 + $0x1b4] sm:$0xff]
  %v822 = vld [vmem:[#allocation2 + $0x1bc] sm:$0xf]
  %v823 = vld [vmem:[#allocation2 + $0x1c0] sm:$0xff]
  %v824 = vld [vmem:[#allocation2 + $0x1c8] sm:$0xff]
  %v825 = vld [vmem:[#allocation2 + $0x1d0] sm:$0xff]
  %v826 = vld [vmem:[#allocation2 + $0x1d8] sm:$0xf]
  %v827 = vld [vmem:[#allocation2 + $0x1dc] sm:$0xff]
  %v828 = vld [vmem:[#allocation2 + $0x1e4] sm:$0xff]
  %v829 = vld [vmem:[#allocation2 + $0x1ec] sm:$0xff]
  %v830 = vld [vmem:[#allocation2 + $0x1f4] sm:$0xf]
  %v831 = vld [vmem:[%s4] sm:$0xff]
  %v832 = vld [vmem:[%s4 + $0x8] sm:$0xff]
  %v833 = vld [vmem:[%s4 + $0x10] sm:$0xff]
  %v834 = vld [vmem:[%s4 + $0x18] sm:$0xff]
  %836 = vset.pattern.permute.xlu0 0
  %837 = vperm.xlu0 %836, %v831
  %v838 = vpop.permute.xlu0 %837
  %841 = vset.pattern.permute.xlu0 0
  %842 = vperm.xlu0 %841, %v832
  %v843 = vpop.permute.xlu0 %842
  %846 = vset.pattern.permute.xlu0 0
  %847 = vperm.xlu0 %846, %v833
  %v848 = vpop.permute.xlu0 %847
  %851 = vset.pattern.permute.xlu0 0
  %852 = vperm.xlu0 %851, %v834
  %v853 = vpop.permute.xlu0 %852
  %v859 = vunpack.c.l.b16 %v755
  %v860 = vunpack.c.h.b16 %v755
  %v861 = vunpack.c.l.b16 %v756
  %v862 = vunpack.c.h.b16 %v756
  %v863 = vunpack.c.l.b16 %v757
  %v864 = vunpack.c.h.b16 %v757
  %v865 = vunpack.c.l.b16 %v758
  %v866 = vunpack.c.h.b16 %v758
  %v867 = vpack.c.b16 %v861, %v859
  %v868 = vpack.c.b16 %v862, %v860
  %v869 = vpack.c.b16 %v865, %v863
  %v870 = vpack.c.b16 %v866, %v864
  %v945 = vunpack.c.l.b16 %v759
  %v946 = vunpack.c.h.b16 %v759
  %v947 = vunpack.c.l.b16 %v760
  %v948 = vunpack.c.h.b16 %v760
  %v949 = vunpack.c.l.b16 %v761
  %v950 = vunpack.c.h.b16 %v761
  %v951 = vunpack.c.l.b16 %v762
  %v952 = vunpack.c.l.b16 %v763
  %v953 = vunpack.c.h.b16 %v763
  %v954 = vunpack.c.l.b16 %v764
  %v955 = vunpack.c.h.b16 %v764
  %v956 = vunpack.c.l.b16 %v765
  %v957 = vunpack.c.h.b16 %v765
  %v958 = vunpack.c.l.b16 %v766
  %v959 = vunpack.c.l.b16 %v767
  %v960 = vunpack.c.h.b16 %v767
  %v961 = vunpack.c.l.b16 %v768
  %v962 = vunpack.c.h.b16 %v768
  %v963 = vunpack.c.l.b16 %v769
  %v964 = vunpack.c.h.b16 %v769
  %v965 = vunpack.c.l.b16 %v770
  %v966 = vunpack.c.l.b16 %v771
  %v967 = vunpack.c.h.b16 %v771
  %v968 = vunpack.c.l.b16 %v772
  %v969 = vunpack.c.h.b16 %v772
  %v970 = vunpack.c.l.b16 %v773
  %v971 = vunpack.c.h.b16 %v773
  %v972 = vunpack.c.l.b16 %v774
  %v973 = vunpack.c.l.b16 %v775
  %v974 = vunpack.c.h.b16 %v775
  %v975 = vunpack.c.l.b16 %v776
  %v976 = vunpack.c.h.b16 %v776
  %v977 = vunpack.c.l.b16 %v777
  %v978 = vunpack.c.h.b16 %v777
  %v979 = vunpack.c.l.b16 %v778
  %v980 = vunpack.c.l.b16 %v779
  %v981 = vunpack.c.h.b16 %v779
  %v982 = vunpack.c.l.b16 %v780
  %v983 = vunpack.c.h.b16 %v780
  %v984 = vunpack.c.l.b16 %v781
  %v985 = vunpack.c.h.b16 %v781
  %v986 = vunpack.c.l.b16 %v782
  %v987 = vunpack.c.l.b16 %v783
  %v988 = vunpack.c.h.b16 %v783
  %v989 = vunpack.c.l.b16 %v784
  %v990 = vunpack.c.h.b16 %v784
  %v991 = vunpack.c.l.b16 %v785
  %v992 = vunpack.c.h.b16 %v785
  %v993 = vunpack.c.l.b16 %v786
  %v994 = vunpack.c.l.b16 %v787
  %v995 = vunpack.c.h.b16 %v787
  %v996 = vunpack.c.l.b16 %v788
  %v997 = vunpack.c.h.b16 %v788
  %v998 = vunpack.c.l.b16 %v789
  %v999 = vunpack.c.h.b16 %v789
  %v1000 = vunpack.c.l.b16 %v790
  %v1001 = vunpack.c.l.b16 %v791
  %v1002 = vunpack.c.h.b16 %v791
  %v1003 = vunpack.c.l.b16 %v792
  %v1004 = vunpack.c.h.b16 %v792
  %v1005 = vunpack.c.l.b16 %v793
  %v1006 = vunpack.c.h.b16 %v793
  %v1007 = vunpack.c.l.b16 %v794
  %v1008 = vunpack.c.l.b16 %v795
  %v1009 = vunpack.c.h.b16 %v795
  %v1010 = vunpack.c.l.b16 %v796
  %v1011 = vunpack.c.h.b16 %v796
  %v1012 = vunpack.c.l.b16 %v797
  %v1013 = vunpack.c.h.b16 %v797
  %v1014 = vunpack.c.l.b16 %v798
  %v1015 = vunpack.c.l.b16 %v799
  %v1016 = vunpack.c.h.b16 %v799
  %v1017 = vunpack.c.l.b16 %v800
  %v1018 = vunpack.c.h.b16 %v800
  %v1019 = vunpack.c.l.b16 %v801
  %v1020 = vunpack.c.h.b16 %v801
  %v1021 = vunpack.c.l.b16 %v802
  %v1022 = vunpack.c.l.b16 %v803
  %v1023 = vunpack.c.h.b16 %v803
  %v1024 = vunpack.c.l.b16 %v804
  %v1025 = vunpack.c.h.b16 %v804
  %v1026 = vunpack.c.l.b16 %v805
  %v1027 = vunpack.c.h.b16 %v805
  %v1028 = vunpack.c.l.b16 %v806
  %v1029 = vunpack.c.l.b16 %v807
  %v1030 = vunpack.c.h.b16 %v807
  %v1031 = vunpack.c.l.b16 %v808
  %v1032 = vunpack.c.h.b16 %v808
  %v1033 = vunpack.c.l.b16 %v809
  %v1034 = vunpack.c.h.b16 %v809
  %v1035 = vunpack.c.l.b16 %v810
  %v1036 = vunpack.c.l.b16 %v811
  %v1037 = vunpack.c.h.b16 %v811
  %v1038 = vunpack.c.l.b16 %v812
  %v1039 = vunpack.c.h.b16 %v812
  %v1040 = vunpack.c.l.b16 %v813
  %v1041 = vunpack.c.h.b16 %v813
  %v1042 = vunpack.c.l.b16 %v814
  %v1043 = vunpack.c.l.b16 %v815
  %v1044 = vunpack.c.h.b16 %v815
  %v1045 = vunpack.c.l.b16 %v816
  %v1046 = vunpack.c.h.b16 %v816
  %v1047 = vunpack.c.l.b16 %v817
  %v1048 = vunpack.c.h.b16 %v817
  %v1049 = vunpack.c.l.b16 %v818
  %v1050 = vunpack.c.l.b16 %v819
  %v1051 = vunpack.c.h.b16 %v819
  %v1052 = vunpack.c.l.b16 %v820
  %v1053 = vunpack.c.h.b16 %v820
  %v1054 = vunpack.c.l.b16 %v821
  %v1055 = vunpack.c.h.b16 %v821
  %v1056 = vunpack.c.l.b16 %v822
  %v1057 = vunpack.c.l.b16 %v823
  %v1058 = vunpack.c.h.b16 %v823
  %v1059 = vunpack.c.l.b16 %v824
  %v1060 = vunpack.c.h.b16 %v824
  %v1061 = vunpack.c.l.b16 %v825
  %v1062 = vunpack.c.h.b16 %v825
  %v1063 = vunpack.c.l.b16 %v826
  %v1064 = vunpack.c.l.b16 %v827
  %v1065 = vunpack.c.h.b16 %v827
  %v1066 = vunpack.c.l.b16 %v828
  %v1067 = vunpack.c.h.b16 %v828
  %v1068 = vunpack.c.l.b16 %v829
  %v1069 = vunpack.c.h.b16 %v829
  %v1070 = vunpack.c.l.b16 %v830
  %v1071 = vpack.c.b16 %v952, %v945
  %v1072 = vpack.c.b16 %v953, %v946
  %v1073 = vpack.c.b16 %v954, %v947
  %v1074 = vpack.c.b16 %v955, %v948
  %v1075 = vpack.c.b16 %v956, %v949
  %v1076 = vpack.c.b16 %v957, %v950
  %v1077 = vpack.c.b16 %v958, %v951
  %v1078 = vpack.c.b16 %v966, %v959
  %v1079 = vpack.c.b16 %v967, %v960
  %v1080 = vpack.c.b16 %v968, %v961
  %v1081 = vpack.c.b16 %v969, %v962
  %v1082 = vpack.c.b16 %v970, %v963
  %v1083 = vpack.c.b16 %v971, %v964
  %v1084 = vpack.c.b16 %v972, %v965
  %v1085 = vpack.c.b16 %v980, %v973
  %v1086 = vpack.c.b16 %v981, %v974
  %v1087 = vpack.c.b16 %v982, %v975
  %v1088 = vpack.c.b16 %v983, %v976
  %v1089 = vpack.c.b16 %v984, %v977
  %v1090 = vpack.c.b16 %v985, %v978
  %v1091 = vpack.c.b16 %v986, %v979
  %v1092 = vpack.c.b16 %v994, %v987
  %v1093 = vpack.c.b16 %v995, %v988
  %v1094 = vpack.c.b16 %v996, %v989
  %v1095 = vpack.c.b16 %v997, %v990
  %v1096 = vpack.c.b16 %v998, %v991
  %v1097 = vpack.c.b16 %v999, %v992
  %v1098 = vpack.c.b16 %v1000, %v993
  %v1099 = vpack.c.b16 %v1008, %v1001
  %v1100 = vpack.c.b16 %v1009, %v1002
  %v1101 = vpack.c.b16 %v1010, %v1003
  %v1102 = vpack.c.b16 %v1011, %v1004
  %v1103 = vpack.c.b16 %v1012, %v1005
  %v1104 = vpack.c.b16 %v1013, %v1006
  %v1105 = vpack.c.b16 %v1014, %v1007
  %v1106 = vpack.c.b16 %v1022, %v1015
  %v1107 = vpack.c.b16 %v1023, %v1016
  %v1108 = vpack.c.b16 %v1024, %v1017
  %v1109 = vpack.c.b16 %v1025, %v1018
  %v1110 = vpack.c.b16 %v1026, %v1019
  %v1111 = vpack.c.b16 %v1027, %v1020
  %v1112 = vpack.c.b16 %v1028, %v1021
  %v1113 = vpack.c.b16 %v1036, %v1029
  %v1114 = vpack.c.b16 %v1037, %v1030
  %v1115 = vpack.c.b16 %v1038, %v1031
  %v1116 = vpack.c.b16 %v1039, %v1032
  %v1117 = vpack.c.b16 %v1040, %v1033
  %v1118 = vpack.c.b16 %v1041, %v1034
  %v1119 = vpack.c.b16 %v1042, %v1035
  %v1120 = vpack.c.b16 %v1050, %v1043
  %v1121 = vpack.c.b16 %v1051, %v1044
  %v1122 = vpack.c.b16 %v1052, %v1045
  %v1123 = vpack.c.b16 %v1053, %v1046
  %v1124 = vpack.c.b16 %v1054, %v1047
  %v1125 = vpack.c.b16 %v1055, %v1048
  %v1126 = vpack.c.b16 %v1056, %v1049
  %v1127 = vpack.c.b16 %v1064, %v1057
  %v1128 = vpack.c.b16 %v1065, %v1058
  %v1129 = vpack.c.b16 %v1066, %v1059
  %v1130 = vpack.c.b16 %v1067, %v1060
  %v1131 = vpack.c.b16 %v1068, %v1061
  %v1132 = vpack.c.b16 %v1069, %v1062
  %v1133 = vpack.c.b16 %v1070, %v1063
  %vm1197 = vcmask 130048
  %v1199 = vsel %vm1197, %v868, 0
  %v1202 = vsel %vm1197, %v870, 0
  %1204 = vmatpush.bf16.msra.mxu0 %v1120
  %1205 = vmatpush.bf16.msra.mxu0 %v1113
  %1206 = vmatpush.bf16.msra.mxu0 %v1106
  %1207 = vmatpush.bf16.msra.mxu0 %v1099
  %1208 = vmatpush.bf16.msra.mxu0 %v1092
  %1209 = vmatpush.bf16.msra.mxu0 %v1085
  %1210 = vmatpush.bf16.msra.mxu0 %v1078
  %1211 = vmatpush.bf16.msra.mxu0 %v1071
  %1212 = vmatmul.bf16.gmra.mxu0 %v867
  %v1213 = vpop.f32.mrf.mxu0
  %v1214 = vadd.f32 %v838, %v1213
  %v1215 = vpop.f32.mrf.mxu0
  %v1216 = vadd.f32 %v843, %v1215
  %1217 = vmatmul.bf16.gmra.mxu0 %v869
  %v1218 = vpop.f32.mrf.mxu0
  %v1219 = vadd.f32 %v848, %v1218
  %v1220 = vpop.f32.mrf.mxu0
  %v1221 = vadd.f32 %v853, %v1220
  %1222 = vdwg.mxu0
  %1223 = vmatpush.bf16.msra.mxu0 0
  %1224 = vmatpush.bf16.msra.mxu0 0
  %1225 = vmatpush.bf16.msra.mxu0 0
  %1226 = vmatpush.bf16.msra.mxu0 0
  %1227 = vmatpush.bf16.msra.mxu0 0
  %1228 = vmatpush.bf16.msra.mxu0 0
  %1229 = vmatpush.bf16.msra.mxu0 0
  %1230 = vmatpush.bf16.msra.mxu0 %v1127
  %1231 = vmatmul.bf16.gmra.mxu0 %v1199
  %v1232 = vpop.f32.mrf.mxu0
  %v1233 = vadd.f32 %v1214, %v1232
  %v1234 = vpop.f32.mrf.mxu0
  %v1235 = vadd.f32 %v1216, %v1234
  %1236 = vmatmul.bf16.gmra.mxu0 %v1202
  %v1237 = vpop.f32.mrf.mxu0
  %v1238 = vadd.f32 %v1219, %v1237
  %v1239 = vpop.f32.mrf.mxu0
  %v1240 = vadd.f32 %v1221, %v1239
  %1241 = vdwg.mxu0
  %1242 = vmatpush.bf16.msra.mxu0 %v1121
  %1243 = vmatpush.bf16.msra.mxu0 %v1114
  %1244 = vmatpush.bf16.msra.mxu0 %v1107
  %1245 = vmatpush.bf16.msra.mxu0 %v1100
  %1246 = vmatpush.bf16.msra.mxu0 %v1093
  %1247 = vmatpush.bf16.msra.mxu0 %v1086
  %1248 = vmatpush.bf16.msra.mxu0 %v1079
  %1249 = vmatpush.bf16.msra.mxu0 %v1072
  %1250 = vmatmul.bf16.gmra.mxu0 %v867
  %v1251 = vpop.f32.mrf.mxu0
  %v1252 = vadd.f32 %v838, %v1251
  %v1253 = vpop.f32.mrf.mxu0
  %v1254 = vadd.f32 %v843, %v1253
  %1255 = vmatmul.bf16.gmra.mxu0 %v869
  %v1256 = vpop.f32.mrf.mxu0
  %v1257 = vadd.f32 %v848, %v1256
  %v1258 = vpop.f32.mrf.mxu0
  %v1259 = vadd.f32 %v853, %v1258
  %1260 = vdwg.mxu0
  %1261 = vmatpush.bf16.msra.mxu0 0
  %1262 = vmatpush.bf16.msra.mxu0 0
  %1263 = vmatpush.bf16.msra.mxu0 0
  %1264 = vmatpush.bf16.msra.mxu0 0
  %1265 = vmatpush.bf16.msra.mxu0 0
  %1266 = vmatpush.bf16.msra.mxu0 0
  %1267 = vmatpush.bf16.msra.mxu0 0
  %1268 = vmatpush.bf16.msra.mxu0 %v1128
  %1269 = vmatmul.bf16.gmra.mxu0 %v1199
  %v1270 = vpop.f32.mrf.mxu0
  %v1271 = vadd.f32 %v1252, %v1270
  %v1272 = vpop.f32.mrf.mxu0
  %v1273 = vadd.f32 %v1254, %v1272
  %1274 = vmatmul.bf16.gmra.mxu0 %v1202
  %v1275 = vpop.f32.mrf.mxu0
  %v1276 = vadd.f32 %v1257, %v1275
  %v1277 = vpop.f32.mrf.mxu0
  %v1278 = vadd.f32 %v1259, %v1277
  %1279 = vdwg.mxu0
  %1280 = vmatpush.bf16.msra.mxu0 %v1122
  %1281 = vmatpush.bf16.msra.mxu0 %v1115
  %1282 = vmatpush.bf16.msra.mxu0 %v1108
  %1283 = vmatpush.bf16.msra.mxu0 %v1101
  %1284 = vmatpush.bf16.msra.mxu0 %v1094
  %1285 = vmatpush.bf16.msra.mxu0 %v1087
  %1286 = vmatpush.bf16.msra.mxu0 %v1080
  %1287 = vmatpush.bf16.msra.mxu0 %v1073
  %1288 = vmatmul.bf16.gmra.mxu0 %v867
  %v1289 = vpop.f32.mrf.mxu0
  %v1290 = vadd.f32 %v838, %v1289
  %v1291 = vpop.f32.mrf.mxu0
  %v1292 = vadd.f32 %v843, %v1291
  %1293 = vmatmul.bf16.gmra.mxu0 %v869
  %v1294 = vpop.f32.mrf.mxu0
  %v1295 = vadd.f32 %v848, %v1294
  %v1296 = vpop.f32.mrf.mxu0
  %v1297 = vadd.f32 %v853, %v1296
  %1298 = vdwg.mxu0
  %1299 = vmatpush.bf16.msra.mxu0 0
  %1300 = vmatpush.bf16.msra.mxu0 0
  %1301 = vmatpush.bf16.msra.mxu0 0
  %1302 = vmatpush.bf16.msra.mxu0 0
  %1303 = vmatpush.bf16.msra.mxu0 0
  %1304 = vmatpush.bf16.msra.mxu0 0
  %1305 = vmatpush.bf16.msra.mxu0 0
  %1306 = vmatpush.bf16.msra.mxu0 %v1129
  %1307 = vmatmul.bf16.gmra.mxu0 %v1199
  %v1308 = vpop.f32.mrf.mxu0
  %v1309 = vadd.f32 %v1290, %v1308
  %v1310 = vpop.f32.mrf.mxu0
  %v1311 = vadd.f32 %v1292, %v1310
  %1312 = vmatmul.bf16.gmra.mxu0 %v1202
  %v1313 = vpop.f32.mrf.mxu0
  %v1314 = vadd.f32 %v1295, %v1313
  %v1315 = vpop.f32.mrf.mxu0
  %v1316 = vadd.f32 %v1297, %v1315
  %1317 = vdwg.mxu0
  %1318 = vmatpush.bf16.msra.mxu0 %v1123
  %1319 = vmatpush.bf16.msra.mxu0 %v1116
  %1320 = vmatpush.bf16.msra.mxu0 %v1109
  %1321 = vmatpush.bf16.msra.mxu0 %v1102
  %1322 = vmatpush.bf16.msra.mxu0 %v1095
  %1323 = vmatpush.bf16.msra.mxu0 %v1088
  %1324 = vmatpush.bf16.msra.mxu0 %v1081
  %1325 = vmatpush.bf16.msra.mxu0 %v1074
  %1326 = vmatmul.bf16.gmra.mxu0 %v867
  %v1327 = vpop.f32.mrf.mxu0
  %v1328 = vadd.f32 %v838, %v1327
  %v1329 = vpop.f32.mrf.mxu0
  %v1330 = vadd.f32 %v843, %v1329
  %1331 = vmatmul.bf16.gmra.mxu0 %v869
  %v1332 = vpop.f32.mrf.mxu0
  %v1333 = vadd.f32 %v848, %v1332
  %v1334 = vpop.f32.mrf.mxu0
  %v1335 = vadd.f32 %v853, %v1334
  %1336 = vdwg.mxu0
  %1337 = vmatpush.bf16.msra.mxu0 0
  %1338 = vmatpush.bf16.msra.mxu0 0
  %1339 = vmatpush.bf16.msra.mxu0 0
  %1340 = vmatpush.bf16.msra.mxu0 0
  %1341 = vmatpush.bf16.msra.mxu0 0
  %1342 = vmatpush.bf16.msra.mxu0 0
  %1343 = vmatpush.bf16.msra.mxu0 0
  %1344 = vmatpush.bf16.msra.mxu0 %v1130
  %1345 = vmatmul.bf16.gmra.mxu0 %v1199
  %v1346 = vpop.f32.mrf.mxu0
  %v1347 = vadd.f32 %v1328, %v1346
  %v1348 = vpop.f32.mrf.mxu0
  %v1349 = vadd.f32 %v1330, %v1348
  %1350 = vmatmul.bf16.gmra.mxu0 %v1202
  %v1351 = vpop.f32.mrf.mxu0
  %v1352 = vadd.f32 %v1333, %v1351
  %v1353 = vpop.f32.mrf.mxu0
  %v1354 = vadd.f32 %v1335, %v1353
  %1355 = vdwg.mxu0
  %1356 = vmatpush.bf16.msra.mxu0 %v1124
  %1357 = vmatpush.bf16.msra.mxu0 %v1117
  %1358 = vmatpush.bf16.msra.mxu0 %v1110
  %1359 = vmatpush.bf16.msra.mxu0 %v1103
  %1360 = vmatpush.bf16.msra.mxu0 %v1096
  %1361 = vmatpush.bf16.msra.mxu0 %v1089
  %1362 = vmatpush.bf16.msra.mxu0 %v1082
  %1363 = vmatpush.bf16.msra.mxu0 %v1075
  %1364 = vmatmul.bf16.gmra.mxu0 %v867
  %v1365 = vpop.f32.mrf.mxu0
  %v1366 = vadd.f32 %v838, %v1365
  %v1367 = vpop.f32.mrf.mxu0
  %v1368 = vadd.f32 %v843, %v1367
  %1369 = vmatmul.bf16.gmra.mxu0 %v869
  %v1370 = vpop.f32.mrf.mxu0
  %v1371 = vadd.f32 %v848, %v1370
  %v1372 = vpop.f32.mrf.mxu0
  %v1373 = vadd.f32 %v853, %v1372
  %1374 = vdwg.mxu0
  %1375 = vmatpush.bf16.msra.mxu0 0
  %1376 = vmatpush.bf16.msra.mxu0 0
  %1377 = vmatpush.bf16.msra.mxu0 0
  %1378 = vmatpush.bf16.msra.mxu0 0
  %1379 = vmatpush.bf16.msra.mxu0 0
  %1380 = vmatpush.bf16.msra.mxu0 0
  %1381 = vmatpush.bf16.msra.mxu0 0
  %1382 = vmatpush.bf16.msra.mxu0 %v1131
  %1383 = vmatmul.bf16.gmra.mxu0 %v1199
  %v1384 = vpop.f32.mrf.mxu0
  %v1385 = vadd.f32 %v1366, %v1384
  %v1386 = vpop.f32.mrf.mxu0
  %v1387 = vadd.f32 %v1368, %v1386
  %1388 = vmatmul.bf16.gmra.mxu0 %v1202
  %v1389 = vpop.f32.mrf.mxu0
  %v1390 = vadd.f32 %v1371, %v1389
  %v1391 = vpop.f32.mrf.mxu0
  %v1392 = vadd.f32 %v1373, %v1391
  %1393 = vdwg.mxu0
  %1394 = vmatpush.bf16.msra.mxu0 %v1125
  %1395 = vmatpush.bf16.msra.mxu0 %v1118
  %1396 = vmatpush.bf16.msra.mxu0 %v1111
  %1397 = vmatpush.bf16.msra.mxu0 %v1104
  %1398 = vmatpush.bf16.msra.mxu0 %v1097
  %1399 = vmatpush.bf16.msra.mxu0 %v1090
  %1400 = vmatpush.bf16.msra.mxu0 %v1083
  %1401 = vmatpush.bf16.msra.mxu0 %v1076
  %1402 = vmatmul.bf16.gmra.mxu0 %v867
  %v1403 = vpop.f32.mrf.mxu0
  %v1404 = vadd.f32 %v838, %v1403
  %v1405 = vpop.f32.mrf.mxu0
  %v1406 = vadd.f32 %v843, %v1405
  %1407 = vmatmul.bf16.gmra.mxu0 %v869
  %v1408 = vpop.f32.mrf.mxu0
  %v1409 = vadd.f32 %v848, %v1408
  %v1410 = vpop.f32.mrf.mxu0
  %v1411 = vadd.f32 %v853, %v1410
  %1412 = vdwg.mxu0
  %1413 = vmatpush.bf16.msra.mxu0 0
  %1414 = vmatpush.bf16.msra.mxu0 0
  %1415 = vmatpush.bf16.msra.mxu0 0
  %1416 = vmatpush.bf16.msra.mxu0 0
  %1417 = vmatpush.bf16.msra.mxu0 0
  %1418 = vmatpush.bf16.msra.mxu0 0
  %1419 = vmatpush.bf16.msra.mxu0 0
  %1420 = vmatpush.bf16.msra.mxu0 %v1132
  %1421 = vmatmul.bf16.gmra.mxu0 %v1199
  %v1422 = vpop.f32.mrf.mxu0
  %v1423 = vadd.f32 %v1404, %v1422
  %v1424 = vpop.f32.mrf.mxu0
  %v1425 = vadd.f32 %v1406, %v1424
  %1426 = vmatmul.bf16.gmra.mxu0 %v1202
  %v1427 = vpop.f32.mrf.mxu0
  %v1428 = vadd.f32 %v1409, %v1427
  %v1429 = vpop.f32.mrf.mxu0
  %v1430 = vadd.f32 %v1411, %v1429
  %1431 = vdwg.mxu0
  %1432 = vmatpush.bf16.msra.mxu0 %v1126
  %1433 = vmatpush.bf16.msra.mxu0 %v1119
  %1434 = vmatpush.bf16.msra.mxu0 %v1112
  %1435 = vmatpush.bf16.msra.mxu0 %v1105
  %1436 = vmatpush.bf16.msra.mxu0 %v1098
  %1437 = vmatpush.bf16.msra.mxu0 %v1091
  %1438 = vmatpush.bf16.msra.mxu0 %v1084
  %1439 = vmatpush.bf16.msra.mxu0 %v1077
  %1440 = vmatmul.bf16.gmra.mxu0 %v867
  %v1441 = vpop.f32.mrf.mxu0
  %v1442 = vadd.f32 %v838, %v1441
  %v1443 = vpop.f32.mrf.mxu0
  %v1444 = vadd.f32 %v843, %v1443
  %1445 = vmatmul.bf16.gmra.mxu0 %v869
  %v1446 = vpop.f32.mrf.mxu0
  %v1447 = vadd.f32 %v848, %v1446
  %v1448 = vpop.f32.mrf.mxu0
  %v1449 = vadd.f32 %v853, %v1448
  %1450 = vdwg.mxu0
  %1451 = vmatpush.bf16.msra.mxu0 0
  %1452 = vmatpush.bf16.msra.mxu0 0
  %1453 = vmatpush.bf16.msra.mxu0 0
  %1454 = vmatpush.bf16.msra.mxu0 0
  %1455 = vmatpush.bf16.msra.mxu0 0
  %1456 = vmatpush.bf16.msra.mxu0 0
  %1457 = vmatpush.bf16.msra.mxu0 0
  %1458 = vmatpush.bf16.msra.mxu0 %v1133
  %1459 = vmatmul.bf16.gmra.mxu0 %v1199
  %v1460 = vpop.f32.mrf.mxu0
  %v1461 = vadd.f32 %v1442, %v1460
  %v1462 = vpop.f32.mrf.mxu0
  %v1463 = vadd.f32 %v1444, %v1462
  %1464 = vmatmul.bf16.gmra.mxu0 %v1202
  %v1465 = vpop.f32.mrf.mxu0
  %v1466 = vadd.f32 %v1447, %v1465
  %v1467 = vpop.f32.mrf.mxu0
  %v1468 = vadd.f32 %v1449, %v1467
  %1469 = vdwg.mxu0
  %v1470 = vxor.u32 %v1233, 2147483648
  %v1471 = vxor.u32 %v1271, 2147483648
  %v1472 = vxor.u32 %v1309, 2147483648
  %v1473 = vxor.u32 %v1347, 2147483648
  %v1474 = vxor.u32 %v1385, 2147483648
  %v1475 = vxor.u32 %v1423, 2147483648
  %v1476 = vxor.u32 %v1461, 2147483648
  %v1477 = vxor.u32 %v1235, 2147483648
  %v1478 = vxor.u32 %v1273, 2147483648
  %v1479 = vxor.u32 %v1311, 2147483648
  %v1480 = vxor.u32 %v1349, 2147483648
  %v1481 = vxor.u32 %v1387, 2147483648
  %v1482 = vxor.u32 %v1425, 2147483648
  %v1483 = vxor.u32 %v1463, 2147483648
  %v1484 = vxor.u32 %v1238, 2147483648
  %v1485 = vxor.u32 %v1276, 2147483648
  %v1486 = vxor.u32 %v1314, 2147483648
  %v1487 = vxor.u32 %v1352, 2147483648
  %v1488 = vxor.u32 %v1390, 2147483648
  %v1489 = vxor.u32 %v1428, 2147483648
  %v1490 = vxor.u32 %v1466, 2147483648
  %v1491 = vxor.u32 %v1240, 2147483648
  %v1492 = vxor.u32 %v1278, 2147483648
  %v1493 = vxor.u32 %v1316, 2147483648
  %v1494 = vxor.u32 %v1354, 2147483648
  %v1495 = vxor.u32 %v1392, 2147483648
  %v1496 = vxor.u32 %v1430, 2147483648
  %v1497 = vxor.u32 %v1468, 2147483648
  %v1498 = vmul.f32 %v1470, 1.442695
  %v1499 = vpow.pop %v1498
  %v1500 = vmul.f32 %v1471, 1.442695
  %v1501 = vpow.pop %v1500
  %v1502 = vmul.f32 %v1472, 1.442695
  %v1503 = vpow.pop %v1502
  %v1504 = vmul.f32 %v1473, 1.442695
  %v1505 = vpow.pop %v1504
  %v1506 = vmul.f32 %v1474, 1.442695
  %v1507 = vpow.pop %v1506
  %v1508 = vmul.f32 %v1475, 1.442695
  %v1509 = vpow.pop %v1508
  %v1510 = vmul.f32 %v1476, 1.442695
  %v1511 = vpow.pop %v1510
  %v1512 = vmul.f32 %v1477, 1.442695
  %v1513 = vpow.pop %v1512
  %v1514 = vmul.f32 %v1478, 1.442695
  %v1515 = vpow.pop %v1514
  %v1516 = vmul.f32 %v1479, 1.442695
  %v1517 = vpow.pop %v1516
  %v1518 = vmul.f32 %v1480, 1.442695
  %v1519 = vpow.pop %v1518
  %v1520 = vmul.f32 %v1481, 1.442695
  %v1521 = vpow.pop %v1520
  %v1522 = vmul.f32 %v1482, 1.442695
  %v1523 = vpow.pop %v1522
  %v1524 = vmul.f32 %v1483, 1.442695
  %v1525 = vpow.pop %v1524
  %v1526 = vmul.f32 %v1484, 1.442695
  %v1527 = vpow.pop %v1526
  %v1528 = vmul.f32 %v1485, 1.442695
  %v1529 = vpow.pop %v1528
  %v1530 = vmul.f32 %v1486, 1.442695
  %v1531 = vpow.pop %v1530
  %v1532 = vmul.f32 %v1487, 1.442695
  %v1533 = vpow.pop %v1532
  %v1534 = vmul.f32 %v1488, 1.442695
  %v1535 = vpow.pop %v1534
  %v1536 = vmul.f32 %v1489, 1.442695
  %v1537 = vpow.pop %v1536
  %v1538 = vmul.f32 %v1490, 1.442695
  %v1539 = vpow.pop %v1538
  %v1540 = vmul.f32 %v1491, 1.442695
  %v1541 = vpow.pop %v1540
  %v1542 = vmul.f32 %v1492, 1.442695
  %v1543 = vpow.pop %v1542
  %v1544 = vmul.f32 %v1493, 1.442695
  %v1545 = vpow.pop %v1544
  %v1546 = vmul.f32 %v1494, 1.442695
  %v1547 = vpow.pop %v1546
  %v1548 = vmul.f32 %v1495, 1.442695
  %v1549 = vpow.pop %v1548
  %v1550 = vmul.f32 %v1496, 1.442695
  %v1551 = vpow.pop %v1550
  %v1552 = vmul.f32 %v1497, 1.442695
  %v1553 = vpow.pop %v1552
  %v1554 = vadd.f32 %v1499, 1.0
  %v1555 = vadd.f32 %v1501, 1.0
  %v1556 = vadd.f32 %v1503, 1.0
  %v1557 = vadd.f32 %v1505, 1.0
  %v1558 = vadd.f32 %v1507, 1.0
  %v1559 = vadd.f32 %v1509, 1.0
  %v1560 = vadd.f32 %v1511, 1.0
  %v1561 = vadd.f32 %v1513, 1.0
  %v1562 = vadd.f32 %v1515, 1.0
  %v1563 = vadd.f32 %v1517, 1.0
  %v1564 = vadd.f32 %v1519, 1.0
  %v1565 = vadd.f32 %v1521, 1.0
  %v1566 = vadd.f32 %v1523, 1.0
  %v1567 = vadd.f32 %v1525, 1.0
  %v1568 = vadd.f32 %v1527, 1.0
  %v1569 = vadd.f32 %v1529, 1.0
  %v1570 = vadd.f32 %v1531, 1.0
  %v1571 = vadd.f32 %v1533, 1.0
  %v1572 = vadd.f32 %v1535, 1.0
  %v1573 = vadd.f32 %v1537, 1.0
  %v1574 = vadd.f32 %v1539, 1.0
  %v1575 = vadd.f32 %v1541, 1.0
  %v1576 = vadd.f32 %v1543, 1.0
  %v1577 = vadd.f32 %v1545, 1.0
  %v1578 = vadd.f32 %v1547, 1.0
  %v1579 = vadd.f32 %v1549, 1.0
  %v1580 = vadd.f32 %v1551, 1.0
  %v1581 = vadd.f32 %v1553, 1.0
  %v1582 = vrcp.pop %v1554
  %v1583 = vmul.f32 %v1554, %v1582
  %v1584 = vsub.f32 1.0, %v1583
  %v1585 = vmul.f32 %v1582, %v1584
  %v1586 = vadd.f32 %v1582, %v1585
  %vm1587 = vweird.f32 %v1554
  %vm1588 = vweird.f32 %v1582
  %vm1589 = vmor %vm1587, %vm1588
  %v1590 = vsel %vm1589, %v1582, %v1586
  %v1591 = vand.u32 2147483647, %v1554
  %vm1592 = vcmp.eq.f32.partialorder %v1591, 8.507059e+37
  %v1593 = vand.u32 %v1554, 2147483648
  %v1594 = vor.u32 1.1754944e-38, %v1593
  %v1595 = vsel %vm1592, %v1594, %v1590
  %v1596 = vmul.f32 1.0, %v1595
  %v1597 = vrcp.pop %v1555
  %v1598 = vmul.f32 %v1555, %v1597
  %v1599 = vsub.f32 1.0, %v1598
  %v1600 = vmul.f32 %v1597, %v1599
  %v1601 = vadd.f32 %v1597, %v1600
  %vm1602 = vweird.f32 %v1555
  %vm1603 = vweird.f32 %v1597
  %vm1604 = vmor %vm1602, %vm1603
  %v1605 = vsel %vm1604, %v1597, %v1601
  %v1606 = vand.u32 2147483647, %v1555
  %vm1607 = vcmp.eq.f32.partialorder %v1606, 8.507059e+37
  %v1608 = vand.u32 %v1555, 2147483648
  %v1609 = vor.u32 1.1754944e-38, %v1608
  %v1610 = vsel %vm1607, %v1609, %v1605
  %v1611 = vmul.f32 1.0, %v1610
  %v1612 = vrcp.pop %v1556
  %v1613 = vmul.f32 %v1556, %v1612
  %v1614 = vsub.f32 1.0, %v1613
  %v1615 = vmul.f32 %v1612, %v1614
  %v1616 = vadd.f32 %v1612, %v1615
  %vm1617 = vweird.f32 %v1556
  %vm1618 = vweird.f32 %v1612
  %vm1619 = vmor %vm1617, %vm1618
  %v1620 = vsel %vm1619, %v1612, %v1616
  %v1621 = vand.u32 2147483647, %v1556
  %vm1622 = vcmp.eq.f32.partialorder %v1621, 8.507059e+37
  %v1623 = vand.u32 %v1556, 2147483648
  %v1624 = vor.u32 1.1754944e-38, %v1623
  %v1625 = vsel %vm1622, %v1624, %v1620
  %v1626 = vmul.f32 1.0, %v1625
  %v1627 = vrcp.pop %v1557
  %v1628 = vmul.f32 %v1557, %v1627
  %v1629 = vsub.f32 1.0, %v1628
  %v1630 = vmul.f32 %v1627, %v1629
  %v1631 = vadd.f32 %v1627, %v1630
  %vm1632 = vweird.f32 %v1557
  %vm1633 = vweird.f32 %v1627
  %vm1634 = vmor %vm1632, %vm1633
  %v1635 = vsel %vm1634, %v1627, %v1631
  %v1636 = vand.u32 2147483647, %v1557
  %vm1637 = vcmp.eq.f32.partialorder %v1636, 8.507059e+37
  %v1638 = vand.u32 %v1557, 2147483648
  %v1639 = vor.u32 1.1754944e-38, %v1638
  %v1640 = vsel %vm1637, %v1639, %v1635
  %v1641 = vmul.f32 1.0, %v1640
  %v1642 = vrcp.pop %v1558
  %v1643 = vmul.f32 %v1558, %v1642
  %v1644 = vsub.f32 1.0, %v1643
  %v1645 = vmul.f32 %v1642, %v1644
  %v1646 = vadd.f32 %v1642, %v1645
  %vm1647 = vweird.f32 %v1558
  %vm1648 = vweird.f32 %v1642
  %vm1649 = vmor %vm1647, %vm1648
  %v1650 = vsel %vm1649, %v1642, %v1646
  %v1651 = vand.u32 2147483647, %v1558
  %vm1652 = vcmp.eq.f32.partialorder %v1651, 8.507059e+37
  %v1653 = vand.u32 %v1558, 2147483648
  %v1654 = vor.u32 1.1754944e-38, %v1653
  %v1655 = vsel %vm1652, %v1654, %v1650
  %v1656 = vmul.f32 1.0, %v1655
  %v1657 = vrcp.pop %v1559
  %v1658 = vmul.f32 %v1559, %v1657
  %v1659 = vsub.f32 1.0, %v1658
  %v1660 = vmul.f32 %v1657, %v1659
  %v1661 = vadd.f32 %v1657, %v1660
  %vm1662 = vweird.f32 %v1559
  %vm1663 = vweird.f32 %v1657
  %vm1664 = vmor %vm1662, %vm1663
  %v1665 = vsel %vm1664, %v1657, %v1661
  %v1666 = vand.u32 2147483647, %v1559
  %vm1667 = vcmp.eq.f32.partialorder %v1666, 8.507059e+37
  %v1668 = vand.u32 %v1559, 2147483648
  %v1669 = vor.u32 1.1754944e-38, %v1668
  %v1670 = vsel %vm1667, %v1669, %v1665
  %v1671 = vmul.f32 1.0, %v1670
  %v1672 = vrcp.pop %v1560
  %v1673 = vmul.f32 %v1560, %v1672
  %v1674 = vsub.f32 1.0, %v1673
  %v1675 = vmul.f32 %v1672, %v1674
  %v1676 = vadd.f32 %v1672, %v1675
  %vm1677 = vweird.f32 %v1560
  %vm1678 = vweird.f32 %v1672
  %vm1679 = vmor %vm1677, %vm1678
  %v1680 = vsel %vm1679, %v1672, %v1676
  %v1681 = vand.u32 2147483647, %v1560
  %vm1682 = vcmp.eq.f32.partialorder %v1681, 8.507059e+37
  %v1683 = vand.u32 %v1560, 2147483648
  %v1684 = vor.u32 1.1754944e-38, %v1683
  %v1685 = vsel %vm1682, %v1684, %v1680
  %v1686 = vmul.f32 1.0, %v1685
  %v1687 = vrcp.pop %v1561
  %v1688 = vmul.f32 %v1561, %v1687
  %v1689 = vsub.f32 1.0, %v1688
  %v1690 = vmul.f32 %v1687, %v1689
  %v1691 = vadd.f32 %v1687, %v1690
  %vm1692 = vweird.f32 %v1561
  %vm1693 = vweird.f32 %v1687
  %vm1694 = vmor %vm1692, %vm1693
  %v1695 = vsel %vm1694, %v1687, %v1691
  %v1696 = vand.u32 2147483647, %v1561
  %vm1697 = vcmp.eq.f32.partialorder %v1696, 8.507059e+37
  %v1698 = vand.u32 %v1561, 2147483648
  %v1699 = vor.u32 1.1754944e-38, %v1698
  %v1700 = vsel %vm1697, %v1699, %v1695
  %v1701 = vmul.f32 1.0, %v1700
  %v1702 = vrcp.pop %v1562
  %v1703 = vmul.f32 %v1562, %v1702
  %v1704 = vsub.f32 1.0, %v1703
  %v1705 = vmul.f32 %v1702, %v1704
  %v1706 = vadd.f32 %v1702, %v1705
  %vm1707 = vweird.f32 %v1562
  %vm1708 = vweird.f32 %v1702
  %vm1709 = vmor %vm1707, %vm1708
  %v1710 = vsel %vm1709, %v1702, %v1706
  %v1711 = vand.u32 2147483647, %v1562
  %vm1712 = vcmp.eq.f32.partialorder %v1711, 8.507059e+37
  %v1713 = vand.u32 %v1562, 2147483648
  %v1714 = vor.u32 1.1754944e-38, %v1713
  %v1715 = vsel %vm1712, %v1714, %v1710
  %v1716 = vmul.f32 1.0, %v1715
  %v1717 = vrcp.pop %v1563
  %v1718 = vmul.f32 %v1563, %v1717
  %v1719 = vsub.f32 1.0, %v1718
  %v1720 = vmul.f32 %v1717, %v1719
  %v1721 = vadd.f32 %v1717, %v1720
  %vm1722 = vweird.f32 %v1563
  %vm1723 = vweird.f32 %v1717
  %vm1724 = vmor %vm1722, %vm1723
  %v1725 = vsel %vm1724, %v1717, %v1721
  %v1726 = vand.u32 2147483647, %v1563
  %vm1727 = vcmp.eq.f32.partialorder %v1726, 8.507059e+37
  %v1728 = vand.u32 %v1563, 2147483648
  %v1729 = vor.u32 1.1754944e-38, %v1728
  %v1730 = vsel %vm1727, %v1729, %v1725
  %v1731 = vmul.f32 1.0, %v1730
  %v1732 = vrcp.pop %v1564
  %v1733 = vmul.f32 %v1564, %v1732
  %v1734 = vsub.f32 1.0, %v1733
  %v1735 = vmul.f32 %v1732, %v1734
  %v1736 = vadd.f32 %v1732, %v1735
  %vm1737 = vweird.f32 %v1564
  %vm1738 = vweird.f32 %v1732
  %vm1739 = vmor %vm1737, %vm1738
  %v1740 = vsel %vm1739, %v1732, %v1736
  %v1741 = vand.u32 2147483647, %v1564
  %vm1742 = vcmp.eq.f32.partialorder %v1741, 8.507059e+37
  %v1743 = vand.u32 %v1564, 2147483648
  %v1744 = vor.u32 1.1754944e-38, %v1743
  %v1745 = vsel %vm1742, %v1744, %v1740
  %v1746 = vmul.f32 1.0, %v1745
  %v1747 = vrcp.pop %v1565
  %v1748 = vmul.f32 %v1565, %v1747
  %v1749 = vsub.f32 1.0, %v1748
  %v1750 = vmul.f32 %v1747, %v1749
  %v1751 = vadd.f32 %v1747, %v1750
  %vm1752 = vweird.f32 %v1565
  %vm1753 = vweird.f32 %v1747
  %vm1754 = vmor %vm1752, %vm1753
  %v1755 = vsel %vm1754, %v1747, %v1751
  %v1756 = vand.u32 2147483647, %v1565
  %vm1757 = vcmp.eq.f32.partialorder %v1756, 8.507059e+37
  %v1758 = vand.u32 %v1565, 2147483648
  %v1759 = vor.u32 1.1754944e-38, %v1758
  %v1760 = vsel %vm1757, %v1759, %v1755
  %v1761 = vmul.f32 1.0, %v1760
  %v1762 = vrcp.pop %v1566
  %v1763 = vmul.f32 %v1566, %v1762
  %v1764 = vsub.f32 1.0, %v1763
  %v1765 = vmul.f32 %v1762, %v1764
  %v1766 = vadd.f32 %v1762, %v1765
  %vm1767 = vweird.f32 %v1566
  %vm1768 = vweird.f32 %v1762
  %vm1769 = vmor %vm1767, %vm1768
  %v1770 = vsel %vm1769, %v1762, %v1766
  %v1771 = vand.u32 2147483647, %v1566
  %vm1772 = vcmp.eq.f32.partialorder %v1771, 8.507059e+37
  %v1773 = vand.u32 %v1566, 2147483648
  %v1774 = vor.u32 1.1754944e-38, %v1773
  %v1775 = vsel %vm1772, %v1774, %v1770
  %v1776 = vmul.f32 1.0, %v1775
  %v1777 = vrcp.pop %v1567
  %v1778 = vmul.f32 %v1567, %v1777
  %v1779 = vsub.f32 1.0, %v1778
  %v1780 = vmul.f32 %v1777, %v1779
  %v1781 = vadd.f32 %v1777, %v1780
  %vm1782 = vweird.f32 %v1567
  %vm1783 = vweird.f32 %v1777
  %vm1784 = vmor %vm1782, %vm1783
  %v1785 = vsel %vm1784, %v1777, %v1781
  %v1786 = vand.u32 2147483647, %v1567
  %vm1787 = vcmp.eq.f32.partialorder %v1786, 8.507059e+37
  %v1788 = vand.u32 %v1567, 2147483648
  %v1789 = vor.u32 1.1754944e-38, %v1788
  %v1790 = vsel %vm1787, %v1789, %v1785
  %v1791 = vmul.f32 1.0, %v1790
  %v1792 = vrcp.pop %v1568
  %v1793 = vmul.f32 %v1568, %v1792
  %v1794 = vsub.f32 1.0, %v1793
  %v1795 = vmul.f32 %v1792, %v1794
  %v1796 = vadd.f32 %v1792, %v1795
  %vm1797 = vweird.f32 %v1568
  %vm1798 = vweird.f32 %v1792
  %vm1799 = vmor %vm1797, %vm1798
  %v1800 = vsel %vm1799, %v1792, %v1796
  %v1801 = vand.u32 2147483647, %v1568
  %vm1802 = vcmp.eq.f32.partialorder %v1801, 8.507059e+37
  %v1803 = vand.u32 %v1568, 2147483648
  %v1804 = vor.u32 1.1754944e-38, %v1803
  %v1805 = vsel %vm1802, %v1804, %v1800
  %v1806 = vmul.f32 1.0, %v1805
  %v1807 = vrcp.pop %v1569
  %v1808 = vmul.f32 %v1569, %v1807
  %v1809 = vsub.f32 1.0, %v1808
  %v1810 = vmul.f32 %v1807, %v1809
  %v1811 = vadd.f32 %v1807, %v1810
  %vm1812 = vweird.f32 %v1569
  %vm1813 = vweird.f32 %v1807
  %vm1814 = vmor %vm1812, %vm1813
  %v1815 = vsel %vm1814, %v1807, %v1811
  %v1816 = vand.u32 2147483647, %v1569
  %vm1817 = vcmp.eq.f32.partialorder %v1816, 8.507059e+37
  %v1818 = vand.u32 %v1569, 2147483648
  %v1819 = vor.u32 1.1754944e-38, %v1818
  %v1820 = vsel %vm1817, %v1819, %v1815
  %v1821 = vmul.f32 1.0, %v1820
  %v1822 = vrcp.pop %v1570
  %v1823 = vmul.f32 %v1570, %v1822
  %v1824 = vsub.f32 1.0, %v1823
  %v1825 = vmul.f32 %v1822, %v1824
  %v1826 = vadd.f32 %v1822, %v1825
  %vm1827 = vweird.f32 %v1570
  %vm1828 = vweird.f32 %v1822
  %vm1829 = vmor %vm1827, %vm1828
  %v1830 = vsel %vm1829, %v1822, %v1826
  %v1831 = vand.u32 2147483647, %v1570
  %vm1832 = vcmp.eq.f32.partialorder %v1831, 8.507059e+37
  %v1833 = vand.u32 %v1570, 2147483648
  %v1834 = vor.u32 1.1754944e-38, %v1833
  %v1835 = vsel %vm1832, %v1834, %v1830
  %v1836 = vmul.f32 1.0, %v1835
  %v1837 = vrcp.pop %v1571
  %v1838 = vmul.f32 %v1571, %v1837
  %v1839 = vsub.f32 1.0, %v1838
  %v1840 = vmul.f32 %v1837, %v1839
  %v1841 = vadd.f32 %v1837, %v1840
  %vm1842 = vweird.f32 %v1571
  %vm1843 = vweird.f32 %v1837
  %vm1844 = vmor %vm1842, %vm1843
  %v1845 = vsel %vm1844, %v1837, %v1841
  %v1846 = vand.u32 2147483647, %v1571
  %vm1847 = vcmp.eq.f32.partialorder %v1846, 8.507059e+37
  %v1848 = vand.u32 %v1571, 2147483648
  %v1849 = vor.u32 1.1754944e-38, %v1848
  %v1850 = vsel %vm1847, %v1849, %v1845
  %v1851 = vmul.f32 1.0, %v1850
  %v1852 = vrcp.pop %v1572
  %v1853 = vmul.f32 %v1572, %v1852
  %v1854 = vsub.f32 1.0, %v1853
  %v1855 = vmul.f32 %v1852, %v1854
  %v1856 = vadd.f32 %v1852, %v1855
  %vm1857 = vweird.f32 %v1572
  %vm1858 = vweird.f32 %v1852
  %vm1859 = vmor %vm1857, %vm1858
  %v1860 = vsel %vm1859, %v1852, %v1856
  %v1861 = vand.u32 2147483647, %v1572
  %vm1862 = vcmp.eq.f32.partialorder %v1861, 8.507059e+37
  %v1863 = vand.u32 %v1572, 2147483648
  %v1864 = vor.u32 1.1754944e-38, %v1863
  %v1865 = vsel %vm1862, %v1864, %v1860
  %v1866 = vmul.f32 1.0, %v1865
  %v1867 = vrcp.pop %v1573
  %v1868 = vmul.f32 %v1573, %v1867
  %v1869 = vsub.f32 1.0, %v1868
  %v1870 = vmul.f32 %v1867, %v1869
  %v1871 = vadd.f32 %v1867, %v1870
  %vm1872 = vweird.f32 %v1573
  %vm1873 = vweird.f32 %v1867
  %vm1874 = vmor %vm1872, %vm1873
  %v1875 = vsel %vm1874, %v1867, %v1871
  %v1876 = vand.u32 2147483647, %v1573
  %vm1877 = vcmp.eq.f32.partialorder %v1876, 8.507059e+37
  %v1878 = vand.u32 %v1573, 2147483648
  %v1879 = vor.u32 1.1754944e-38, %v1878
  %v1880 = vsel %vm1877, %v1879, %v1875
  %v1881 = vmul.f32 1.0, %v1880
  %v1882 = vrcp.pop %v1574
  %v1883 = vmul.f32 %v1574, %v1882
  %v1884 = vsub.f32 1.0, %v1883
  %v1885 = vmul.f32 %v1882, %v1884
  %v1886 = vadd.f32 %v1882, %v1885
  %vm1887 = vweird.f32 %v1574
  %vm1888 = vweird.f32 %v1882
  %vm1889 = vmor %vm1887, %vm1888
  %v1890 = vsel %vm1889, %v1882, %v1886
  %v1891 = vand.u32 2147483647, %v1574
  %vm1892 = vcmp.eq.f32.partialorder %v1891, 8.507059e+37
  %v1893 = vand.u32 %v1574, 2147483648
  %v1894 = vor.u32 1.1754944e-38, %v1893
  %v1895 = vsel %vm1892, %v1894, %v1890
  %v1896 = vmul.f32 1.0, %v1895
  %v1897 = vrcp.pop %v1575
  %v1898 = vmul.f32 %v1575, %v1897
  %v1899 = vsub.f32 1.0, %v1898
  %v1900 = vmul.f32 %v1897, %v1899
  %v1901 = vadd.f32 %v1897, %v1900
  %vm1902 = vweird.f32 %v1575
  %vm1903 = vweird.f32 %v1897
  %vm1904 = vmor %vm1902, %vm1903
  %v1905 = vsel %vm1904, %v1897, %v1901
  %v1906 = vand.u32 2147483647, %v1575
  %vm1907 = vcmp.eq.f32.partialorder %v1906, 8.507059e+37
  %v1908 = vand.u32 %v1575, 2147483648
  %v1909 = vor.u32 1.1754944e-38, %v1908
  %v1910 = vsel %vm1907, %v1909, %v1905
  %v1911 = vmul.f32 1.0, %v1910
  %v1912 = vrcp.pop %v1576
  %v1913 = vmul.f32 %v1576, %v1912
  %v1914 = vsub.f32 1.0, %v1913
  %v1915 = vmul.f32 %v1912, %v1914
  %v1916 = vadd.f32 %v1912, %v1915
  %vm1917 = vweird.f32 %v1576
  %vm1918 = vweird.f32 %v1912
  %vm1919 = vmor %vm1917, %vm1918
  %v1920 = vsel %vm1919, %v1912, %v1916
  %v1921 = vand.u32 2147483647, %v1576
  %vm1922 = vcmp.eq.f32.partialorder %v1921, 8.507059e+37
  %v1923 = vand.u32 %v1576, 2147483648
  %v1924 = vor.u32 1.1754944e-38, %v1923
  %v1925 = vsel %vm1922, %v1924, %v1920
  %v1926 = vmul.f32 1.0, %v1925
  %v1927 = vrcp.pop %v1577
  %v1928 = vmul.f32 %v1577, %v1927
  %v1929 = vsub.f32 1.0, %v1928
  %v1930 = vmul.f32 %v1927, %v1929
  %v1931 = vadd.f32 %v1927, %v1930
  %vm1932 = vweird.f32 %v1577
  %vm1933 = vweird.f32 %v1927
  %vm1934 = vmor %vm1932, %vm1933
  %v1935 = vsel %vm1934, %v1927, %v1931
  %v1936 = vand.u32 2147483647, %v1577
  %vm1937 = vcmp.eq.f32.partialorder %v1936, 8.507059e+37
  %v1938 = vand.u32 %v1577, 2147483648
  %v1939 = vor.u32 1.1754944e-38, %v1938
  %v1940 = vsel %vm1937, %v1939, %v1935
  %v1941 = vmul.f32 1.0, %v1940
  %v1942 = vrcp.pop %v1578
  %v1943 = vmul.f32 %v1578, %v1942
  %v1944 = vsub.f32 1.0, %v1943
  %v1945 = vmul.f32 %v1942, %v1944
  %v1946 = vadd.f32 %v1942, %v1945
  %vm1947 = vweird.f32 %v1578
  %vm1948 = vweird.f32 %v1942
  %vm1949 = vmor %vm1947, %vm1948
  %v1950 = vsel %vm1949, %v1942, %v1946
  %v1951 = vand.u32 2147483647, %v1578
  %vm1952 = vcmp.eq.f32.partialorder %v1951, 8.507059e+37
  %v1953 = vand.u32 %v1578, 2147483648
  %v1954 = vor.u32 1.1754944e-38, %v1953
  %v1955 = vsel %vm1952, %v1954, %v1950
  %v1956 = vmul.f32 1.0, %v1955
  %v1957 = vrcp.pop %v1579
  %v1958 = vmul.f32 %v1579, %v1957
  %v1959 = vsub.f32 1.0, %v1958
  %v1960 = vmul.f32 %v1957, %v1959
  %v1961 = vadd.f32 %v1957, %v1960
  %vm1962 = vweird.f32 %v1579
  %vm1963 = vweird.f32 %v1957
  %vm1964 = vmor %vm1962, %vm1963
  %v1965 = vsel %vm1964, %v1957, %v1961
  %v1966 = vand.u32 2147483647, %v1579
  %vm1967 = vcmp.eq.f32.partialorder %v1966, 8.507059e+37
  %v1968 = vand.u32 %v1579, 2147483648
  %v1969 = vor.u32 1.1754944e-38, %v1968
  %v1970 = vsel %vm1967, %v1969, %v1965
  %v1971 = vmul.f32 1.0, %v1970
  %v1972 = vrcp.pop %v1580
  %v1973 = vmul.f32 %v1580, %v1972
  %v1974 = vsub.f32 1.0, %v1973
  %v1975 = vmul.f32 %v1972, %v1974
  %v1976 = vadd.f32 %v1972, %v1975
  %vm1977 = vweird.f32 %v1580
  %vm1978 = vweird.f32 %v1972
  %vm1979 = vmor %vm1977, %vm1978
  %v1980 = vsel %vm1979, %v1972, %v1976
  %v1981 = vand.u32 2147483647, %v1580
  %vm1982 = vcmp.eq.f32.partialorder %v1981, 8.507059e+37
  %v1983 = vand.u32 %v1580, 2147483648
  %v1984 = vor.u32 1.1754944e-38, %v1983
  %v1985 = vsel %vm1982, %v1984, %v1980
  %v1986 = vmul.f32 1.0, %v1985
  %v1987 = vrcp.pop %v1581
  %v1988 = vmul.f32 %v1581, %v1987
  %v1989 = vsub.f32 1.0, %v1988
  %v1990 = vmul.f32 %v1987, %v1989
  %v1991 = vadd.f32 %v1987, %v1990
  %vm1992 = vweird.f32 %v1581
  %vm1993 = vweird.f32 %v1987
  %vm1994 = vmor %vm1992, %vm1993
  %v1995 = vsel %vm1994, %v1987, %v1991
  %v1996 = vand.u32 2147483647, %v1581
  %vm1997 = vcmp.eq.f32.partialorder %v1996, 8.507059e+37
  %v1998 = vand.u32 %v1581, 2147483648
  %v1999 = vor.u32 1.1754944e-38, %v1998
  %v2000 = vsel %vm1997, %v1999, %v1995
  %v2001 = vmul.f32 1.0, %v2000
  %v2002 = vmul.f32 %v1233, %v1596
  %v2003 = vmul.f32 %v1271, %v1611
  %v2004 = vmul.f32 %v1309, %v1626
  %v2005 = vmul.f32 %v1347, %v1641
  %v2006 = vmul.f32 %v1385, %v1656
  %v2007 = vmul.f32 %v1423, %v1671
  %v2008 = vmul.f32 %v1461, %v1686
  %v2009 = vmul.f32 %v1235, %v1701
  %v2010 = vmul.f32 %v1273, %v1716
  %v2011 = vmul.f32 %v1311, %v1731
  %v2012 = vmul.f32 %v1349, %v1746
  %v2013 = vmul.f32 %v1387, %v1761
  %v2014 = vmul.f32 %v1425, %v1776
  %v2015 = vmul.f32 %v1463, %v1791
  %v2016 = vmul.f32 %v1238, %v1806
  %v2017 = vmul.f32 %v1276, %v1821
  %v2018 = vmul.f32 %v1314, %v1836
  %v2019 = vmul.f32 %v1352, %v1851
  %v2020 = vmul.f32 %v1390, %v1866
  %v2021 = vmul.f32 %v1428, %v1881
  %v2022 = vmul.f32 %v1466, %v1896
  %v2023 = vmul.f32 %v1240, %v1911
  %v2024 = vmul.f32 %v1278, %v1926
  %v2025 = vmul.f32 %v1316, %v1941
  %v2026 = vmul.f32 %v1354, %v1956
  %v2027 = vmul.f32 %v1392, %v1971
  %v2028 = vmul.f32 %v1430, %v1986
  %v2029 = vmul.f32 %v1468, %v2001
  %v2030 = vld [vmem:[%s2] sm:$0xff]
  %v2032 = vperm.slane %v2030, 0
  %v2033 = vperm.slane %v2030, 1
  %v2034 = vperm.slane %v2030, 2
  %v2035 = vperm.slane %v2030, 3
  %v2036 = vperm.slane %v2030, 4
  %v2037 = vperm.slane %v2030, 5
  %v2038 = vperm.slane %v2030, 6
  %v2046 = vmul.f32 %v2002, %v2032
  %v2047 = vmul.f32 %v2003, %v2033
  %v2048 = vmul.f32 %v2004, %v2034
  %v2049 = vmul.f32 %v2005, %v2035
  %v2050 = vmul.f32 %v2006, %v2036
  %v2051 = vmul.f32 %v2007, %v2037
  %v2052 = vmul.f32 %v2008, %v2038
  %v2053 = vmul.f32 %v2009, %v2032
  %v2054 = vmul.f32 %v2010, %v2033
  %v2055 = vmul.f32 %v2011, %v2034
  %v2056 = vmul.f32 %v2012, %v2035
  %v2057 = vmul.f32 %v2013, %v2036
  %v2058 = vmul.f32 %v2014, %v2037
  %v2059 = vmul.f32 %v2015, %v2038
  %v2060 = vmul.f32 %v2016, %v2032
  %v2061 = vmul.f32 %v2017, %v2033
  %v2062 = vmul.f32 %v2018, %v2034
  %v2063 = vmul.f32 %v2019, %v2035
  %v2064 = vmul.f32 %v2020, %v2036
  %v2065 = vmul.f32 %v2021, %v2037
  %v2066 = vmul.f32 %v2022, %v2038
  %v2067 = vmul.f32 %v2023, %v2032
  %v2068 = vmul.f32 %v2024, %v2033
  %v2069 = vmul.f32 %v2025, %v2034
  %v2070 = vmul.f32 %v2026, %v2035
  %v2071 = vmul.f32 %v2027, %v2036
  %v2072 = vmul.f32 %v2028, %v2037
  %v2073 = vmul.f32 %v2029, %v2038
  %v2074 = vpack.c.bf16 %v2047, %v2046
  %v2075 = vpack.c.bf16 %v2049, %v2048
  %v2076 = vpack.c.bf16 %v2051, %v2050
  %v2077 = vpack.c.bf16 %v2052, %v2052
  %v2078 = vpack.c.bf16 %v2054, %v2053
  %v2079 = vpack.c.bf16 %v2056, %v2055
  %v2080 = vpack.c.bf16 %v2058, %v2057
  %v2081 = vpack.c.bf16 %v2059, %v2059
  %v2082 = vpack.c.bf16 %v2061, %v2060
  %v2083 = vpack.c.bf16 %v2063, %v2062
  %v2084 = vpack.c.bf16 %v2065, %v2064
  %v2085 = vpack.c.bf16 %v2066, %v2066
  %v2086 = vpack.c.bf16 %v2068, %v2067
  %v2087 = vpack.c.bf16 %v2070, %v2069
  %v2088 = vpack.c.bf16 %v2072, %v2071
  %v2089 = vpack.c.bf16 %v2073, %v2073
  %2090 = vst [vmem:[#allocation3] sm:$0xff] %v2074
  %2091 = vst [vmem:[#allocation3 + $0x8] sm:$0xff] %v2075
  %2092 = vst [vmem:[#allocation3 + $0x10] sm:$0xff] %v2076
  %2093 = vst [vmem:[#allocation3 + $0x18] sm:$0xf] %v2077
  %2094 = vst [vmem:[#allocation3 + $0x1c] sm:$0xff] %v2078
  %2095 = vst [vmem:[#allocation3 + $0x24] sm:$0xff] %v2079
  %2096 = vst [vmem:[#allocation3 + $0x2c] sm:$0xff] %v2080
  %2097 = vst [vmem:[#allocation3 + $0x34] sm:$0xf] %v2081
  %2098 = vst [vmem:[#allocation3 + $0x38] sm:$0xff] %v2082
  %2099 = vst [vmem:[#allocation3 + $0x40] sm:$0xff] %v2083
  %2100 = vst [vmem:[#allocation3 + $0x48] sm:$0xff] %v2084
  %2101 = vst [vmem:[#allocation3 + $0x50] sm:$0xf] %v2085
  %2102 = vst [vmem:[#allocation3 + $0x54] sm:$0xff] %v2086
  %2103 = vst [vmem:[#allocation3 + $0x5c] sm:$0xff] %v2087
  %2104 = vst [vmem:[#allocation3 + $0x64] sm:$0xff] %v2088
  %2105 = vst [vmem:[#allocation3 + $0x6c] sm:$0xf] %v2089
  %v2106 = vld [vmem:[#allocation3] sm:$0xff]
  %v2107 = vld [vmem:[#allocation3 + $0x8] sm:$0xff]
  %v2108 = vld [vmem:[#allocation3 + $0x10] sm:$0xff]
  %v2109 = vld [vmem:[#allocation3 + $0x1c] sm:$0xff]
  %v2110 = vld [vmem:[#allocation3 + $0x24] sm:$0xff]
  %v2111 = vld [vmem:[#allocation3 + $0x2c] sm:$0xff]
  %v2112 = vld [vmem:[#allocation3 + $0x38] sm:$0xff]
  %v2113 = vld [vmem:[#allocation3 + $0x40] sm:$0xff]
  %v2114 = vld [vmem:[#allocation3 + $0x48] sm:$0xff]
  %v2115 = vld [vmem:[#allocation3 + $0x54] sm:$0xff]
  %v2116 = vld [vmem:[#allocation3 + $0x5c] sm:$0xff]
  %v2117 = vld [vmem:[#allocation3 + $0x64] sm:$0xff]
  %2118 = vst [vmem:[#allocation4] sm:$0xff] %v2106
  %2119 = vst [vmem:[#allocation4 + $0x8] sm:$0xff] %v2107
  %2120 = vst [vmem:[#allocation4 + $0x10] sm:$0xff] %v2108
  %2121 = vst [vmem:[#allocation4 + $0x18] sm:$0xff] %v2109
  %2122 = vst [vmem:[#allocation4 + $0x20] sm:$0xff] %v2110
  %2123 = vst [vmem:[#allocation4 + $0x28] sm:$0xff] %v2111
  %2124 = vst [vmem:[#allocation4 + $0x30] sm:$0xff] %v2112
  %2125 = vst [vmem:[#allocation4 + $0x38] sm:$0xff] %v2113
  %2126 = vst [vmem:[#allocation4 + $0x40] sm:$0xff] %v2114
  %2127 = vst [vmem:[#allocation4 + $0x48] sm:$0xff] %v2115
  %2128 = vst [vmem:[#allocation4 + $0x50] sm:$0xff] %v2116
  %2129 = vst [vmem:[#allocation4 + $0x58] sm:$0xff] %v2117
  %v2130 = vld [vmem:[#allocation3] sm:$0xff]
  %v2131 = vld [vmem:[#allocation3 + $0x8] sm:$0xff]
  %v2132 = vld [vmem:[#allocation3 + $0x10] sm:$0xff]
  %v2133 = vld [vmem:[#allocation3 + $0x18] sm:$0xf]
  %v2134 = vld [vmem:[#allocation3 + $0x1c] sm:$0xff]
  %v2135 = vld [vmem:[#allocation3 + $0x24] sm:$0xff]
  %v2136 = vld [vmem:[#allocation3 + $0x2c] sm:$0xff]
  %v2137 = vld [vmem:[#allocation3 + $0x34] sm:$0xf]
  %v2138 = vld [vmem:[#allocation3 + $0x38] sm:$0xff]
  %v2139 = vld [vmem:[#allocation3 + $0x40] sm:$0xff]
  %v2140 = vld [vmem:[#allocation3 + $0x48] sm:$0xff]
  %v2141 = vld [vmem:[#allocation3 + $0x50] sm:$0xf]
  %v2142 = vld [vmem:[#allocation3 + $0x54] sm:$0xff]
  %v2143 = vld [vmem:[#allocation3 + $0x5c] sm:$0xff]
  %v2144 = vld [vmem:[#allocation3 + $0x64] sm:$0xff]
  %v2145 = vld [vmem:[#allocation3 + $0x6c] sm:$0xf]
  %2162 = vrot.lane.b32.xlu0 %v2130, 127
  %v2163 = vpop.permute.xlu0 %2162
  %2164 = vrot.lane.b32.xlu0 %v2131, 127
  %v2165 = vpop.permute.xlu0 %2164
  %2166 = vrot.lane.b32.xlu0 %v2132, 127
  %v2167 = vpop.permute.xlu0 %2166
  %2168 = vrot.lane.b32.xlu0 %v2133, 127
  %v2169 = vpop.permute.xlu0 %2168
  %2170 = vrot.lane.b32.xlu0 %v2134, 127
  %v2171 = vpop.permute.xlu0 %2170
  %2172 = vrot.lane.b32.xlu0 %v2135, 127
  %v2173 = vpop.permute.xlu0 %2172
  %2174 = vrot.lane.b32.xlu0 %v2136, 127
  %v2175 = vpop.permute.xlu0 %2174
  %2176 = vrot.lane.b32.xlu0 %v2137, 127
  %v2177 = vpop.permute.xlu0 %2176
  %2178 = vrot.lane.b32.xlu0 %v2138, 127
  %v2179 = vpop.permute.xlu0 %2178
  %2180 = vrot.lane.b32.xlu0 %v2139, 127
  %v2181 = vpop.permute.xlu0 %2180
  %2182 = vrot.lane.b32.xlu0 %v2140, 127
  %v2183 = vpop.permute.xlu0 %2182
  %2184 = vrot.lane.b32.xlu0 %v2141, 127
  %v2185 = vpop.permute.xlu0 %2184
  %2186 = vrot.lane.b32.xlu0 %v2142, 127
  %v2187 = vpop.permute.xlu0 %2186
  %2188 = vrot.lane.b32.xlu0 %v2143, 127
  %v2189 = vpop.permute.xlu0 %2188
  %2190 = vrot.lane.b32.xlu0 %v2144, 127
  %v2191 = vpop.permute.xlu0 %2190
  %2192 = vrot.lane.b32.xlu0 %v2145, 127
  %v2193 = vpop.permute.xlu0 %2192
  %v2194 = vrot.slane %v2163, 4
  %v2195 = vrot.slane %v2165, 4
  %v2196 = vrot.slane %v2167, 4
  %v2197 = vrot.slane %v2169, 4
  %v2198 = vrot.slane %v2171, 4
  %v2199 = vrot.slane %v2173, 4
  %v2200 = vrot.slane %v2175, 4
  %v2201 = vrot.slane %v2177, 4
  %v2202 = vrot.slane %v2179, 4
  %v2203 = vrot.slane %v2181, 4
  %v2204 = vrot.slane %v2183, 4
  %v2205 = vrot.slane %v2185, 4
  %v2206 = vrot.slane %v2187, 4
  %v2207 = vrot.slane %v2189, 4
  %v2208 = vrot.slane %v2191, 4
  %v2209 = vrot.slane %v2193, 4
  %v2210 = vsel %vm114, %v2194, %v2195
  %v2211 = vsel %vm116, %v2163, %v2210
  %v2212 = vsel %vm114, %v2195, %v2196
  %v2213 = vsel %vm116, %v2165, %v2212
  %v2214 = vsel %vm114, %v2196, %v2197
  %v2215 = vsel %vm116, %v2167, %v2214
  %v2216 = vsel %vm114, %v2198, %v2199
  %v2217 = vsel %vm116, %v2171, %v2216
  %v2218 = vsel %vm114, %v2199, %v2200
  %v2219 = vsel %vm116, %v2173, %v2218
  %v2220 = vsel %vm114, %v2200, %v2201
  %v2221 = vsel %vm116, %v2175, %v2220
  %v2222 = vsel %vm114, %v2202, %v2203
  %v2223 = vsel %vm116, %v2179, %v2222
  %v2224 = vsel %vm114, %v2203, %v2204
  %v2225 = vsel %vm116, %v2181, %v2224
  %v2226 = vsel %vm114, %v2204, %v2205
  %v2227 = vsel %vm116, %v2183, %v2226
  %v2228 = vsel %vm114, %v2206, %v2207
  %v2229 = vsel %vm116, %v2187, %v2228
  %v2230 = vsel %vm114, %v2207, %v2208
  %v2231 = vsel %vm116, %v2189, %v2230
  %v2232 = vsel %vm114, %v2208, %v2209
  %v2233 = vsel %vm116, %v2191, %v2232
  %2246 = vst [vmem:[#allocation4 + $0x60] sm:$0xff] %v2211
  %2247 = vst [vmem:[#allocation4 + $0x68] sm:$0xff] %v2213
  %2248 = vst [vmem:[#allocation4 + $0x70] sm:$0xff] %v2215
  %2249 = vst [vmem:[#allocation4 + $0x78] sm:$0xff] %v2217
  %2250 = vst [vmem:[#allocation4 + $0x80] sm:$0xff] %v2219
  %2251 = vst [vmem:[#allocation4 + $0x88] sm:$0xff] %v2221
  %2252 = vst [vmem:[#allocation4 + $0x90] sm:$0xff] %v2223
  %2253 = vst [vmem:[#allocation4 + $0x98] sm:$0xff] %v2225
  %2254 = vst [vmem:[#allocation4 + $0xa0] sm:$0xff] %v2227
  %2255 = vst [vmem:[#allocation4 + $0xa8] sm:$0xff] %v2229
  %2256 = vst [vmem:[#allocation4 + $0xb0] sm:$0xff] %v2231
  %2257 = vst [vmem:[#allocation4 + $0xb8] sm:$0xff] %v2233
  %v2258 = vld [vmem:[#allocation3] sm:$0xff]
  %v2259 = vld [vmem:[#allocation3 + $0x8] sm:$0xff]
  %v2260 = vld [vmem:[#allocation3 + $0x10] sm:$0xff]
  %v2261 = vld [vmem:[#allocation3 + $0x18] sm:$0xf]
  %v2262 = vld [vmem:[#allocation3 + $0x1c] sm:$0xff]
  %v2263 = vld [vmem:[#allocation3 + $0x24] sm:$0xff]
  %v2264 = vld [vmem:[#allocation3 + $0x2c] sm:$0xff]
  %v2265 = vld [vmem:[#allocation3 + $0x34] sm:$0xf]
  %v2266 = vld [vmem:[#allocation3 + $0x38] sm:$0xff]
  %v2267 = vld [vmem:[#allocation3 + $0x40] sm:$0xff]
  %v2268 = vld [vmem:[#allocation3 + $0x48] sm:$0xff]
  %v2269 = vld [vmem:[#allocation3 + $0x50] sm:$0xf]
  %v2270 = vld [vmem:[#allocation3 + $0x54] sm:$0xff]
  %v2271 = vld [vmem:[#allocation3 + $0x5c] sm:$0xff]
  %v2272 = vld [vmem:[#allocation3 + $0x64] sm:$0xff]
  %v2273 = vld [vmem:[#allocation3 + $0x6c] sm:$0xf]
  %2290 = vrot.lane.b32.xlu0 %v2258, 126
  %v2291 = vpop.permute.xlu0 %2290
  %2292 = vrot.lane.b32.xlu0 %v2259, 126
  %v2293 = vpop.permute.xlu0 %2292
  %2294 = vrot.lane.b32.xlu0 %v2260, 126
  %v2295 = vpop.permute.xlu0 %2294
  %2296 = vrot.lane.b32.xlu0 %v2261, 126
  %v2297 = vpop.permute.xlu0 %2296
  %2298 = vrot.lane.b32.xlu0 %v2262, 126
  %v2299 = vpop.permute.xlu0 %2298
  %2300 = vrot.lane.b32.xlu0 %v2263, 126
  %v2301 = vpop.permute.xlu0 %2300
  %2302 = vrot.lane.b32.xlu0 %v2264, 126
  %v2303 = vpop.permute.xlu0 %2302
  %2304 = vrot.lane.b32.xlu0 %v2265, 126
  %v2305 = vpop.permute.xlu0 %2304
  %2306 = vrot.lane.b32.xlu0 %v2266, 126
  %v2307 = vpop.permute.xlu0 %2306
  %2308 = vrot.lane.b32.xlu0 %v2267, 126
  %v2309 = vpop.permute.xlu0 %2308
  %2310 = vrot.lane.b32.xlu0 %v2268, 126
  %v2311 = vpop.permute.xlu0 %2310
  %2312 = vrot.lane.b32.xlu0 %v2269, 126
  %v2313 = vpop.permute.xlu0 %2312
  %2314 = vrot.lane.b32.xlu0 %v2270, 126
  %v2315 = vpop.permute.xlu0 %2314
  %2316 = vrot.lane.b32.xlu0 %v2271, 126
  %v2317 = vpop.permute.xlu0 %2316
  %2318 = vrot.lane.b32.xlu0 %v2272, 126
  %v2319 = vpop.permute.xlu0 %2318
  %2320 = vrot.lane.b32.xlu0 %v2273, 126
  %v2321 = vpop.permute.xlu0 %2320
  %v2322 = vrot.slane %v2291, 4
  %v2323 = vrot.slane %v2293, 4
  %v2324 = vrot.slane %v2295, 4
  %v2325 = vrot.slane %v2297, 4
  %v2326 = vrot.slane %v2299, 4
  %v2327 = vrot.slane %v2301, 4
  %v2328 = vrot.slane %v2303, 4
  %v2329 = vrot.slane %v2305, 4
  %v2330 = vrot.slane %v2307, 4
  %v2331 = vrot.slane %v2309, 4
  %v2332 = vrot.slane %v2311, 4
  %v2333 = vrot.slane %v2313, 4
  %v2334 = vrot.slane %v2315, 4
  %v2335 = vrot.slane %v2317, 4
  %v2336 = vrot.slane %v2319, 4
  %v2337 = vrot.slane %v2321, 4
  %v2338 = vsel %vm114, %v2322, %v2323
  %v2339 = vsel %vm203, %v2291, %v2338
  %v2340 = vsel %vm114, %v2323, %v2324
  %v2341 = vsel %vm203, %v2293, %v2340
  %v2342 = vsel %vm114, %v2324, %v2325
  %v2343 = vsel %vm203, %v2295, %v2342
  %v2344 = vsel %vm114, %v2326, %v2327
  %v2345 = vsel %vm203, %v2299, %v2344
  %v2346 = vsel %vm114, %v2327, %v2328
  %v2347 = vsel %vm203, %v2301, %v2346
  %v2348 = vsel %vm114, %v2328, %v2329
  %v2349 = vsel %vm203, %v2303, %v2348
  %v2350 = vsel %vm114, %v2330, %v2331
  %v2351 = vsel %vm203, %v2307, %v2350
  %v2352 = vsel %vm114, %v2331, %v2332
  %v2353 = vsel %vm203, %v2309, %v2352
  %v2354 = vsel %vm114, %v2332, %v2333
  %v2355 = vsel %vm203, %v2311, %v2354
  %v2356 = vsel %vm114, %v2334, %v2335
  %v2357 = vsel %vm203, %v2315, %v2356
  %v2358 = vsel %vm114, %v2335, %v2336
  %v2359 = vsel %vm203, %v2317, %v2358
  %v2360 = vsel %vm114, %v2336, %v2337
  %v2361 = vsel %vm203, %v2319, %v2360
  %2374 = vst [vmem:[#allocation4 + $0xc0] sm:$0xff] %v2339
  %2375 = vst [vmem:[#allocation4 + $0xc8] sm:$0xff] %v2341
  %2376 = vst [vmem:[#allocation4 + $0xd0] sm:$0xff] %v2343
  %2377 = vst [vmem:[#allocation4 + $0xd8] sm:$0xff] %v2345
  %2378 = vst [vmem:[#allocation4 + $0xe0] sm:$0xff] %v2347
  %2379 = vst [vmem:[#allocation4 + $0xe8] sm:$0xff] %v2349
  %2380 = vst [vmem:[#allocation4 + $0xf0] sm:$0xff] %v2351
  %2381 = vst [vmem:[#allocation4 + $0xf8] sm:$0xff] %v2353
  %2382 = vst [vmem:[#allocation4 + $0x100] sm:$0xff] %v2355
  %2383 = vst [vmem:[#allocation4 + $0x108] sm:$0xff] %v2357
  %2384 = vst [vmem:[#allocation4 + $0x110] sm:$0xff] %v2359
  %2385 = vst [vmem:[#allocation4 + $0x118] sm:$0xff] %v2361
  %v2386 = vld [vmem:[#allocation3] sm:$0xff]
  %v2387 = vld [vmem:[#allocation3 + $0x8] sm:$0xff]
  %v2388 = vld [vmem:[#allocation3 + $0x10] sm:$0xff]
  %v2389 = vld [vmem:[#allocation3 + $0x18] sm:$0xf]
  %v2390 = vld [vmem:[#allocation3 + $0x1c] sm:$0xff]
  %v2391 = vld [vmem:[#allocation3 + $0x24] sm:$0xff]
  %v2392 = vld [vmem:[#allocation3 + $0x2c] sm:$0xff]
  %v2393 = vld [vmem:[#allocation3 + $0x34] sm:$0xf]
  %v2394 = vld [vmem:[#allocation3 + $0x38] sm:$0xff]
  %v2395 = vld [vmem:[#allocation3 + $0x40] sm:$0xff]
  %v2396 = vld [vmem:[#allocation3 + $0x48] sm:$0xff]
  %v2397 = vld [vmem:[#allocation3 + $0x50] sm:$0xf]
  %v2398 = vld [vmem:[#allocation3 + $0x54] sm:$0xff]
  %v2399 = vld [vmem:[#allocation3 + $0x5c] sm:$0xff]
  %v2400 = vld [vmem:[#allocation3 + $0x64] sm:$0xff]
  %v2401 = vld [vmem:[#allocation3 + $0x6c] sm:$0xf]
  %2418 = vrot.lane.b32.xlu0 %v2386, 110
  %v2419 = vpop.permute.xlu0 %2418
  %2420 = vrot.lane.b32.xlu0 %v2387, 110
  %v2421 = vpop.permute.xlu0 %2420
  %2422 = vrot.lane.b32.xlu0 %v2388, 110
  %v2423 = vpop.permute.xlu0 %2422
  %2424 = vrot.lane.b32.xlu0 %v2389, 110
  %v2425 = vpop.permute.xlu0 %2424
  %2426 = vrot.lane.b32.xlu0 %v2390, 110
  %v2427 = vpop.permute.xlu0 %2426
  %2428 = vrot.lane.b32.xlu0 %v2391, 110
  %v2429 = vpop.permute.xlu0 %2428
  %2430 = vrot.lane.b32.xlu0 %v2392, 110
  %v2431 = vpop.permute.xlu0 %2430
  %2432 = vrot.lane.b32.xlu0 %v2393, 110
  %v2433 = vpop.permute.xlu0 %2432
  %2434 = vrot.lane.b32.xlu0 %v2394, 110
  %v2435 = vpop.permute.xlu0 %2434
  %2436 = vrot.lane.b32.xlu0 %v2395, 110
  %v2437 = vpop.permute.xlu0 %2436
  %2438 = vrot.lane.b32.xlu0 %v2396, 110
  %v2439 = vpop.permute.xlu0 %2438
  %2440 = vrot.lane.b32.xlu0 %v2397, 110
  %v2441 = vpop.permute.xlu0 %2440
  %2442 = vrot.lane.b32.xlu0 %v2398, 110
  %v2443 = vpop.permute.xlu0 %2442
  %2444 = vrot.lane.b32.xlu0 %v2399, 110
  %v2445 = vpop.permute.xlu0 %2444
  %2446 = vrot.lane.b32.xlu0 %v2400, 110
  %v2447 = vpop.permute.xlu0 %2446
  %2448 = vrot.lane.b32.xlu0 %v2401, 110
  %v2449 = vpop.permute.xlu0 %2448
  %v2450 = vrot.slane %v2419, 4
  %v2451 = vrot.slane %v2421, 4
  %v2452 = vrot.slane %v2423, 4
  %v2453 = vrot.slane %v2425, 4
  %v2454 = vrot.slane %v2427, 4
  %v2455 = vrot.slane %v2429, 4
  %v2456 = vrot.slane %v2431, 4
  %v2457 = vrot.slane %v2433, 4
  %v2458 = vrot.slane %v2435, 4
  %v2459 = vrot.slane %v2437, 4
  %v2460 = vrot.slane %v2439, 4
  %v2461 = vrot.slane %v2441, 4
  %v2462 = vrot.slane %v2443, 4
  %v2463 = vrot.slane %v2445, 4
  %v2464 = vrot.slane %v2447, 4
  %v2465 = vrot.slane %v2449, 4
  %v2466 = vsel %vm114, %v2450, %v2451
  %v2467 = vsel %vm290, %v2419, %v2466
  %v2468 = vsel %vm114, %v2451, %v2452
  %v2469 = vsel %vm290, %v2421, %v2468
  %v2470 = vsel %vm114, %v2452, %v2453
  %v2471 = vsel %vm290, %v2423, %v2470
  %v2472 = vsel %vm114, %v2454, %v2455
  %v2473 = vsel %vm290, %v2427, %v2472
  %v2474 = vsel %vm114, %v2455, %v2456
  %v2475 = vsel %vm290, %v2429, %v2474
  %v2476 = vsel %vm114, %v2456, %v2457
  %v2477 = vsel %vm290, %v2431, %v2476
  %v2478 = vsel %vm114, %v2458, %v2459
  %v2479 = vsel %vm290, %v2435, %v2478
  %v2480 = vsel %vm114, %v2459, %v2460
  %v2481 = vsel %vm290, %v2437, %v2480
  %v2482 = vsel %vm114, %v2460, %v2461
  %v2483 = vsel %vm290, %v2439, %v2482
  %v2484 = vsel %vm114, %v2462, %v2463
  %v2485 = vsel %vm290, %v2443, %v2484
  %v2486 = vsel %vm114, %v2463, %v2464
  %v2487 = vsel %vm290, %v2445, %v2486
  %v2488 = vsel %vm114, %v2464, %v2465
  %v2489 = vsel %vm290, %v2447, %v2488
  %2502 = vst [vmem:[#allocation4 + $0x120] sm:$0xff] %v2467
  %2503 = vst [vmem:[#allocation4 + $0x128] sm:$0xff] %v2469
  %2504 = vst [vmem:[#allocation4 + $0x130] sm:$0xff] %v2471
  %2505 = vst [vmem:[#allocation4 + $0x138] sm:$0xff] %v2473
  %2506 = vst [vmem:[#allocation4 + $0x140] sm:$0xff] %v2475
  %2507 = vst [vmem:[#allocation4 + $0x148] sm:$0xff] %v2477
  %2508 = vst [vmem:[#allocation4 + $0x150] sm:$0xff] %v2479
  %2509 = vst [vmem:[#allocation4 + $0x158] sm:$0xff] %v2481
  %2510 = vst [vmem:[#allocation4 + $0x160] sm:$0xff] %v2483
  %2511 = vst [vmem:[#allocation4 + $0x168] sm:$0xff] %v2485
  %2512 = vst [vmem:[#allocation4 + $0x170] sm:$0xff] %v2487
  %2513 = vst [vmem:[#allocation4 + $0x178] sm:$0xff] %v2489
  %v2514 = vld [vmem:[#allocation3] sm:$0xff]
  %v2515 = vld [vmem:[#allocation3 + $0x8] sm:$0xff]
  %v2516 = vld [vmem:[#allocation3 + $0x10] sm:$0xff]
  %v2517 = vld [vmem:[#allocation3 + $0x18] sm:$0xf]
  %v2518 = vld [vmem:[#allocation3 + $0x1c] sm:$0xff]
  %v2519 = vld [vmem:[#allocation3 + $0x24] sm:$0xff]
  %v2520 = vld [vmem:[#allocation3 + $0x2c] sm:$0xff]
  %v2521 = vld [vmem:[#allocation3 + $0x34] sm:$0xf]
  %v2522 = vld [vmem:[#allocation3 + $0x38] sm:$0xff]
  %v2523 = vld [vmem:[#allocation3 + $0x40] sm:$0xff]
  %v2524 = vld [vmem:[#allocation3 + $0x48] sm:$0xff]
  %v2525 = vld [vmem:[#allocation3 + $0x50] sm:$0xf]
  %v2526 = vld [vmem:[#allocation3 + $0x54] sm:$0xff]
  %v2527 = vld [vmem:[#allocation3 + $0x5c] sm:$0xff]
  %v2528 = vld [vmem:[#allocation3 + $0x64] sm:$0xff]
  %v2529 = vld [vmem:[#allocation3 + $0x6c] sm:$0xf]
  %2546 = vrot.lane.b32.xlu0 %v2514, 109
  %v2547 = vpop.permute.xlu0 %2546
  %2548 = vrot.lane.b32.xlu0 %v2515, 109
  %v2549 = vpop.permute.xlu0 %2548
  %2550 = vrot.lane.b32.xlu0 %v2516, 109
  %v2551 = vpop.permute.xlu0 %2550
  %2552 = vrot.lane.b32.xlu0 %v2517, 109
  %v2553 = vpop.permute.xlu0 %2552
  %2554 = vrot.lane.b32.xlu0 %v2518, 109
  %v2555 = vpop.permute.xlu0 %2554
  %2556 = vrot.lane.b32.xlu0 %v2519, 109
  %v2557 = vpop.permute.xlu0 %2556
  %2558 = vrot.lane.b32.xlu0 %v2520, 109
  %v2559 = vpop.permute.xlu0 %2558
  %2560 = vrot.lane.b32.xlu0 %v2521, 109
  %v2561 = vpop.permute.xlu0 %2560
  %2562 = vrot.lane.b32.xlu0 %v2522, 109
  %v2563 = vpop.permute.xlu0 %2562
  %2564 = vrot.lane.b32.xlu0 %v2523, 109
  %v2565 = vpop.permute.xlu0 %2564
  %2566 = vrot.lane.b32.xlu0 %v2524, 109
  %v2567 = vpop.permute.xlu0 %2566
  %2568 = vrot.lane.b32.xlu0 %v2525, 109
  %v2569 = vpop.permute.xlu0 %2568
  %2570 = vrot.lane.b32.xlu0 %v2526, 109
  %v2571 = vpop.permute.xlu0 %2570
  %2572 = vrot.lane.b32.xlu0 %v2527, 109
  %v2573 = vpop.permute.xlu0 %2572
  %2574 = vrot.lane.b32.xlu0 %v2528, 109
  %v2575 = vpop.permute.xlu0 %2574
  %2576 = vrot.lane.b32.xlu0 %v2529, 109
  %v2577 = vpop.permute.xlu0 %2576
  %v2578 = vrot.slane %v2547, 4
  %v2579 = vrot.slane %v2549, 4
  %v2580 = vrot.slane %v2551, 4
  %v2581 = vrot.slane %v2553, 4
  %v2582 = vrot.slane %v2555, 4
  %v2583 = vrot.slane %v2557, 4
  %v2584 = vrot.slane %v2559, 4
  %v2585 = vrot.slane %v2561, 4
  %v2586 = vrot.slane %v2563, 4
  %v2587 = vrot.slane %v2565, 4
  %v2588 = vrot.slane %v2567, 4
  %v2589 = vrot.slane %v2569, 4
  %v2590 = vrot.slane %v2571, 4
  %v2591 = vrot.slane %v2573, 4
  %v2592 = vrot.slane %v2575, 4
  %v2593 = vrot.slane %v2577, 4
  %v2594 = vsel %vm114, %v2578, %v2579
  %v2595 = vsel %vm377, %v2547, %v2594
  %v2596 = vsel %vm114, %v2579, %v2580
  %v2597 = vsel %vm377, %v2549, %v2596
  %v2598 = vsel %vm114, %v2580, %v2581
  %v2599 = vsel %vm377, %v2551, %v2598
  %v2600 = vsel %vm114, %v2582, %v2583
  %v2601 = vsel %vm377, %v2555, %v2600
  %v2602 = vsel %vm114, %v2583, %v2584
  %v2603 = vsel %vm377, %v2557, %v2602
  %v2604 = vsel %vm114, %v2584, %v2585
  %v2605 = vsel %vm377, %v2559, %v2604
  %v2606 = vsel %vm114, %v2586, %v2587
  %v2607 = vsel %vm377, %v2563, %v2606
  %v2608 = vsel %vm114, %v2587, %v2588
  %v2609 = vsel %vm377, %v2565, %v2608
  %v2610 = vsel %vm114, %v2588, %v2589
  %v2611 = vsel %vm377, %v2567, %v2610
  %v2612 = vsel %vm114, %v2590, %v2591
  %v2613 = vsel %vm377, %v2571, %v2612
  %v2614 = vsel %vm114, %v2591, %v2592
  %v2615 = vsel %vm377, %v2573, %v2614
  %v2616 = vsel %vm114, %v2592, %v2593
  %v2617 = vsel %vm377, %v2575, %v2616
  %2630 = vst [vmem:[#allocation4 + $0x180] sm:$0xff] %v2595
  %2631 = vst [vmem:[#allocation4 + $0x188] sm:$0xff] %v2597
  %2632 = vst [vmem:[#allocation4 + $0x190] sm:$0xff] %v2599
  %2633 = vst [vmem:[#allocation4 + $0x198] sm:$0xff] %v2601
  %2634 = vst [vmem:[#allocation4 + $0x1a0] sm:$0xff] %v2603
  %2635 = vst [vmem:[#allocation4 + $0x1a8] sm:$0xff] %v2605
  %2636 = vst [vmem:[#allocation4 + $0x1b0] sm:$0xff] %v2607
  %2637 = vst [vmem:[#allocation4 + $0x1b8] sm:$0xff] %v2609
  %2638 = vst [vmem:[#allocation4 + $0x1c0] sm:$0xff] %v2611
  %2639 = vst [vmem:[#allocation4 + $0x1c8] sm:$0xff] %v2613
  %2640 = vst [vmem:[#allocation4 + $0x1d0] sm:$0xff] %v2615
  %2641 = vst [vmem:[#allocation4 + $0x1d8] sm:$0xff] %v2617
  %v2642 = vld [vmem:[#allocation3] sm:$0xff]
  %v2643 = vld [vmem:[#allocation3 + $0x8] sm:$0xff]
  %v2644 = vld [vmem:[#allocation3 + $0x10] sm:$0xff]
  %v2645 = vld [vmem:[#allocation3 + $0x18] sm:$0xf]
  %v2646 = vld [vmem:[#allocation3 + $0x1c] sm:$0xff]
  %v2647 = vld [vmem:[#allocation3 + $0x24] sm:$0xff]
  %v2648 = vld [vmem:[#allocation3 + $0x2c] sm:$0xff]
  %v2649 = vld [vmem:[#allocation3 + $0x34] sm:$0xf]
  %v2650 = vld [vmem:[#allocation3 + $0x38] sm:$0xff]
  %v2651 = vld [vmem:[#allocation3 + $0x40] sm:$0xff]
  %v2652 = vld [vmem:[#allocation3 + $0x48] sm:$0xff]
  %v2653 = vld [vmem:[#allocation3 + $0x50] sm:$0xf]
  %v2654 = vld [vmem:[#allocation3 + $0x54] sm:$0xff]
  %v2655 = vld [vmem:[#allocation3 + $0x5c] sm:$0xff]
  %v2656 = vld [vmem:[#allocation3 + $0x64] sm:$0xff]
  %v2657 = vld [vmem:[#allocation3 + $0x6c] sm:$0xf]
  %2674 = vrot.lane.b32.xlu0 %v2642, 108
  %v2675 = vpop.permute.xlu0 %2674
  %2676 = vrot.lane.b32.xlu0 %v2643, 108
  %v2677 = vpop.permute.xlu0 %2676
  %2678 = vrot.lane.b32.xlu0 %v2644, 108
  %v2679 = vpop.permute.xlu0 %2678
  %2680 = vrot.lane.b32.xlu0 %v2645, 108
  %v2681 = vpop.permute.xlu0 %2680
  %2682 = vrot.lane.b32.xlu0 %v2646, 108
  %v2683 = vpop.permute.xlu0 %2682
  %2684 = vrot.lane.b32.xlu0 %v2647, 108
  %v2685 = vpop.permute.xlu0 %2684
  %2686 = vrot.lane.b32.xlu0 %v2648, 108
  %v2687 = vpop.permute.xlu0 %2686
  %2688 = vrot.lane.b32.xlu0 %v2649, 108
  %v2689 = vpop.permute.xlu0 %2688
  %2690 = vrot.lane.b32.xlu0 %v2650, 108
  %v2691 = vpop.permute.xlu0 %2690
  %2692 = vrot.lane.b32.xlu0 %v2651, 108
  %v2693 = vpop.permute.xlu0 %2692
  %2694 = vrot.lane.b32.xlu0 %v2652, 108
  %v2695 = vpop.permute.xlu0 %2694
  %2696 = vrot.lane.b32.xlu0 %v2653, 108
  %v2697 = vpop.permute.xlu0 %2696
  %2698 = vrot.lane.b32.xlu0 %v2654, 108
  %v2699 = vpop.permute.xlu0 %2698
  %2700 = vrot.lane.b32.xlu0 %v2655, 108
  %v2701 = vpop.permute.xlu0 %2700
  %2702 = vrot.lane.b32.xlu0 %v2656, 108
  %v2703 = vpop.permute.xlu0 %2702
  %2704 = vrot.lane.b32.xlu0 %v2657, 108
  %v2705 = vpop.permute.xlu0 %2704
  %v2706 = vrot.slane %v2675, 4
  %v2707 = vrot.slane %v2677, 4
  %v2708 = vrot.slane %v2679, 4
  %v2709 = vrot.slane %v2681, 4
  %v2710 = vrot.slane %v2683, 4
  %v2711 = vrot.slane %v2685, 4
  %v2712 = vrot.slane %v2687, 4
  %v2713 = vrot.slane %v2689, 4
  %v2714 = vrot.slane %v2691, 4
  %v2715 = vrot.slane %v2693, 4
  %v2716 = vrot.slane %v2695, 4
  %v2717 = vrot.slane %v2697, 4
  %v2718 = vrot.slane %v2699, 4
  %v2719 = vrot.slane %v2701, 4
  %v2720 = vrot.slane %v2703, 4
  %v2721 = vrot.slane %v2705, 4
  %v2722 = vsel %vm114, %v2706, %v2707
  %v2723 = vsel %vm464, %v2675, %v2722
  %v2724 = vsel %vm114, %v2707, %v2708
  %v2725 = vsel %vm464, %v2677, %v2724
  %v2726 = vsel %vm114, %v2708, %v2709
  %v2727 = vsel %vm464, %v2679, %v2726
  %v2728 = vsel %vm114, %v2710, %v2711
  %v2729 = vsel %vm464, %v2683, %v2728
  %v2730 = vsel %vm114, %v2711, %v2712
  %v2731 = vsel %vm464, %v2685, %v2730
  %v2732 = vsel %vm114, %v2712, %v2713
  %v2733 = vsel %vm464, %v2687, %v2732
  %v2734 = vsel %vm114, %v2714, %v2715
  %v2735 = vsel %vm464, %v2691, %v2734
  %v2736 = vsel %vm114, %v2715, %v2716
  %v2737 = vsel %vm464, %v2693, %v2736
  %v2738 = vsel %vm114, %v2716, %v2717
  %v2739 = vsel %vm464, %v2695, %v2738
  %v2740 = vsel %vm114, %v2718, %v2719
  %v2741 = vsel %vm464, %v2699, %v2740
  %v2742 = vsel %vm114, %v2719, %v2720
  %v2743 = vsel %vm464, %v2701, %v2742
  %v2744 = vsel %vm114, %v2720, %v2721
  %v2745 = vsel %vm464, %v2703, %v2744
  %2758 = vst [vmem:[#allocation4 + $0x1e0] sm:$0xff] %v2723
  %2759 = vst [vmem:[#allocation4 + $0x1e8] sm:$0xff] %v2725
  %2760 = vst [vmem:[#allocation4 + $0x1f0] sm:$0xff] %v2727
  %2761 = vst [vmem:[#allocation4 + $0x1f8] sm:$0xff] %v2729
  %2762 = vst [vmem:[#allocation4 + $0x200] sm:$0xff] %v2731
  %2763 = vst [vmem:[#allocation4 + $0x208] sm:$0xff] %v2733
  %2764 = vst [vmem:[#allocation4 + $0x210] sm:$0xff] %v2735
  %2765 = vst [vmem:[#allocation4 + $0x218] sm:$0xff] %v2737
  %2766 = vst [vmem:[#allocation4 + $0x220] sm:$0xff] %v2739
  %2767 = vst [vmem:[#allocation4 + $0x228] sm:$0xff] %v2741
  %2768 = vst [vmem:[#allocation4 + $0x230] sm:$0xff] %v2743
  %2769 = vst [vmem:[#allocation4 + $0x238] sm:$0xff] %v2745
  %v2770 = vld [vmem:[#allocation3] sm:$0xff]
  %v2771 = vld [vmem:[#allocation3 + $0x8] sm:$0xff]
  %v2772 = vld [vmem:[#allocation3 + $0x10] sm:$0xff]
  %v2773 = vld [vmem:[#allocation3 + $0x18] sm:$0xf]
  %v2774 = vld [vmem:[#allocation3 + $0x1c] sm:$0xff]
  %v2775 = vld [vmem:[#allocation3 + $0x24] sm:$0xff]
  %v2776 = vld [vmem:[#allocation3 + $0x2c] sm:$0xff]
  %v2777 = vld [vmem:[#allocation3 + $0x34] sm:$0xf]
  %v2778 = vld [vmem:[#allocation3 + $0x38] sm:$0xff]
  %v2779 = vld [vmem:[#allocation3 + $0x40] sm:$0xff]
  %v2780 = vld [vmem:[#allocation3 + $0x48] sm:$0xff]
  %v2781 = vld [vmem:[#allocation3 + $0x50] sm:$0xf]
  %v2782 = vld [vmem:[#allocation3 + $0x54] sm:$0xff]
  %v2783 = vld [vmem:[#allocation3 + $0x5c] sm:$0xff]
  %v2784 = vld [vmem:[#allocation3 + $0x64] sm:$0xff]
  %v2785 = vld [vmem:[#allocation3 + $0x6c] sm:$0xf]
  %2802 = vrot.lane.b32.xlu0 %v2770, 92
  %v2803 = vpop.permute.xlu0 %2802
  %2804 = vrot.lane.b32.xlu0 %v2771, 92
  %v2805 = vpop.permute.xlu0 %2804
  %2806 = vrot.lane.b32.xlu0 %v2772, 92
  %v2807 = vpop.permute.xlu0 %2806
  %2808 = vrot.lane.b32.xlu0 %v2773, 92
  %v2809 = vpop.permute.xlu0 %2808
  %2810 = vrot.lane.b32.xlu0 %v2774, 92
  %v2811 = vpop.permute.xlu0 %2810
  %2812 = vrot.lane.b32.xlu0 %v2775, 92
  %v2813 = vpop.permute.xlu0 %2812
  %2814 = vrot.lane.b32.xlu0 %v2776, 92
  %v2815 = vpop.permute.xlu0 %2814
  %2816 = vrot.lane.b32.xlu0 %v2777, 92
  %v2817 = vpop.permute.xlu0 %2816
  %2818 = vrot.lane.b32.xlu0 %v2778, 92
  %v2819 = vpop.permute.xlu0 %2818
  %2820 = vrot.lane.b32.xlu0 %v2779, 92
  %v2821 = vpop.permute.xlu0 %2820
  %2822 = vrot.lane.b32.xlu0 %v2780, 92
  %v2823 = vpop.permute.xlu0 %2822
  %2824 = vrot.lane.b32.xlu0 %v2781, 92
  %v2825 = vpop.permute.xlu0 %2824
  %2826 = vrot.lane.b32.xlu0 %v2782, 92
  %v2827 = vpop.permute.xlu0 %2826
  %2828 = vrot.lane.b32.xlu0 %v2783, 92
  %v2829 = vpop.permute.xlu0 %2828
  %2830 = vrot.lane.b32.xlu0 %v2784, 92
  %v2831 = vpop.permute.xlu0 %2830
  %2832 = vrot.lane.b32.xlu0 %v2785, 92
  %v2833 = vpop.permute.xlu0 %2832
  %v2834 = vrot.slane %v2803, 4
  %v2835 = vrot.slane %v2805, 4
  %v2836 = vrot.slane %v2807, 4
  %v2837 = vrot.slane %v2809, 4
  %v2838 = vrot.slane %v2811, 4
  %v2839 = vrot.slane %v2813, 4
  %v2840 = vrot.slane %v2815, 4
  %v2841 = vrot.slane %v2817, 4
  %v2842 = vrot.slane %v2819, 4
  %v2843 = vrot.slane %v2821, 4
  %v2844 = vrot.slane %v2823, 4
  %v2845 = vrot.slane %v2825, 4
  %v2846 = vrot.slane %v2827, 4
  %v2847 = vrot.slane %v2829, 4
  %v2848 = vrot.slane %v2831, 4
  %v2849 = vrot.slane %v2833, 4
  %v2850 = vsel %vm114, %v2834, %v2835
  %v2851 = vsel %vm551, %v2803, %v2850
  %v2852 = vsel %vm114, %v2835, %v2836
  %v2853 = vsel %vm551, %v2805, %v2852
  %v2854 = vsel %vm114, %v2836, %v2837
  %v2855 = vsel %vm551, %v2807, %v2854
  %v2856 = vsel %vm114, %v2838, %v2839
  %v2857 = vsel %vm551, %v2811, %v2856
  %v2858 = vsel %vm114, %v2839, %v2840
  %v2859 = vsel %vm551, %v2813, %v2858
  %v2860 = vsel %vm114, %v2840, %v2841
  %v2861 = vsel %vm551, %v2815, %v2860
  %v2862 = vsel %vm114, %v2842, %v2843
  %v2863 = vsel %vm551, %v2819, %v2862
  %v2864 = vsel %vm114, %v2843, %v2844
  %v2865 = vsel %vm551, %v2821, %v2864
  %v2866 = vsel %vm114, %v2844, %v2845
  %v2867 = vsel %vm551, %v2823, %v2866
  %v2868 = vsel %vm114, %v2846, %v2847
  %v2869 = vsel %vm551, %v2827, %v2868
  %v2870 = vsel %vm114, %v2847, %v2848
  %v2871 = vsel %vm551, %v2829, %v2870
  %v2872 = vsel %vm114, %v2848, %v2849
  %v2873 = vsel %vm551, %v2831, %v2872
  %2886 = vst [vmem:[#allocation4 + $0x240] sm:$0xff] %v2851
  %2887 = vst [vmem:[#allocation4 + $0x248] sm:$0xff] %v2853
  %2888 = vst [vmem:[#allocation4 + $0x250] sm:$0xff] %v2855
  %2889 = vst [vmem:[#allocation4 + $0x258] sm:$0xff] %v2857
  %2890 = vst [vmem:[#allocation4 + $0x260] sm:$0xff] %v2859
  %2891 = vst [vmem:[#allocation4 + $0x268] sm:$0xff] %v2861
  %2892 = vst [vmem:[#allocation4 + $0x270] sm:$0xff] %v2863
  %2893 = vst [vmem:[#allocation4 + $0x278] sm:$0xff] %v2865
  %2894 = vst [vmem:[#allocation4 + $0x280] sm:$0xff] %v2867
  %2895 = vst [vmem:[#allocation4 + $0x288] sm:$0xff] %v2869
  %2896 = vst [vmem:[#allocation4 + $0x290] sm:$0xff] %v2871
  %2897 = vst [vmem:[#allocation4 + $0x298] sm:$0xff] %v2873
  %v2898 = vld [vmem:[#allocation3] sm:$0xff]
  %v2899 = vld [vmem:[#allocation3 + $0x8] sm:$0xff]
  %v2900 = vld [vmem:[#allocation3 + $0x10] sm:$0xff]
  %v2901 = vld [vmem:[#allocation3 + $0x18] sm:$0xf]
  %v2902 = vld [vmem:[#allocation3 + $0x1c] sm:$0xff]
  %v2903 = vld [vmem:[#allocation3 + $0x24] sm:$0xff]
  %v2904 = vld [vmem:[#allocation3 + $0x2c] sm:$0xff]
  %v2905 = vld [vmem:[#allocation3 + $0x34] sm:$0xf]
  %v2906 = vld [vmem:[#allocation3 + $0x38] sm:$0xff]
  %v2907 = vld [vmem:[#allocation3 + $0x40] sm:$0xff]
  %v2908 = vld [vmem:[#allocation3 + $0x48] sm:$0xff]
  %v2909 = vld [vmem:[#allocation3 + $0x50] sm:$0xf]
  %v2910 = vld [vmem:[#allocation3 + $0x54] sm:$0xff]
  %v2911 = vld [vmem:[#allocation3 + $0x5c] sm:$0xff]
  %v2912 = vld [vmem:[#allocation3 + $0x64] sm:$0xff]
  %v2913 = vld [vmem:[#allocation3 + $0x6c] sm:$0xf]
  %2930 = vrot.lane.b32.xlu0 %v2898, 91
  %v2931 = vpop.permute.xlu0 %2930
  %2932 = vrot.lane.b32.xlu0 %v2899, 91
  %v2933 = vpop.permute.xlu0 %2932
  %2934 = vrot.lane.b32.xlu0 %v2900, 91
  %v2935 = vpop.permute.xlu0 %2934
  %2936 = vrot.lane.b32.xlu0 %v2901, 91
  %v2937 = vpop.permute.xlu0 %2936
  %2938 = vrot.lane.b32.xlu0 %v2902, 91
  %v2939 = vpop.permute.xlu0 %2938
  %2940 = vrot.lane.b32.xlu0 %v2903, 91
  %v2941 = vpop.permute.xlu0 %2940
  %2942 = vrot.lane.b32.xlu0 %v2904, 91
  %v2943 = vpop.permute.xlu0 %2942
  %2944 = vrot.lane.b32.xlu0 %v2905, 91
  %v2945 = vpop.permute.xlu0 %2944
  %2946 = vrot.lane.b32.xlu0 %v2906, 91
  %v2947 = vpop.permute.xlu0 %2946
  %2948 = vrot.lane.b32.xlu0 %v2907, 91
  %v2949 = vpop.permute.xlu0 %2948
  %2950 = vrot.lane.b32.xlu0 %v2908, 91
  %v2951 = vpop.permute.xlu0 %2950
  %2952 = vrot.lane.b32.xlu0 %v2909, 91
  %v2953 = vpop.permute.xlu0 %2952
  %2954 = vrot.lane.b32.xlu0 %v2910, 91
  %v2955 = vpop.permute.xlu0 %2954
  %2956 = vrot.lane.b32.xlu0 %v2911, 91
  %v2957 = vpop.permute.xlu0 %2956
  %2958 = vrot.lane.b32.xlu0 %v2912, 91
  %v2959 = vpop.permute.xlu0 %2958
  %2960 = vrot.lane.b32.xlu0 %v2913, 91
  %v2961 = vpop.permute.xlu0 %2960
  %v2962 = vrot.slane %v2931, 4
  %v2963 = vrot.slane %v2933, 4
  %v2964 = vrot.slane %v2935, 4
  %v2965 = vrot.slane %v2937, 4
  %v2966 = vrot.slane %v2939, 4
  %v2967 = vrot.slane %v2941, 4
  %v2968 = vrot.slane %v2943, 4
  %v2969 = vrot.slane %v2945, 4
  %v2970 = vrot.slane %v2947, 4
  %v2971 = vrot.slane %v2949, 4
  %v2972 = vrot.slane %v2951, 4
  %v2973 = vrot.slane %v2953, 4
  %v2974 = vrot.slane %v2955, 4
  %v2975 = vrot.slane %v2957, 4
  %v2976 = vrot.slane %v2959, 4
  %v2977 = vrot.slane %v2961, 4
  %v2978 = vsel %vm114, %v2962, %v2963
  %v2979 = vsel %vm638, %v2931, %v2978
  %v2980 = vsel %vm114, %v2963, %v2964
  %v2981 = vsel %vm638, %v2933, %v2980
  %v2982 = vsel %vm114, %v2964, %v2965
  %v2983 = vsel %vm638, %v2935, %v2982
  %v2984 = vsel %vm114, %v2966, %v2967
  %v2985 = vsel %vm638, %v2939, %v2984
  %v2986 = vsel %vm114, %v2967, %v2968
  %v2987 = vsel %vm638, %v2941, %v2986
  %v2988 = vsel %vm114, %v2968, %v2969
  %v2989 = vsel %vm638, %v2943, %v2988
  %v2990 = vsel %vm114, %v2970, %v2971
  %v2991 = vsel %vm638, %v2947, %v2990
  %v2992 = vsel %vm114, %v2971, %v2972
  %v2993 = vsel %vm638, %v2949, %v2992
  %v2994 = vsel %vm114, %v2972, %v2973
  %v2995 = vsel %vm638, %v2951, %v2994
  %v2996 = vsel %vm114, %v2974, %v2975
  %v2997 = vsel %vm638, %v2955, %v2996
  %v2998 = vsel %vm114, %v2975, %v2976
  %v2999 = vsel %vm638, %v2957, %v2998
  %v3000 = vsel %vm114, %v2976, %v2977
  %v3001 = vsel %vm638, %v2959, %v3000
  %3014 = vst [vmem:[#allocation4 + $0x2a0] sm:$0xff] %v2979
  %3015 = vst [vmem:[#allocation4 + $0x2a8] sm:$0xff] %v2981
  %3016 = vst [vmem:[#allocation4 + $0x2b0] sm:$0xff] %v2983
  %3017 = vst [vmem:[#allocation4 + $0x2b8] sm:$0xff] %v2985
  %3018 = vst [vmem:[#allocation4 + $0x2c0] sm:$0xff] %v2987
  %3019 = vst [vmem:[#allocation4 + $0x2c8] sm:$0xff] %v2989
  %3020 = vst [vmem:[#allocation4 + $0x2d0] sm:$0xff] %v2991
  %3021 = vst [vmem:[#allocation4 + $0x2d8] sm:$0xff] %v2993
  %3022 = vst [vmem:[#allocation4 + $0x2e0] sm:$0xff] %v2995
  %3023 = vst [vmem:[#allocation4 + $0x2e8] sm:$0xff] %v2997
  %3024 = vst [vmem:[#allocation4 + $0x2f0] sm:$0xff] %v2999
  %3025 = vst [vmem:[#allocation4 + $0x2f8] sm:$0xff] %v3001
  %v3026 = vld [vmem:[#allocation3] sm:$0xff]
  %v3027 = vld [vmem:[#allocation3 + $0x8] sm:$0xff]
  %v3028 = vld [vmem:[#allocation3 + $0x10] sm:$0xff]
  %v3029 = vld [vmem:[#allocation3 + $0x18] sm:$0xf]
  %v3030 = vld [vmem:[#allocation3 + $0x1c] sm:$0xff]
  %v3031 = vld [vmem:[#allocation3 + $0x24] sm:$0xff]
  %v3032 = vld [vmem:[#allocation3 + $0x2c] sm:$0xff]
  %v3033 = vld [vmem:[#allocation3 + $0x34] sm:$0xf]
  %v3034 = vld [vmem:[#allocation3 + $0x38] sm:$0xff]
  %v3035 = vld [vmem:[#allocation3 + $0x40] sm:$0xff]
  %v3036 = vld [vmem:[#allocation3 + $0x48] sm:$0xff]
  %v3037 = vld [vmem:[#allocation3 + $0x50] sm:$0xf]
  %v3038 = vld [vmem:[#allocation3 + $0x54] sm:$0xff]
  %v3039 = vld [vmem:[#allocation3 + $0x5c] sm:$0xff]
  %v3040 = vld [vmem:[#allocation3 + $0x64] sm:$0xff]
  %v3041 = vld [vmem:[#allocation3 + $0x6c] sm:$0xf]
  %3058 = vrot.lane.b32.xlu0 %v3026, 90
  %v3059 = vpop.permute.xlu0 %3058
  %3060 = vrot.lane.b32.xlu0 %v3027, 90
  %v3061 = vpop.permute.xlu0 %3060
  %3062 = vrot.lane.b32.xlu0 %v3028, 90
  %v3063 = vpop.permute.xlu0 %3062
  %3064 = vrot.lane.b32.xlu0 %v3029, 90
  %v3065 = vpop.permute.xlu0 %3064
  %3066 = vrot.lane.b32.xlu0 %v3030, 90
  %v3067 = vpop.permute.xlu0 %3066
  %3068 = vrot.lane.b32.xlu0 %v3031, 90
  %v3069 = vpop.permute.xlu0 %3068
  %3070 = vrot.lane.b32.xlu0 %v3032, 90
  %v3071 = vpop.permute.xlu0 %3070
  %3072 = vrot.lane.b32.xlu0 %v3033, 90
  %v3073 = vpop.permute.xlu0 %3072
  %3074 = vrot.lane.b32.xlu0 %v3034, 90
  %v3075 = vpop.permute.xlu0 %3074
  %3076 = vrot.lane.b32.xlu0 %v3035, 90
  %v3077 = vpop.permute.xlu0 %3076
  %3078 = vrot.lane.b32.xlu0 %v3036, 90
  %v3079 = vpop.permute.xlu0 %3078
  %3080 = vrot.lane.b32.xlu0 %v3037, 90
  %v3081 = vpop.permute.xlu0 %3080
  %3082 = vrot.lane.b32.xlu0 %v3038, 90
  %v3083 = vpop.permute.xlu0 %3082
  %3084 = vrot.lane.b32.xlu0 %v3039, 90
  %v3085 = vpop.permute.xlu0 %3084
  %3086 = vrot.lane.b32.xlu0 %v3040, 90
  %v3087 = vpop.permute.xlu0 %3086
  %3088 = vrot.lane.b32.xlu0 %v3041, 90
  %v3089 = vpop.permute.xlu0 %3088
  %v3090 = vrot.slane %v3059, 4
  %v3091 = vrot.slane %v3061, 4
  %v3092 = vrot.slane %v3063, 4
  %v3093 = vrot.slane %v3065, 4
  %v3094 = vrot.slane %v3067, 4
  %v3095 = vrot.slane %v3069, 4
  %v3096 = vrot.slane %v3071, 4
  %v3097 = vrot.slane %v3073, 4
  %v3098 = vrot.slane %v3075, 4
  %v3099 = vrot.slane %v3077, 4
  %v3100 = vrot.slane %v3079, 4
  %v3101 = vrot.slane %v3081, 4
  %v3102 = vrot.slane %v3083, 4
  %v3103 = vrot.slane %v3085, 4
  %v3104 = vrot.slane %v3087, 4
  %v3105 = vrot.slane %v3089, 4
  %v3106 = vsel %vm114, %v3090, %v3091
  %v3107 = vsel %vm725, %v3059, %v3106
  %v3108 = vsel %vm114, %v3091, %v3092
  %v3109 = vsel %vm725, %v3061, %v3108
  %v3110 = vsel %vm114, %v3092, %v3093
  %v3111 = vsel %vm725, %v3063, %v3110
  %v3112 = vsel %vm114, %v3094, %v3095
  %v3113 = vsel %vm725, %v3067, %v3112
  %v3114 = vsel %vm114, %v3095, %v3096
  %v3115 = vsel %vm725, %v3069, %v3114
  %v3116 = vsel %vm114, %v3096, %v3097
  %v3117 = vsel %vm725, %v3071, %v3116
  %v3118 = vsel %vm114, %v3098, %v3099
  %v3119 = vsel %vm725, %v3075, %v3118
  %v3120 = vsel %vm114, %v3099, %v3100
  %v3121 = vsel %vm725, %v3077, %v3120
  %v3122 = vsel %vm114, %v3100, %v3101
  %v3123 = vsel %vm725, %v3079, %v3122
  %v3124 = vsel %vm114, %v3102, %v3103
  %v3125 = vsel %vm725, %v3083, %v3124
  %v3126 = vsel %vm114, %v3103, %v3104
  %v3127 = vsel %vm725, %v3085, %v3126
  %v3128 = vsel %vm114, %v3104, %v3105
  %v3129 = vsel %vm725, %v3087, %v3128
  %3142 = vst [vmem:[#allocation4 + $0x300] sm:$0xff] %v3107
  %3143 = vst [vmem:[#allocation4 + $0x308] sm:$0xff] %v3109
  %3144 = vst [vmem:[#allocation4 + $0x310] sm:$0xff] %v3111
  %3145 = vst [vmem:[#allocation4 + $0x318] sm:$0xff] %v3113
  %3146 = vst [vmem:[#allocation4 + $0x320] sm:$0xff] %v3115
  %3147 = vst [vmem:[#allocation4 + $0x328] sm:$0xff] %v3117
  %3148 = vst [vmem:[#allocation4 + $0x330] sm:$0xff] %v3119
  %3149 = vst [vmem:[#allocation4 + $0x338] sm:$0xff] %v3121
  %3150 = vst [vmem:[#allocation4 + $0x340] sm:$0xff] %v3123
  %3151 = vst [vmem:[#allocation4 + $0x348] sm:$0xff] %v3125
  %3152 = vst [vmem:[#allocation4 + $0x350] sm:$0xff] %v3127
  %3153 = vst [vmem:[#allocation4 + $0x358] sm:$0xff] %v3129
  %v3154 = vld [vmem:[%s5] sm:$0x3f]
  %v3155 = vld [vmem:[#allocation4] sm:$0xff]
  %v3156 = vld [vmem:[#allocation4 + $0x8] sm:$0xff]
  %v3157 = vld [vmem:[#allocation4 + $0x10] sm:$0xff]
  %v3158 = vld [vmem:[#allocation4 + $0x18] sm:$0xff]
  %v3159 = vld [vmem:[#allocation4 + $0x20] sm:$0xff]
  %v3160 = vld [vmem:[#allocation4 + $0x28] sm:$0xff]
  %v3161 = vld [vmem:[#allocation4 + $0x30] sm:$0xff]
  %v3162 = vld [vmem:[#allocation4 + $0x38] sm:$0xff]
  %v3163 = vld [vmem:[#allocation4 + $0x40] sm:$0xff]
  %v3164 = vld [vmem:[#allocation4 + $0x48] sm:$0xff]
  %v3165 = vld [vmem:[#allocation4 + $0x50] sm:$0xff]
  %v3166 = vld [vmem:[#allocation4 + $0x58] sm:$0xff]
  %v3167 = vld [vmem:[#allocation4 + $0x60] sm:$0xff]
  %v3168 = vld [vmem:[#allocation4 + $0x68] sm:$0xff]
  %v3169 = vld [vmem:[#allocation4 + $0x70] sm:$0xff]
  %v3170 = vld [vmem:[#allocation4 + $0x78] sm:$0xff]
  %v3171 = vld [vmem:[#allocation4 + $0x80] sm:$0xff]
  %v3172 = vld [vmem:[#allocation4 + $0x88] sm:$0xff]
  %v3173 = vld [vmem:[#allocation4 + $0x90] sm:$0xff]
  %v3174 = vld [vmem:[#allocation4 + $0x98] sm:$0xff]
  %v3175 = vld [vmem:[#allocation4 + $0xa0] sm:$0xff]
  %v3176 = vld [vmem:[#allocation4 + $0xa8] sm:$0xff]
  %v3177 = vld [vmem:[#allocation4 + $0xb0] sm:$0xff]
  %v3178 = vld [vmem:[#allocation4 + $0xb8] sm:$0xff]
  %v3179 = vld [vmem:[#allocation4 + $0xc0] sm:$0xff]
  %v3180 = vld [vmem:[#allocation4 + $0xc8] sm:$0xff]
  %v3181 = vld [vmem:[#allocation4 + $0xd0] sm:$0xff]
  %v3182 = vld [vmem:[#allocation4 + $0xd8] sm:$0xff]
  %v3183 = vld [vmem:[#allocation4 + $0xe0] sm:$0xff]
  %v3184 = vld [vmem:[#allocation4 + $0xe8] sm:$0xff]
  %v3185 = vld [vmem:[#allocation4 + $0xf0] sm:$0xff]
  %v3186 = vld [vmem:[#allocation4 + $0xf8] sm:$0xff]
  %v3187 = vld [vmem:[#allocation4 + $0x100] sm:$0xff]
  %v3188 = vld [vmem:[#allocation4 + $0x108] sm:$0xff]
  %v3189 = vld [vmem:[#allocation4 + $0x110] sm:$0xff]
  %v3190 = vld [vmem:[#allocation4 + $0x118] sm:$0xff]
  %v3191 = vld [vmem:[#allocation4 + $0x120] sm:$0xff]
  %v3192 = vld [vmem:[#allocation4 + $0x128] sm:$0xff]
  %v3193 = vld [vmem:[#allocation4 + $0x130] sm:$0xff]
  %v3194 = vld [vmem:[#allocation4 + $0x138] sm:$0xff]
  %v3195 = vld [vmem:[#allocation4 + $0x140] sm:$0xff]
  %v3196 = vld [vmem:[#allocation4 + $0x148] sm:$0xff]
  %v3197 = vld [vmem:[#allocation4 + $0x150] sm:$0xff]
  %v3198 = vld [vmem:[#allocation4 + $0x158] sm:$0xff]
  %v3199 = vld [vmem:[#allocation4 + $0x160] sm:$0xff]
  %v3200 = vld [vmem:[#allocation4 + $0x168] sm:$0xff]
  %v3201 = vld [vmem:[#allocation4 + $0x170] sm:$0xff]
  %v3202 = vld [vmem:[#allocation4 + $0x178] sm:$0xff]
  %v3203 = vld [vmem:[#allocation4 + $0x180] sm:$0xff]
  %v3204 = vld [vmem:[#allocation4 + $0x188] sm:$0xff]
  %v3205 = vld [vmem:[#allocation4 + $0x190] sm:$0xff]
  %v3206 = vld [vmem:[#allocation4 + $0x198] sm:$0xff]
  %v3207 = vld [vmem:[#allocation4 + $0x1a0] sm:$0xff]
  %v3208 = vld [vmem:[#allocation4 + $0x1a8] sm:$0xff]
  %v3209 = vld [vmem:[#allocation4 + $0x1b0] sm:$0xff]
  %v3210 = vld [vmem:[#allocation4 + $0x1b8] sm:$0xff]
  %v3211 = vld [vmem:[#allocation4 + $0x1c0] sm:$0xff]
  %v3212 = vld [vmem:[#allocation4 + $0x1c8] sm:$0xff]
  %v3213 = vld [vmem:[#allocation4 + $0x1d0] sm:$0xff]
  %v3214 = vld [vmem:[#allocation4 + $0x1d8] sm:$0xff]
  %v3215 = vld [vmem:[#allocation4 + $0x1e0] sm:$0xff]
  %v3216 = vld [vmem:[#allocation4 + $0x1e8] sm:$0xff]
  %v3217 = vld [vmem:[#allocation4 + $0x1f0] sm:$0xff]
  %v3218 = vld [vmem:[#allocation4 + $0x1f8] sm:$0xff]
  %v3219 = vld [vmem:[#allocation4 + $0x200] sm:$0xff]
  %v3220 = vld [vmem:[#allocation4 + $0x208] sm:$0xff]
  %v3221 = vld [vmem:[#allocation4 + $0x210] sm:$0xff]
  %v3222 = vld [vmem:[#allocation4 + $0x218] sm:$0xff]
  %v3223 = vld [vmem:[#allocation4 + $0x220] sm:$0xff]
  %v3224 = vld [vmem:[#allocation4 + $0x228] sm:$0xff]
  %v3225 = vld [vmem:[#allocation4 + $0x230] sm:$0xff]
  %v3226 = vld [vmem:[#allocation4 + $0x238] sm:$0xff]
  %v3227 = vld [vmem:[#allocation4 + $0x240] sm:$0xff]
  %v3228 = vld [vmem:[#allocation4 + $0x248] sm:$0xff]
  %v3229 = vld [vmem:[#allocation4 + $0x250] sm:$0xff]
  %v3230 = vld [vmem:[#allocation4 + $0x258] sm:$0xff]
  %v3231 = vld [vmem:[#allocation4 + $0x260] sm:$0xff]
  %v3232 = vld [vmem:[#allocation4 + $0x268] sm:$0xff]
  %v3233 = vld [vmem:[#allocation4 + $0x270] sm:$0xff]
  %v3234 = vld [vmem:[#allocation4 + $0x278] sm:$0xff]
  %v3235 = vld [vmem:[#allocation4 + $0x280] sm:$0xff]
  %v3236 = vld [vmem:[#allocation4 + $0x288] sm:$0xff]
  %v3237 = vld [vmem:[#allocation4 + $0x290] sm:$0xff]
  %v3238 = vld [vmem:[#allocation4 + $0x298] sm:$0xff]
  %v3239 = vld [vmem:[#allocation4 + $0x2a0] sm:$0xff]
  %v3240 = vld [vmem:[#allocation4 + $0x2a8] sm:$0xff]
  %v3241 = vld [vmem:[#allocation4 + $0x2b0] sm:$0xff]
  %v3242 = vld [vmem:[#allocation4 + $0x2b8] sm:$0xff]
  %v3243 = vld [vmem:[#allocation4 + $0x2c0] sm:$0xff]
  %v3244 = vld [vmem:[#allocation4 + $0x2c8] sm:$0xff]
  %v3245 = vld [vmem:[#allocation4 + $0x2d0] sm:$0xff]
  %v3246 = vld [vmem:[#allocation4 + $0x2d8] sm:$0xff]
  %v3247 = vld [vmem:[#allocation4 + $0x2e0] sm:$0xff]
  %v3248 = vld [vmem:[#allocation4 + $0x2e8] sm:$0xff]
  %v3249 = vld [vmem:[#allocation4 + $0x2f0] sm:$0xff]
  %v3250 = vld [vmem:[#allocation4 + $0x2f8] sm:$0xff]
  %v3251 = vld [vmem:[#allocation4 + $0x300] sm:$0xff]
  %v3252 = vld [vmem:[#allocation4 + $0x308] sm:$0xff]
  %v3253 = vld [vmem:[#allocation4 + $0x310] sm:$0xff]
  %v3254 = vld [vmem:[#allocation4 + $0x318] sm:$0xff]
  %v3255 = vld [vmem:[#allocation4 + $0x320] sm:$0xff]
  %v3256 = vld [vmem:[#allocation4 + $0x328] sm:$0xff]
  %v3257 = vld [vmem:[#allocation4 + $0x330] sm:$0xff]
  %v3258 = vld [vmem:[#allocation4 + $0x338] sm:$0xff]
  %v3259 = vld [vmem:[#allocation4 + $0x340] sm:$0xff]
  %v3260 = vld [vmem:[#allocation4 + $0x348] sm:$0xff]
  %v3261 = vld [vmem:[#allocation4 + $0x350] sm:$0xff]
  %v3262 = vld [vmem:[#allocation4 + $0x358] sm:$0xff]
  %3264 = vst [vmem:[#allocation1] ss:$4 sm:$0xff] %v3154
  %v3265 = vld.sshfl [vmem:[#allocation1] sm:$0xff pattern:$0x73625140]
  %v3266 = vld.sshfl [vmem:[#allocation1 + $0x8] sm:$0xff pattern:$0x73625140]
  %v3267 = vld.sshfl [vmem:[#allocation1 + $0x10] sm:$0xff pattern:$0x73625140]
  %v3378 = vunpack.c.l.b16 %v3155
  %v3379 = vunpack.c.h.b16 %v3155
  %v3380 = vunpack.c.l.b16 %v3156
  %v3381 = vunpack.c.h.b16 %v3156
  %v3382 = vunpack.c.l.b16 %v3157
  %v3383 = vunpack.c.h.b16 %v3157
  %v3384 = vunpack.c.l.b16 %v3158
  %v3385 = vunpack.c.h.b16 %v3158
  %v3386 = vunpack.c.l.b16 %v3159
  %v3387 = vunpack.c.h.b16 %v3159
  %v3388 = vunpack.c.l.b16 %v3160
  %v3389 = vunpack.c.h.b16 %v3160
  %v3390 = vunpack.c.l.b16 %v3161
  %v3391 = vunpack.c.h.b16 %v3161
  %v3392 = vunpack.c.l.b16 %v3162
  %v3393 = vunpack.c.h.b16 %v3162
  %v3394 = vunpack.c.l.b16 %v3163
  %v3395 = vunpack.c.h.b16 %v3163
  %v3396 = vunpack.c.l.b16 %v3164
  %v3397 = vunpack.c.h.b16 %v3164
  %v3398 = vunpack.c.l.b16 %v3165
  %v3399 = vunpack.c.h.b16 %v3165
  %v3400 = vunpack.c.l.b16 %v3166
  %v3401 = vunpack.c.h.b16 %v3166
  %v3402 = vunpack.c.l.b16 %v3167
  %v3403 = vunpack.c.h.b16 %v3167
  %v3404 = vunpack.c.l.b16 %v3168
  %v3405 = vunpack.c.h.b16 %v3168
  %v3406 = vunpack.c.l.b16 %v3169
  %v3407 = vunpack.c.h.b16 %v3169
  %v3408 = vunpack.c.l.b16 %v3170
  %v3409 = vunpack.c.h.b16 %v3170
  %v3410 = vunpack.c.l.b16 %v3171
  %v3411 = vunpack.c.h.b16 %v3171
  %v3412 = vunpack.c.l.b16 %v3172
  %v3413 = vunpack.c.h.b16 %v3172
  %v3414 = vunpack.c.l.b16 %v3173
  %v3415 = vunpack.c.h.b16 %v3173
  %v3416 = vunpack.c.l.b16 %v3174
  %v3417 = vunpack.c.h.b16 %v3174
  %v3418 = vunpack.c.l.b16 %v3175
  %v3419 = vunpack.c.h.b16 %v3175
  %v3420 = vunpack.c.l.b16 %v3176
  %v3421 = vunpack.c.h.b16 %v3176
  %v3422 = vunpack.c.l.b16 %v3177
  %v3423 = vunpack.c.h.b16 %v3177
  %v3424 = vunpack.c.l.b16 %v3178
  %v3425 = vunpack.c.h.b16 %v3178
  %v3426 = vunpack.c.l.b16 %v3179
  %v3427 = vunpack.c.h.b16 %v3179
  %v3428 = vunpack.c.l.b16 %v3180
  %v3429 = vunpack.c.h.b16 %v3180
  %v3430 = vunpack.c.l.b16 %v3181
  %v3431 = vunpack.c.h.b16 %v3181
  %v3432 = vunpack.c.l.b16 %v3182
  %v3433 = vunpack.c.h.b16 %v3182
  %v3434 = vunpack.c.l.b16 %v3183
  %v3435 = vunpack.c.h.b16 %v3183
  %v3436 = vunpack.c.l.b16 %v3184
  %v3437 = vunpack.c.h.b16 %v3184
  %v3438 = vunpack.c.l.b16 %v3185
  %v3439 = vunpack.c.h.b16 %v3185
  %v3440 = vunpack.c.l.b16 %v3186
  %v3441 = vunpack.c.h.b16 %v3186
  %v3442 = vunpack.c.l.b16 %v3187
  %v3443 = vunpack.c.h.b16 %v3187
  %v3444 = vunpack.c.l.b16 %v3188
  %v3445 = vunpack.c.h.b16 %v3188
  %v3446 = vunpack.c.l.b16 %v3189
  %v3447 = vunpack.c.h.b16 %v3189
  %v3448 = vunpack.c.l.b16 %v3190
  %v3449 = vunpack.c.h.b16 %v3190
  %v3450 = vunpack.c.l.b16 %v3191
  %v3451 = vunpack.c.h.b16 %v3191
  %v3452 = vunpack.c.l.b16 %v3192
  %v3453 = vunpack.c.h.b16 %v3192
  %v3454 = vunpack.c.l.b16 %v3193
  %v3455 = vunpack.c.h.b16 %v3193
  %v3456 = vunpack.c.l.b16 %v3194
  %v3457 = vunpack.c.h.b16 %v3194
  %v3458 = vunpack.c.l.b16 %v3195
  %v3459 = vunpack.c.h.b16 %v3195
  %v3460 = vunpack.c.l.b16 %v3196
  %v3461 = vunpack.c.h.b16 %v3196
  %v3462 = vunpack.c.l.b16 %v3197
  %v3463 = vunpack.c.h.b16 %v3197
  %v3464 = vunpack.c.l.b16 %v3198
  %v3465 = vunpack.c.h.b16 %v3198
  %v3466 = vunpack.c.l.b16 %v3199
  %v3467 = vunpack.c.h.b16 %v3199
  %v3468 = vunpack.c.l.b16 %v3200
  %v3469 = vunpack.c.h.b16 %v3200
  %v3470 = vunpack.c.l.b16 %v3201
  %v3471 = vunpack.c.h.b16 %v3201
  %v3472 = vunpack.c.l.b16 %v3202
  %v3473 = vunpack.c.h.b16 %v3202
  %v3474 = vunpack.c.l.b16 %v3203
  %v3475 = vunpack.c.h.b16 %v3203
  %v3476 = vunpack.c.l.b16 %v3204
  %v3477 = vunpack.c.h.b16 %v3204
  %v3478 = vunpack.c.l.b16 %v3205
  %v3479 = vunpack.c.h.b16 %v3205
  %v3480 = vunpack.c.l.b16 %v3206
  %v3481 = vunpack.c.h.b16 %v3206
  %v3482 = vunpack.c.l.b16 %v3207
  %v3483 = vunpack.c.h.b16 %v3207
  %v3484 = vunpack.c.l.b16 %v3208
  %v3485 = vunpack.c.h.b16 %v3208
  %v3486 = vunpack.c.l.b16 %v3209
  %v3487 = vunpack.c.h.b16 %v3209
  %v3488 = vunpack.c.l.b16 %v3210
  %v3489 = vunpack.c.h.b16 %v3210
  %v3490 = vunpack.c.l.b16 %v3211
  %v3491 = vunpack.c.h.b16 %v3211
  %v3492 = vunpack.c.l.b16 %v3212
  %v3493 = vunpack.c.h.b16 %v3212
  %v3494 = vunpack.c.l.b16 %v3213
  %v3495 = vunpack.c.h.b16 %v3213
  %v3496 = vunpack.c.l.b16 %v3214
  %v3497 = vunpack.c.h.b16 %v3214
  %v3498 = vunpack.c.l.b16 %v3215
  %v3499 = vunpack.c.h.b16 %v3215
  %v3500 = vunpack.c.l.b16 %v3216
  %v3501 = vunpack.c.h.b16 %v3216
  %v3502 = vunpack.c.l.b16 %v3217
  %v3503 = vunpack.c.h.b16 %v3217
  %v3504 = vunpack.c.l.b16 %v3218
  %v3505 = vunpack.c.h.b16 %v3218
  %v3506 = vunpack.c.l.b16 %v3219
  %v3507 = vunpack.c.h.b16 %v3219
  %v3508 = vunpack.c.l.b16 %v3220
  %v3509 = vunpack.c.h.b16 %v3220
  %v3510 = vunpack.c.l.b16 %v3221
  %v3511 = vunpack.c.h.b16 %v3221
  %v3512 = vunpack.c.l.b16 %v3222
  %v3513 = vunpack.c.h.b16 %v3222
  %v3514 = vunpack.c.l.b16 %v3223
  %v3515 = vunpack.c.h.b16 %v3223
  %v3516 = vunpack.c.l.b16 %v3224
  %v3517 = vunpack.c.h.b16 %v3224
  %v3518 = vunpack.c.l.b16 %v3225
  %v3519 = vunpack.c.h.b16 %v3225
  %v3520 = vunpack.c.l.b16 %v3226
  %v3521 = vunpack.c.h.b16 %v3226
  %v3522 = vunpack.c.l.b16 %v3227
  %v3523 = vunpack.c.h.b16 %v3227
  %v3524 = vunpack.c.l.b16 %v3228
  %v3525 = vunpack.c.h.b16 %v3228
  %v3526 = vunpack.c.l.b16 %v3229
  %v3527 = vunpack.c.h.b16 %v3229
  %v3528 = vunpack.c.l.b16 %v3230
  %v3529 = vunpack.c.h.b16 %v3230
  %v3530 = vunpack.c.l.b16 %v3231
  %v3531 = vunpack.c.h.b16 %v3231
  %v3532 = vunpack.c.l.b16 %v3232
  %v3533 = vunpack.c.h.b16 %v3232
  %v3534 = vunpack.c.l.b16 %v3233
  %v3535 = vunpack.c.h.b16 %v3233
  %v3536 = vunpack.c.l.b16 %v3234
  %v3537 = vunpack.c.h.b16 %v3234
  %v3538 = vunpack.c.l.b16 %v3235
  %v3539 = vunpack.c.h.b16 %v3235
  %v3540 = vunpack.c.l.b16 %v3236
  %v3541 = vunpack.c.h.b16 %v3236
  %v3542 = vunpack.c.l.b16 %v3237
  %v3543 = vunpack.c.h.b16 %v3237
  %v3544 = vunpack.c.l.b16 %v3238
  %v3545 = vunpack.c.h.b16 %v3238
  %v3546 = vunpack.c.l.b16 %v3239
  %v3547 = vunpack.c.h.b16 %v3239
  %v3548 = vunpack.c.l.b16 %v3240
  %v3549 = vunpack.c.h.b16 %v3240
  %v3550 = vunpack.c.l.b16 %v3241
  %v3551 = vunpack.c.h.b16 %v3241
  %v3552 = vunpack.c.l.b16 %v3242
  %v3553 = vunpack.c.h.b16 %v3242
  %v3554 = vunpack.c.l.b16 %v3243
  %v3555 = vunpack.c.h.b16 %v3243
  %v3556 = vunpack.c.l.b16 %v3244
  %v3557 = vunpack.c.h.b16 %v3244
  %v3558 = vunpack.c.l.b16 %v3245
  %v3559 = vunpack.c.h.b16 %v3245
  %v3560 = vunpack.c.l.b16 %v3246
  %v3561 = vunpack.c.h.b16 %v3246
  %v3562 = vunpack.c.l.b16 %v3247
  %v3563 = vunpack.c.h.b16 %v3247
  %v3564 = vunpack.c.l.b16 %v3248
  %v3565 = vunpack.c.h.b16 %v3248
  %v3566 = vunpack.c.l.b16 %v3249
  %v3567 = vunpack.c.h.b16 %v3249
  %v3568 = vunpack.c.l.b16 %v3250
  %v3569 = vunpack.c.h.b16 %v3250
  %v3570 = vunpack.c.l.b16 %v3251
  %v3571 = vunpack.c.h.b16 %v3251
  %v3572 = vunpack.c.l.b16 %v3252
  %v3573 = vunpack.c.h.b16 %v3252
  %v3574 = vunpack.c.l.b16 %v3253
  %v3575 = vunpack.c.h.b16 %v3253
  %v3576 = vunpack.c.l.b16 %v3254
  %v3577 = vunpack.c.h.b16 %v3254
  %v3578 = vunpack.c.l.b16 %v3255
  %v3579 = vunpack.c.h.b16 %v3255
  %v3580 = vunpack.c.l.b16 %v3256
  %v3581 = vunpack.c.h.b16 %v3256
  %v3582 = vunpack.c.l.b16 %v3257
  %v3583 = vunpack.c.h.b16 %v3257
  %v3584 = vunpack.c.l.b16 %v3258
  %v3585 = vunpack.c.h.b16 %v3258
  %v3586 = vunpack.c.l.b16 %v3259
  %v3587 = vunpack.c.h.b16 %v3259
  %v3588 = vunpack.c.l.b16 %v3260
  %v3589 = vunpack.c.h.b16 %v3260
  %v3590 = vunpack.c.l.b16 %v3261
  %v3591 = vunpack.c.h.b16 %v3261
  %v3592 = vunpack.c.l.b16 %v3262
  %v3593 = vunpack.c.h.b16 %v3262
  %v3594 = vpack.c.b16 %v3384, %v3378
  %v3595 = vpack.c.b16 %v3385, %v3379
  %v3596 = vpack.c.b16 %v3386, %v3380
  %v3597 = vpack.c.b16 %v3387, %v3381
  %v3598 = vpack.c.b16 %v3388, %v3382
  %v3599 = vpack.c.b16 %v3389, %v3383
  %v3600 = vpack.c.b16 %v3396, %v3390
  %v3601 = vpack.c.b16 %v3397, %v3391
  %v3602 = vpack.c.b16 %v3398, %v3392
  %v3603 = vpack.c.b16 %v3399, %v3393
  %v3604 = vpack.c.b16 %v3400, %v3394
  %v3605 = vpack.c.b16 %v3401, %v3395
  %v3606 = vpack.c.b16 %v3408, %v3402
  %v3607 = vpack.c.b16 %v3409, %v3403
  %v3608 = vpack.c.b16 %v3410, %v3404
  %v3609 = vpack.c.b16 %v3411, %v3405
  %v3610 = vpack.c.b16 %v3412, %v3406
  %v3611 = vpack.c.b16 %v3413, %v3407
  %v3612 = vpack.c.b16 %v3420, %v3414
  %v3613 = vpack.c.b16 %v3421, %v3415
  %v3614 = vpack.c.b16 %v3422, %v3416
  %v3615 = vpack.c.b16 %v3423, %v3417
  %v3616 = vpack.c.b16 %v3424, %v3418
  %v3617 = vpack.c.b16 %v3425, %v3419
  %v3618 = vpack.c.b16 %v3432, %v3426
  %v3619 = vpack.c.b16 %v3433, %v3427
  %v3620 = vpack.c.b16 %v3434, %v3428
  %v3621 = vpack.c.b16 %v3435, %v3429
  %v3622 = vpack.c.b16 %v3436, %v3430
  %v3623 = vpack.c.b16 %v3437, %v3431
  %v3624 = vpack.c.b16 %v3444, %v3438
  %v3625 = vpack.c.b16 %v3445, %v3439
  %v3626 = vpack.c.b16 %v3446, %v3440
  %v3627 = vpack.c.b16 %v3447, %v3441
  %v3628 = vpack.c.b16 %v3448, %v3442
  %v3629 = vpack.c.b16 %v3449, %v3443
  %v3630 = vpack.c.b16 %v3456, %v3450
  %v3631 = vpack.c.b16 %v3457, %v3451
  %v3632 = vpack.c.b16 %v3458, %v3452
  %v3633 = vpack.c.b16 %v3459, %v3453
  %v3634 = vpack.c.b16 %v3460, %v3454
  %v3635 = vpack.c.b16 %v3461, %v3455
  %v3636 = vpack.c.b16 %v3468, %v3462
  %v3637 = vpack.c.b16 %v3469, %v3463
  %v3638 = vpack.c.b16 %v3470, %v3464
  %v3639 = vpack.c.b16 %v3471, %v3465
  %v3640 = vpack.c.b16 %v3472, %v3466
  %v3641 = vpack.c.b16 %v3473, %v3467
  %v3642 = vpack.c.b16 %v3480, %v3474
  %v3643 = vpack.c.b16 %v3481, %v3475
  %v3644 = vpack.c.b16 %v3482, %v3476
  %v3645 = vpack.c.b16 %v3483, %v3477
  %v3646 = vpack.c.b16 %v3484, %v3478
  %v3647 = vpack.c.b16 %v3485, %v3479
  %v3648 = vpack.c.b16 %v3492, %v3486
  %v3649 = vpack.c.b16 %v3493, %v3487
  %v3650 = vpack.c.b16 %v3494, %v3488
  %v3651 = vpack.c.b16 %v3495, %v3489
  %v3652 = vpack.c.b16 %v3496, %v3490
  %v3653 = vpack.c.b16 %v3497, %v3491
  %v3654 = vpack.c.b16 %v3504, %v3498
  %v3655 = vpack.c.b16 %v3505, %v3499
  %v3656 = vpack.c.b16 %v3506, %v3500
  %v3657 = vpack.c.b16 %v3507, %v3501
  %v3658 = vpack.c.b16 %v3508, %v3502
  %v3659 = vpack.c.b16 %v3509, %v3503
  %v3660 = vpack.c.b16 %v3516, %v3510
  %v3661 = vpack.c.b16 %v3517, %v3511
  %v3662 = vpack.c.b16 %v3518, %v3512
  %v3663 = vpack.c.b16 %v3519, %v3513
  %v3664 = vpack.c.b16 %v3520, %v3514
  %v3665 = vpack.c.b16 %v3521, %v3515
  %v3666 = vpack.c.b16 %v3528, %v3522
  %v3667 = vpack.c.b16 %v3529, %v3523
  %v3668 = vpack.c.b16 %v3530, %v3524
  %v3669 = vpack.c.b16 %v3531, %v3525
  %v3670 = vpack.c.b16 %v3532, %v3526
  %v3671 = vpack.c.b16 %v3533, %v3527
  %v3672 = vpack.c.b16 %v3540, %v3534
  %v3673 = vpack.c.b16 %v3541, %v3535
  %v3674 = vpack.c.b16 %v3542, %v3536
  %v3675 = vpack.c.b16 %v3543, %v3537
  %v3676 = vpack.c.b16 %v3544, %v3538
  %v3677 = vpack.c.b16 %v3545, %v3539
  %v3678 = vpack.c.b16 %v3552, %v3546
  %v3679 = vpack.c.b16 %v3553, %v3547
  %v3680 = vpack.c.b16 %v3554, %v3548
  %v3681 = vpack.c.b16 %v3555, %v3549
  %v3682 = vpack.c.b16 %v3556, %v3550
  %v3683 = vpack.c.b16 %v3557, %v3551
  %v3684 = vpack.c.b16 %v3564, %v3558
  %v3685 = vpack.c.b16 %v3565, %v3559
  %v3686 = vpack.c.b16 %v3566, %v3560
  %v3687 = vpack.c.b16 %v3567, %v3561
  %v3688 = vpack.c.b16 %v3568, %v3562
  %v3689 = vpack.c.b16 %v3569, %v3563
  %v3690 = vpack.c.b16 %v3576, %v3570
  %v3691 = vpack.c.b16 %v3577, %v3571
  %v3692 = vpack.c.b16 %v3578, %v3572
  %v3693 = vpack.c.b16 %v3579, %v3573
  %v3694 = vpack.c.b16 %v3580, %v3574
  %v3695 = vpack.c.b16 %v3581, %v3575
  %v3696 = vpack.c.b16 %v3588, %v3582
  %v3697 = vpack.c.b16 %v3589, %v3583
  %v3698 = vpack.c.b16 %v3590, %v3584
  %v3699 = vpack.c.b16 %v3591, %v3585
  %v3700 = vpack.c.b16 %v3592, %v3586
  %v3701 = vpack.c.b16 %v3593, %v3587
  %vm3810 = vcmask 261120
  %v3811 = vsel %vm3810, %v3267, 0
  %3813 = vmatpush.bf16.msra.mxu0 %v3636
  %3814 = vmatpush.bf16.msra.mxu0 %v3630
  %3815 = vmatpush.bf16.msra.mxu0 %v3624
  %3816 = vmatpush.bf16.msra.mxu0 %v3618
  %3817 = vmatpush.bf16.msra.mxu0 %v3612
  %3818 = vmatpush.bf16.msra.mxu0 %v3606
  %3819 = vmatpush.bf16.msra.mxu0 %v3600
  %3820 = vmatpush.bf16.msra.mxu0 %v3594
  %3821 = vmatmul.bf16.gmra.mxu0 %v3265
  %v3822 = vpop.f32.mrf.mxu0
  %v3823 = vadd.f32 0.0, %v3822
  %v3824 = vpop.f32.mrf.mxu0
  %3825 = vdwg.mxu0
  %3826 = vmatpush.bf16.msra.mxu0 %v3684
  %3827 = vmatpush.bf16.msra.mxu0 %v3678
  %3828 = vmatpush.bf16.msra.mxu0 %v3672
  %3829 = vmatpush.bf16.msra.mxu0 %v3666
  %3830 = vmatpush.bf16.msra.mxu0 %v3660
  %3831 = vmatpush.bf16.msra.mxu0 %v3654
  %3832 = vmatpush.bf16.msra.mxu0 %v3648
  %3833 = vmatpush.bf16.msra.mxu0 %v3642
  %3834 = vmatmul.bf16.gmra.mxu0 %v3266
  %v3835 = vpop.f32.mrf.mxu0
  %v3836 = vadd.f32 %v3823, %v3835
  %v3837 = vpop.f32.mrf.mxu0
  %3838 = vdwg.mxu0
  %3839 = vmatpush.bf16.msra.mxu0 0
  %3840 = vmatpush.bf16.msra.mxu0 0
  %3841 = vmatpush.bf16.msra.mxu0 0
  %3842 = vmatpush.bf16.msra.mxu0 0
  %3843 = vmatpush.bf16.msra.mxu0 0
  %3844 = vmatpush.bf16.msra.mxu0 0
  %3845 = vmatpush.bf16.msra.mxu0 %v3696
  %3846 = vmatpush.bf16.msra.mxu0 %v3690
  %3847 = vmatmul.bf16.gmra.mxu0 %v3811
  %v3848 = vpop.f32.mrf.mxu0
  %v3849 = vadd.f32 %v3836, %v3848
  %v3850 = vpop.f32.mrf.mxu0
  %3851 = vdwg.mxu0
  %3852 = vmatpush.bf16.msra.mxu0 %v3637
  %3853 = vmatpush.bf16.msra.mxu0 %v3631
  %3854 = vmatpush.bf16.msra.mxu0 %v3625
  %3855 = vmatpush.bf16.msra.mxu0 %v3619
  %3856 = vmatpush.bf16.msra.mxu0 %v3613
  %3857 = vmatpush.bf16.msra.mxu0 %v3607
  %3858 = vmatpush.bf16.msra.mxu0 %v3601
  %3859 = vmatpush.bf16.msra.mxu0 %v3595
  %3860 = vmatmul.bf16.gmra.mxu0 %v3265
  %v3861 = vpop.f32.mrf.mxu0
  %v3862 = vadd.f32 0.0, %v3861
  %v3863 = vpop.f32.mrf.mxu0
  %3864 = vdwg.mxu0
  %3865 = vmatpush.bf16.msra.mxu0 %v3685
  %3866 = vmatpush.bf16.msra.mxu0 %v3679
  %3867 = vmatpush.bf16.msra.mxu0 %v3673
  %3868 = vmatpush.bf16.msra.mxu0 %v3667
  %3869 = vmatpush.bf16.msra.mxu0 %v3661
  %3870 = vmatpush.bf16.msra.mxu0 %v3655
  %3871 = vmatpush.bf16.msra.mxu0 %v3649
  %3872 = vmatpush.bf16.msra.mxu0 %v3643
  %3873 = vmatmul.bf16.gmra.mxu0 %v3266
  %v3874 = vpop.f32.mrf.mxu0
  %v3875 = vadd.f32 %v3862, %v3874
  %v3876 = vpop.f32.mrf.mxu0
  %3877 = vdwg.mxu0
  %3878 = vmatpush.bf16.msra.mxu0 0
  %3879 = vmatpush.bf16.msra.mxu0 0
  %3880 = vmatpush.bf16.msra.mxu0 0
  %3881 = vmatpush.bf16.msra.mxu0 0
  %3882 = vmatpush.bf16.msra.mxu0 0
  %3883 = vmatpush.bf16.msra.mxu0 0
  %3884 = vmatpush.bf16.msra.mxu0 %v3697
  %3885 = vmatpush.bf16.msra.mxu0 %v3691
  %3886 = vmatmul.bf16.gmra.mxu0 %v3811
  %v3887 = vpop.f32.mrf.mxu0
  %v3888 = vadd.f32 %v3875, %v3887
  %v3889 = vpop.f32.mrf.mxu0
  %3890 = vdwg.mxu0
  %3891 = vmatpush.bf16.msra.mxu0 %v3638
  %3892 = vmatpush.bf16.msra.mxu0 %v3632
  %3893 = vmatpush.bf16.msra.mxu0 %v3626
  %3894 = vmatpush.bf16.msra.mxu0 %v3620
  %3895 = vmatpush.bf16.msra.mxu0 %v3614
  %3896 = vmatpush.bf16.msra.mxu0 %v3608
  %3897 = vmatpush.bf16.msra.mxu0 %v3602
  %3898 = vmatpush.bf16.msra.mxu0 %v3596
  %3899 = vmatmul.bf16.gmra.mxu0 %v3265
  %v3900 = vpop.f32.mrf.mxu0
  %v3901 = vadd.f32 0.0, %v3900
  %v3902 = vpop.f32.mrf.mxu0
  %3903 = vdwg.mxu0
  %3904 = vmatpush.bf16.msra.mxu0 %v3686
  %3905 = vmatpush.bf16.msra.mxu0 %v3680
  %3906 = vmatpush.bf16.msra.mxu0 %v3674
  %3907 = vmatpush.bf16.msra.mxu0 %v3668
  %3908 = vmatpush.bf16.msra.mxu0 %v3662
  %3909 = vmatpush.bf16.msra.mxu0 %v3656
  %3910 = vmatpush.bf16.msra.mxu0 %v3650
  %3911 = vmatpush.bf16.msra.mxu0 %v3644
  %3912 = vmatmul.bf16.gmra.mxu0 %v3266
  %v3913 = vpop.f32.mrf.mxu0
  %v3914 = vadd.f32 %v3901, %v3913
  %v3915 = vpop.f32.mrf.mxu0
  %3916 = vdwg.mxu0
  %3917 = vmatpush.bf16.msra.mxu0 0
  %3918 = vmatpush.bf16.msra.mxu0 0
  %3919 = vmatpush.bf16.msra.mxu0 0
  %3920 = vmatpush.bf16.msra.mxu0 0
  %3921 = vmatpush.bf16.msra.mxu0 0
  %3922 = vmatpush.bf16.msra.mxu0 0
  %3923 = vmatpush.bf16.msra.mxu0 %v3698
  %3924 = vmatpush.bf16.msra.mxu0 %v3692
  %3925 = vmatmul.bf16.gmra.mxu0 %v3811
  %v3926 = vpop.f32.mrf.mxu0
  %v3927 = vadd.f32 %v3914, %v3926
  %v3928 = vpop.f32.mrf.mxu0
  %3929 = vdwg.mxu0
  %3930 = vmatpush.bf16.msra.mxu0 %v3639
  %3931 = vmatpush.bf16.msra.mxu0 %v3633
  %3932 = vmatpush.bf16.msra.mxu0 %v3627
  %3933 = vmatpush.bf16.msra.mxu0 %v3621
  %3934 = vmatpush.bf16.msra.mxu0 %v3615
  %3935 = vmatpush.bf16.msra.mxu0 %v3609
  %3936 = vmatpush.bf16.msra.mxu0 %v3603
  %3937 = vmatpush.bf16.msra.mxu0 %v3597
  %3938 = vmatmul.bf16.gmra.mxu0 %v3265
  %v3939 = vpop.f32.mrf.mxu0
  %v3940 = vadd.f32 0.0, %v3939
  %v3941 = vpop.f32.mrf.mxu0
  %3942 = vdwg.mxu0
  %3943 = vmatpush.bf16.msra.mxu0 %v3687
  %3944 = vmatpush.bf16.msra.mxu0 %v3681
  %3945 = vmatpush.bf16.msra.mxu0 %v3675
  %3946 = vmatpush.bf16.msra.mxu0 %v3669
  %3947 = vmatpush.bf16.msra.mxu0 %v3663
  %3948 = vmatpush.bf16.msra.mxu0 %v3657
  %3949 = vmatpush.bf16.msra.mxu0 %v3651
  %3950 = vmatpush.bf16.msra.mxu0 %v3645
  %3951 = vmatmul.bf16.gmra.mxu0 %v3266
  %v3952 = vpop.f32.mrf.mxu0
  %v3953 = vadd.f32 %v3940, %v3952
  %v3954 = vpop.f32.mrf.mxu0
  %3955 = vdwg.mxu0
  %3956 = vmatpush.bf16.msra.mxu0 0
  %3957 = vmatpush.bf16.msra.mxu0 0
  %3958 = vmatpush.bf16.msra.mxu0 0
  %3959 = vmatpush.bf16.msra.mxu0 0
  %3960 = vmatpush.bf16.msra.mxu0 0
  %3961 = vmatpush.bf16.msra.mxu0 0
  %3962 = vmatpush.bf16.msra.mxu0 %v3699
  %3963 = vmatpush.bf16.msra.mxu0 %v3693
  %3964 = vmatmul.bf16.gmra.mxu0 %v3811
  %v3965 = vpop.f32.mrf.mxu0
  %v3966 = vadd.f32 %v3953, %v3965
  %v3967 = vpop.f32.mrf.mxu0
  %3968 = vdwg.mxu0
  %3969 = vmatpush.bf16.msra.mxu0 %v3640
  %3970 = vmatpush.bf16.msra.mxu0 %v3634
  %3971 = vmatpush.bf16.msra.mxu0 %v3628
  %3972 = vmatpush.bf16.msra.mxu0 %v3622
  %3973 = vmatpush.bf16.msra.mxu0 %v3616
  %3974 = vmatpush.bf16.msra.mxu0 %v3610
  %3975 = vmatpush.bf16.msra.mxu0 %v3604
  %3976 = vmatpush.bf16.msra.mxu0 %v3598
  %3977 = vmatmul.bf16.gmra.mxu0 %v3265
  %v3978 = vpop.f32.mrf.mxu0
  %v3979 = vadd.f32 0.0, %v3978
  %v3980 = vpop.f32.mrf.mxu0
  %3981 = vdwg.mxu0
  %3982 = vmatpush.bf16.msra.mxu0 %v3688
  %3983 = vmatpush.bf16.msra.mxu0 %v3682
  %3984 = vmatpush.bf16.msra.mxu0 %v3676
  %3985 = vmatpush.bf16.msra.mxu0 %v3670
  %3986 = vmatpush.bf16.msra.mxu0 %v3664
  %3987 = vmatpush.bf16.msra.mxu0 %v3658
  %3988 = vmatpush.bf16.msra.mxu0 %v3652
  %3989 = vmatpush.bf16.msra.mxu0 %v3646
  %3990 = vmatmul.bf16.gmra.mxu0 %v3266
  %v3991 = vpop.f32.mrf.mxu0
  %v3992 = vadd.f32 %v3979, %v3991
  %v3993 = vpop.f32.mrf.mxu0
  %3994 = vdwg.mxu0
  %3995 = vmatpush.bf16.msra.mxu0 0
  %3996 = vmatpush.bf16.msra.mxu0 0
  %3997 = vmatpush.bf16.msra.mxu0 0
  %3998 = vmatpush.bf16.msra.mxu0 0
  %3999 = vmatpush.bf16.msra.mxu0 0
  %4000 = vmatpush.bf16.msra.mxu0 0
  %4001 = vmatpush.bf16.msra.mxu0 %v3700
  %4002 = vmatpush.bf16.msra.mxu0 %v3694
  %4003 = vmatmul.bf16.gmra.mxu0 %v3811
  %v4004 = vpop.f32.mrf.mxu0
  %v4005 = vadd.f32 %v3992, %v4004
  %v4006 = vpop.f32.mrf.mxu0
  %4007 = vdwg.mxu0
  %4008 = vmatpush.bf16.msra.mxu0 %v3641
  %4009 = vmatpush.bf16.msra.mxu0 %v3635
  %4010 = vmatpush.bf16.msra.mxu0 %v3629
  %4011 = vmatpush.bf16.msra.mxu0 %v3623
  %4012 = vmatpush.bf16.msra.mxu0 %v3617
  %4013 = vmatpush.bf16.msra.mxu0 %v3611
  %4014 = vmatpush.bf16.msra.mxu0 %v3605
  %4015 = vmatpush.bf16.msra.mxu0 %v3599
  %4016 = vmatmul.bf16.gmra.mxu0 %v3265
  %v4017 = vpop.f32.mrf.mxu0
  %v4018 = vadd.f32 0.0, %v4017
  %v4019 = vpop.f32.mrf.mxu0
  %4020 = vdwg.mxu0
  %4021 = vmatpush.bf16.msra.mxu0 %v3689
  %4022 = vmatpush.bf16.msra.mxu0 %v3683
  %4023 = vmatpush.bf16.msra.mxu0 %v3677
  %4024 = vmatpush.bf16.msra.mxu0 %v3671
  %4025 = vmatpush.bf16.msra.mxu0 %v3665
  %4026 = vmatpush.bf16.msra.mxu0 %v3659
  %4027 = vmatpush.bf16.msra.mxu0 %v3653
  %4028 = vmatpush.bf16.msra.mxu0 %v3647
  %4029 = vmatmul.bf16.gmra.mxu0 %v3266
  %v4030 = vpop.f32.mrf.mxu0
  %v4031 = vadd.f32 %v4018, %v4030
  %v4032 = vpop.f32.mrf.mxu0
  %4033 = vdwg.mxu0
  %4034 = vmatpush.bf16.msra.mxu0 0
  %4035 = vmatpush.bf16.msra.mxu0 0
  %4036 = vmatpush.bf16.msra.mxu0 0
  %4037 = vmatpush.bf16.msra.mxu0 0
  %4038 = vmatpush.bf16.msra.mxu0 0
  %4039 = vmatpush.bf16.msra.mxu0 0
  %4040 = vmatpush.bf16.msra.mxu0 %v3701
  %4041 = vmatpush.bf16.msra.mxu0 %v3695
  %4042 = vmatmul.bf16.gmra.mxu0 %v3811
  %v4043 = vpop.f32.mrf.mxu0
  %v4044 = vadd.f32 %v4031, %v4043
  %v4045 = vpop.f32.mrf.mxu0
  %4046 = vdwg.mxu0
  %v4047 = vld [vmem:[%s1] sm:$0xf]
  %v4048 = vld [vmem:[%s1 + $0x8] sm:$0xf]
  %v4049 = vld [vmem:[%s1 + $0x10] sm:$0xf]
  %v4050 = vld [vmem:[%s1 + $0x18] sm:$0xf]
  %v4051 = vld [vmem:[%s1 + $0x20] sm:$0xf]
  %v4052 = vld [vmem:[%s1 + $0x28] sm:$0xf]
  %v4053 = vld [vmem:[%s1 + $0x30] sm:$0xf]
  %s4054 = sld [smem:[#allocation5]]
  %v4055 = vstv %s4054
  %v4056 = vmul.f32 %v4055, %v4047
  %v4057 = vmul.f32 %v4055, %v4048
  %v4058 = vmul.f32 %v4055, %v4049
  %v4059 = vmul.f32 %v4055, %v4050
  %v4060 = vmul.f32 %v4055, %v4051
  %v4061 = vmul.f32 %v4055, %v4052
  %v4062 = vmul.f32 %v4055, %v4053
  %4069 = vrot.lane.b32.xlu0 %v3849, 38
  %v4070 = vpop.permute.xlu0 %4069
  %4071 = vrot.lane.b32.xlu0 %v3888, 38
  %v4072 = vpop.permute.xlu0 %4071
  %4073 = vrot.lane.b32.xlu0 %v3927, 38
  %v4074 = vpop.permute.xlu0 %4073
  %4075 = vrot.lane.b32.xlu0 %v3966, 38
  %v4076 = vpop.permute.xlu0 %4075
  %4077 = vrot.lane.b32.xlu0 %v4005, 38
  %v4078 = vpop.permute.xlu0 %4077
  %4079 = vrot.lane.b32.xlu0 %v4044, 38
  %v4080 = vpop.permute.xlu0 %4079
  %vm4081 = vcmask 310272
  %v4082 = vsel %vm4081, %v4070, %v4072
  %v4083 = vsel %vm4081, %v4072, %v4074
  %v4084 = vsel %vm4081, %v4074, %v4076
  %v4085 = vsel %vm4081, %v4076, %v4078
  %v4086 = vsel %vm4081, %v4078, %v4080
  %v4094 = vadd.f32 %v4056, %v4070
  %v4095 = vadd.f32 %v4057, %v4082
  %v4096 = vadd.f32 %v4058, %v4083
  %v4097 = vadd.f32 %v4059, %v4084
  %v4098 = vadd.f32 %v4060, %v4085
  %v4099 = vadd.f32 %v4061, %v4086
  %v4100 = vadd.f32 %v4062, %v4080
  %v4101 = vld [vmem:[%s6] sm:$0xf]
  %4103 = vset.pattern.permute.xlu0 0
  %4104 = vperm.xlu0 %4103, %v4101
  %v4105 = vpop.permute.xlu0 %4104
  %v4107 = vadd.f32 %v4094, %v4105
  %v4108 = vadd.f32 %v4095, %v4105
  %v4109 = vadd.f32 %v4096, %v4105
  %v4110 = vadd.f32 %v4097, %v4105
  %v4111 = vadd.f32 %v4098, %v4105
  %v4112 = vadd.f32 %v4099, %v4105
  %v4113 = vadd.f32 %v4100, %v4105
  %v4121 = vrot.slane %v4108, 4
  %v4122 = vrot.slane %v4110, 4
  %v4123 = vrot.slane %v4112, 4
  %vm4124 = vcmask 1043456
  %v4125 = vsel %vm4124, %v4107, %v4121
  %v4126 = vsel %vm4124, %v4109, %v4122
  %v4127 = vsel %vm4124, %v4111, %v4123
  %4128 = vrot.lane.b32.xlu0 %v4125, 90
  %v4129 = vpop.permute.xlu0 %4128
  %4130 = vrot.lane.b32.xlu0 %v4126, 90
  %v4131 = vpop.permute.xlu0 %4130
  %4132 = vrot.lane.b32.xlu0 %v4127, 90
  %v4133 = vpop.permute.xlu0 %4132
  %4134 = vrot.lane.b32.xlu0 %v4113, 90
  %v4135 = vpop.permute.xlu0 %4134
  %v4136 = vrot.slane %v4129, 4
  %v4137 = vrot.slane %v4131, 4
  %v4138 = vrot.slane %v4133, 4
  %v4139 = vrot.slane %v4135, 4
  %v4140 = vsel %vm4124, %v4136, %v4137
  %vm4141 = vcmask 736256
  %v4142 = vsel %vm4141, %v4129, %v4140
  %v4143 = vsel %vm4124, %v4137, %v4138
  %v4144 = vsel %vm4141, %v4131, %v4143
  %v4145 = vsel %vm4124, %v4138, %v4139
  %v4146 = vsel %vm4141, %v4133, %v4145
  %4150 = vst [vmem:[%s7] sm:$0xff] %v4142
  %4151 = vst [vmem:[%s7 + $0x8] sm:$0xff] %v4144
  %4152 = vst [vmem:[%s7 + $0x10] sm:$0xff] %v4146
  // Predicated region
  $region30: #{model_wrapper_forward.1} parent=0 // pred_check
    _
  $region31: #{model_wrapper_forward.1} parent=0 // pred_check_branch
    %4154 = sbr.rel (0) target = $region33
  $region32: #{model_wrapper_forward.1} parent=0 // pred_region
    _
  $region33: #{model_wrapper_forward.1} parent=0 // pred_fallthru
    _
  // Predicated region
  $region34: #{model_wrapper_forward.1} parent=0 // pred_check
    _
  $region35: #{model_wrapper_forward.1} parent=0 // pred_check_branch
    %4156 = sbr.rel (0) target = $region37
  $region36: #{model_wrapper_forward.1} parent=0 // pred_region
    _
  $region37: #{model_wrapper_forward.1} parent=0 // pred_fallthru
    _

</llo_original>
